<compile_context>
chip_gen: v7x
topology: tpu7x:2x2x1
jax: 0.10.0
libtpu: 0.0.40
codegen_flags: <defaults>
</compile_context>

<pallas_src>
import jax
import jax.numpy as jnp
from jax.experimental import pallas as pl
from jax.experimental.pallas import tpu as pltpu

PRIMITIVES = [
    'none', 'max_pool_3x3', 'avg_pool_3x3', 'skip_connect',
    'sep_conv_3x3', 'sep_conv_5x5', 'dil_conv_3x3', 'dil_conv_5x5',
]

_BN_EPS = 1e-5
_NEG_BIG = 1e30

# Tap indices inside the shared zero-padded 5x5 / pad-2 patch slab (t = 5*di+dj).
_C9 = tuple(5 * di + dj for di in (1, 2, 3) for dj in (1, 2, 3))   # 3x3, pad 1
_D3 = tuple(5 * di + dj for di in (0, 2, 4) for dj in (0, 2, 4))   # 3x3, pad 2, dil 2
_A25 = tuple(range(25))
_A9 = tuple(range(9))


# ----------------------------- in-kernel helpers -----------------------------

def _bn_rows(y):
    # Training-mode BatchNorm2d(affine=False): per-channel (row) batch stats,
    # biased variance, eps=1e-5.  Exact because every kernel sees the whole
    # (C, N*H*W) slab (single block, no M tiling).
    mean = jnp.mean(y, axis=1, keepdims=True)
    var = jnp.mean(jnp.square(y - mean), axis=1, keepdims=True)
    return (y - mean) * jax.lax.rsqrt(var + _BN_EPS)


def _dw_conv(p, wdw, taps):
    # Depthwise conv: p is (C, T, M) ReLU'd patches, wdw is (C, len(taps)).
    acc = wdw[:, 0][:, None] * p[:, taps[0], :]
    for t in range(1, len(taps)):
        acc = acc + wdw[:, t][:, None] * p[:, taps[t], :]
    return acc


# ----------------------------- Pallas kernels -----------------------------

def relu_matmul_bn_kernel(x_ref, w_ref, o_ref):
    # ReLU -> 1x1 conv (channel matmul on the MXU) -> BatchNorm.
    # Also implements FactorizedReduce when w = block_diag(w1, w2) and x is the
    # stacked even/odd-offset stride-2 input (BN is per-channel, so BN of the
    # concat == rows of this fused matmul BN'd independently).
    o_ref[...] = _bn_rows(
        jnp.dot(w_ref[...], jnp.maximum(x_ref[...], 0.0),
                preferred_element_type=jnp.float32))


def _mixed_stage1_common(aw_ref, p5_ref, p9d_ref, neg9_ref, invc9_ref,
                         d3dw_ref, d3pw_ref, d5dw_ref, d5pw_ref,
                         s3dw_ref, s3pw_ref, s5dw_ref, s5pw_ref,
                         i3_ref, i5_ref):
    p5 = p5_ref[...]                         # (C, 25, M) zero-padded patches
    neg9 = neg9_ref[...]                     # (1, 9, M): 0 valid / -1e30 at pad

    # --- max_pool_3x3 / avg_pool_3x3 (+ BatchNorm as in MixedOp's Sequential) ---
    mp = p5[:, _C9[0], :] + neg9[:, 0, :]
    ap = p5[:, _C9[0], :]
    for t in range(1, 9):
        tap = p5[:, _C9[t], :]
        mp = jnp.maximum(mp, tap + neg9[:, t, :])
        ap = ap + tap
    ap = ap * invc9_ref[...]                 # count_include_pad=False
    acc = aw_ref[1] * _bn_rows(mp) + aw_ref[2] * _bn_rows(ap)

    # ReLU on patches == patches of ReLU (zero padding, relu(0) == 0).
    r5 = jnp.maximum(p5, 0.0)
    r9 = jnp.maximum(p9d_ref[...], 0.0)

    # --- dil_conv_3x3 / dil_conv_5x5: depthwise (VPU) -> pointwise (MXU) -> BN ---
    d3 = jnp.dot(d3pw_ref[...], _dw_conv(r5, d3dw_ref[...], _D3),
                 preferred_element_type=jnp.float32)
    acc = acc + aw_ref[6] * _bn_rows(d3)
    d5 = jnp.dot(d5pw_ref[...], _dw_conv(r9, d5dw_ref[...], _A25),
                 preferred_element_type=jnp.float32)
    acc = acc + aw_ref[7] * _bn_rows(d5)

    # --- sep_conv_3x3 / 5x5 first ReLU-dw-pw-BN stage (intermediates exported;
    #     the second stage needs their spatial patches) ---
    i3_ref[...] = _bn_rows(
        jnp.dot(s3pw_ref[...], _dw_conv(r5, s3dw_ref[...], _C9),
                preferred_element_type=jnp.float32))
    i5_ref[...] = _bn_rows(
        jnp.dot(s5pw_ref[...], _dw_conv(r5, s5dw_ref[...], _A25),
                preferred_element_type=jnp.float32))
    return acc


def mixed_stage1_s1_kernel(aw_ref, p5_ref, p9d_ref, neg9_ref, invc9_ref, xskip_ref,
                           d3dw_ref, d3pw_ref, d5dw_ref, d5pw_ref,
                           s3dw_ref, s3pw_ref, s5dw_ref, s5pw_ref,
                           acc_ref, i3_ref, i5_ref):
    acc = _mixed_stage1_common(aw_ref, p5_ref, p9d_ref, neg9_ref, invc9_ref,
                               d3dw_ref, d3pw_ref, d5dw_ref, d5pw_ref,
                               s3dw_ref, s3pw_ref, s5dw_ref, s5pw_ref,
                               i3_ref, i5_ref)
    # skip_connect with stride 1 is Identity (no ReLU / BN).
    acc_ref[...] = acc + aw_ref[3] * xskip_ref[...]


def mixed_stage1_s2_kernel(aw_ref, p5_ref, p9d_ref, neg9_ref, invc9_ref,
                           xeo_ref, wfr_ref,
                           d3dw_ref, d3pw_ref, d5dw_ref, d5pw_ref,
                           s3dw_ref, s3pw_ref, s5dw_ref, s5pw_ref,
                           acc_ref, i3_ref, i5_ref):
    acc = _mixed_stage1_common(aw_ref, p5_ref, p9d_ref, neg9_ref, invc9_ref,
                               d3dw_ref, d3pw_ref, d5dw_ref, d5pw_ref,
                               s3dw_ref, s3pw_ref, s5dw_ref, s5pw_ref,
                               i3_ref, i5_ref)
    # skip_connect with stride 2 is FactorizedReduce: ReLU -> two 1x1 stride-2
    # convs fused into one block-diagonal matmul on the stacked even/odd input
    # -> concat -> BN.
    fr = jnp.dot(wfr_ref[...], jnp.maximum(xeo_ref[...], 0.0),
                 preferred_element_type=jnp.float32)
    acc_ref[...] = acc + aw_ref[3] * _bn_rows(fr)


def mixed_stage2_kernel(aw_ref, prev_ref, edge_ref, p3_ref, p5_ref,
                        s3dw2_ref, s3pw2_ref, s5dw2_ref, s5pw2_ref, out_ref):
    # Second ReLU-dw-pw-BN stage of both sep_convs + fold the running per-step
    # accumulator, so MixedOp / step sums never round-trip through HBM as
    # separately stacked tensors.
    r3 = jnp.maximum(p3_ref[...], 0.0)
    r5 = jnp.maximum(p5_ref[...], 0.0)
    y3 = _bn_rows(jnp.dot(s3pw2_ref[...], _dw_conv(r3, s3dw2_ref[...], _A9),
                          preferred_element_type=jnp.float32))
    y5 = _bn_rows(jnp.dot(s5pw2_ref[...], _dw_conv(r5, s5dw2_ref[...], _A25),
                          preferred_element_type=jnp.float32))
    out_ref[...] = (prev_ref[...] + edge_ref[...]
                    + aw_ref[4] * y3 + aw_ref[5] * y5)


def _pcall(kernel, out_shapes, inputs, n_smem=0):
    in_specs = [
        pl.BlockSpec(memory_space=pltpu.MemorySpace.SMEM) if i < n_smem
        else pl.BlockSpec(memory_space=pltpu.MemorySpace.VMEM)
        for i in range(len(inputs))
    ]
    return pl.pallas_call(
        kernel,
        out_shape=[jax.ShapeDtypeStruct(s, jnp.float32) for s in out_shapes],
        in_specs=in_specs,
        out_specs=[pl.BlockSpec(memory_space=pltpu.MemorySpace.VMEM)
                   for _ in out_shapes],
        compiler_params=pltpu.CompilerParams(vmem_limit_bytes=32 * 1024 * 1024),
    )(*inputs)


# ----------------------------- JAX glue (layout only) -----------------------------

def extract_patches_cm(x, k, stride, pad, dilation):
    """im2col on a channel-major (C, N, H, W) array -> (C, k*k, N*Ho*Wo)."""
    C, N, H, W = x.shape
    xp = jnp.pad(x, ((0, 0), (0, 0), (pad, pad), (pad, pad)))
    Ho = (H + 2 * pad - dilation * (k - 1) - 1) // stride + 1
    Wo = (W + 2 * pad - dilation * (k - 1) - 1) // stride + 1
    taps = []
    for i in range(k):
        for j in range(k):
            taps.append(
                xp[:, :,
                   i * dilation: i * dilation + stride * (Ho - 1) + 1: stride,
                   j * dilation: j * dilation + stride * (Wo - 1) + 1: stride])
    p = jnp.stack(taps, axis=1)                      # (C, k*k, N, Ho, Wo)
    return p.reshape(C, k * k, N * Ho * Wo), (Ho, Wo)


def _block_diag(w1, w2):
    r1, c1 = w1.shape
    r2, c2 = w2.shape
    top = jnp.concatenate([w1, jnp.zeros((r1, c2), w1.dtype)], axis=1)
    bot = jnp.concatenate([jnp.zeros((r2, c1), w2.dtype), w2], axis=1)
    return jnp.concatenate([top, bot], axis=0)


def _even_odd_stack(xcm):
    # (C, N, H, W) -> stacked stride-2 even/odd-offset samples, (2C, N*(H/2)*(W/2))
    C = xcm.shape[0]
    xe = xcm[:, :, ::2, ::2].reshape(C, -1)
    xo = xcm[:, :, 1::2, 1::2].reshape(C, -1)
    return jnp.concatenate([xe, xo], axis=0)


def preprocess_relu_conv_bn(xcm, w):
    Cin, N, H, W = xcm.shape
    (y,) = _pcall(relu_matmul_bn_kernel, [(w.shape[0], N * H * W)],
                  [xcm.reshape(Cin, N * H * W), w])
    return y.reshape(w.shape[0], N, H, W)


def preprocess_factorized_reduce(xcm, w1, w2):
    _, N, H, W = xcm.shape
    xeo = _even_odd_stack(xcm)
    wfr = _block_diag(w1, w2)
    (y,) = _pcall(relu_matmul_bn_kernel, [(wfr.shape[0], xeo.shape[1])],
                  [xeo, wfr])
    return y.reshape(wfr.shape[0], N, H // 2, W // 2)


def mixed_op_edge(hcm, aw, eparams, stride, step_acc):
    """Fused MixedOp for one edge; returns the running per-step accumulator."""
    C, N, H, W = hcm.shape

    # Shared zero-padded 5x5 patch slab serves max/avg pool, both sep_conv
    # stage-1s and dil_conv_3x3; dil_conv_5x5 (pad 4, dilation 2) gets its own.
    p5, (Ho, Wo) = extract_patches_cm(hcm, 5, stride, 2, 1)
    p9d, _ = extract_patches_cm(hcm, 5, stride, 4, 2)
    Mo = p5.shape[-1]

    # Pool-padding bookkeeping precomputed in glue (position-only, data-free):
    # additive -1e30 mask for max pool, reciprocal valid-tap count for avg pool.
    ones = jnp.ones((1, N, H, W), jnp.float32)
    m9, _ = extract_patches_cm(ones, 3, stride, 1, 1)
    neg9 = (m9 - 1.0) * _NEG_BIG
    inv_cnt = 1.0 / jnp.sum(m9, axis=1)

    conv_w = [eparams['dil_conv_3x3']['dw'], eparams['dil_conv_3x3']['pw'],
              eparams['dil_conv_5x5']['dw'], eparams['dil_conv_5x5']['pw'],
              eparams['sep_conv_3x3']['dw1'], eparams['sep_conv_3x3']['pw1'],
              eparams['sep_conv_5x5']['dw1'], eparams['sep_conv_5x5']['pw1']]

    if stride == 1:
        acc_edge, i3, i5 = _pcall(
            mixed_stage1_s1_kernel, [(C, Mo)] * 3,
            [aw, p5, p9d, neg9, inv_cnt, hcm.reshape(C, Mo)] + conv_w,
            n_smem=1)
    else:
        xeo = _even_odd_stack(hcm)
        wfr = _block_diag(eparams['skip_connect']['w1'],
                          eparams['skip_connect']['w2'])
        acc_edge, i3, i5 = _pcall(
            mixed_stage1_s2_kernel, [(C, Mo)] * 3,
            [aw, p5, p9d, neg9, inv_cnt, xeo, wfr] + conv_w,
            n_smem=1)

    # sep_conv second stage needs spatial patches of the BN'd intermediates.
    p3b, _ = extract_patches_cm(i3.reshape(C, N, Ho, Wo), 3, 1, 1, 1)
    p5b, _ = extract_patches_cm(i5.reshape(C, N, Ho, Wo), 5, 1, 2, 1)
    prev = step_acc if step_acc is not None else jnp.zeros((C, Mo), jnp.float32)
    (acc,) = _pcall(
        mixed_stage2_kernel, [(C, Mo)],
        [aw, prev, acc_edge, p3b, p5b,
         eparams['sep_conv_3x3']['dw2'], eparams['sep_conv_3x3']['pw2'],
         eparams['sep_conv_5x5']['dw2'], eparams['sep_conv_5x5']['pw2']],
        n_smem=1)
    return acc, (Ho, Wo)


# ----------------------------- Cell -----------------------------

def cell_forward(params, s0, s1, weights, steps, multiplier,
                 reduction, reduction_prev):
    N = s0.shape[0]
    # Channel-major layout for the whole cell; NCHW transpose only at the boundary.
    s0cm = jnp.transpose(s0, (1, 0, 2, 3)).astype(jnp.float32)
    s1cm = jnp.transpose(s1, (1, 0, 2, 3)).astype(jnp.float32)

    if reduction_prev:
        s0cm = preprocess_factorized_reduce(s0cm, params['pre0']['w1'],
                                            params['pre0']['w2'])
    else:
        s0cm = preprocess_relu_conv_bn(s0cm, params['pre0']['w'])
    s1cm = preprocess_relu_conv_bn(s1cm, params['pre1']['w'])

    states = [s0cm, s1cm]
    offset = 0
    for _ in range(steps):
        acc, hw = None, None
        for j, h in enumerate(states):
            stride = 2 if (reduction and j < 2) else 1
            # 'none' (Zero op) contributes exactly weight * 0 and is skipped.
            acc, hw = mixed_op_edge(h, weights[offset + j],
                                    params['ops'][offset + j], stride, acc)
        offset += len(states)
        states.append(acc.reshape(acc.shape[0], N, hw[0], hw[1]))

    out = jnp.concatenate(states[-multiplier:], axis=0)   # (mult*C, N, H', W')
    return jnp.transpose(out, (1, 0, 2, 3))


# ----------------------------- Deterministic parameter init -----------------------------

def init_cell_params(key, steps, C_pp, C_prev, C, reduction, reduction_prev):
    def nxt():
        nonlocal key
        key, sub = jax.random.split(key)
        return sub

    def rnd(shape):
        return 0.1 * jax.random.normal(nxt(), shape, jnp.float32)

    params = {}
    if reduction_prev:
        params['pre0'] = {'w1': rnd((C // 2, C_pp)), 'w2': rnd((C // 2, C_pp))}
    else:
        params['pre0'] = {'w': rnd((C, C_pp))}
    params['pre1'] = {'w': rnd((C, C_prev))}

    ops = []
    for i in range(steps):
        for j in range(2 + i):
            stride = 2 if reduction and j < 2 else 1
            ep = {
                'sep_conv_3x3': {'dw1': rnd((C, 9)), 'pw1': rnd((C, C)),
                                 'dw2': rnd((C, 9)), 'pw2': rnd((C, C))},
                'sep_conv_5x5': {'dw1': rnd((C, 25)), 'pw1': rnd((C, C)),
                                 'dw2': rnd((C, 25)), 'pw2': rnd((C, C))},
                'dil_conv_3x3': {'dw': rnd((C, 9)), 'pw': rnd((C, C))},
                'dil_conv_5x5': {'dw': rnd((C, 25)), 'pw': rnd((C, C))},
                'skip_connect': ({'w1': rnd((C // 2, C)), 'w2': rnd((C // 2, C))}
                                 if stride == 2 else {}),
            }
            ops.append(ep)
    params['ops'] = ops
    return params


if __name__ == "__main__":
    steps, multiplier = 2, 2
    N, H, W = 2, 8, 8
    C_pp, C_prev, C = 16, 16, 8      # C multiple of 8 -> full f32 sublane use

    num_edges = sum(2 + i for i in range(steps))
    key = jax.random.PRNGKey(0)
    kk = jax.random.split(key, 9)

    cell = jax.jit(cell_forward, static_argnums=(4, 5, 6, 7))

    s0 = jax.random.normal(kk[0], (N, C_pp, H, W), jnp.float32)
    s1 = jax.random.normal(kk[1], (N, C_prev, H, W), jnp.float32)

    # --- normal cell -------------------------------------------------------
    w_n = jax.nn.softmax(jax.random.normal(kk[2], (num_edges, len(PRIMITIVES)),
                                           jnp.float32), axis=-1)
    p_n = init_cell_params(kk[3], steps, C_pp, C_prev, C, False, False)
    out_n = jax.block_until_ready(
        cell(p_n, s0, s1, w_n, steps, multiplier, False, False))
    assert out_n.shape == (N, multiplier * C, H, W), out_n.shape
    assert out_n.dtype == jnp.float32
    assert bool(jnp.all(jnp.isfinite(out_n)))

    # --- reduction cell (stride-2 MixedOps + FactorizedReduce skip_connect) --
    w_r = jax.nn.softmax(jax.random.normal(kk[4], (num_edges, len(PRIMITIVES)),
                                           jnp.float32), axis=-1)
    p_r = init_cell_params(kk[5], steps, C_pp, C_prev, C, True, False)
    out_r = jax.block_until_ready(
        cell(p_r, s0, s1, w_r, steps, multiplier, True, False))
    assert out_r.shape == (N, multiplier * C, H // 2, W // 2), out_r.shape
    assert bool(jnp.all(jnp.isfinite(out_r)))

    # --- cell following a reduction cell (FactorizedReduce preprocess0) -----
    s0_big = jax.random.normal(kk[6], (N, C_pp, 2 * H, 2 * W), jnp.float32)
    w_p = jax.nn.softmax(jax.random.normal(kk[7], (num_edges, len(PRIMITIVES)),
                                           jnp.float32), axis=-1)
    p_p = init_cell_params(kk[8], steps, C_pp, C_prev, C, False, True)
    out_p = jax.block_until_ready(
        cell(p_p, s0_big, s1, w_p, steps, multiplier, False, True))
    assert out_p.shape == (N, multiplier * C, H, W), out_p.shape
    assert bool(jnp.all(jnp.isfinite(out_p)))

    print("KERNEL_OK")
</pallas_src>

<mosaic_0001>
module attributes {stable_mosaic.version = 11 : i64} {
  func.func @relu_matmul_bn_kernel(%arg0: memref<16x128xf32, #tpu.memory_space<vmem>>, %arg1: memref<8x16xf32, #tpu.memory_space<vmem>>, %arg2: memref<8x128xf32, #tpu.memory_space<vmem>>) attributes {dimension_semantics = [], scalar_prefetch = 0 : i64, scratch_operands = 0 : i64, tpu.core_type = #tpu.core_type<tc>} {
    %c0 = arith.constant 0 : index
    %c0_0 = arith.constant 0 : index
    %0 = vector.load %arg1[%c0, %c0_0] : memref<8x16xf32, #tpu.memory_space<vmem>>, vector<8x16xf32>
    %c0_1 = arith.constant 0 : index
    %c0_2 = arith.constant 0 : index
    %1 = vector.load %arg0[%c0_1, %c0_2] : memref<16x128xf32, #tpu.memory_space<vmem>>, vector<16x128xf32>
    %cst = arith.constant 0.000000e+00 : f32
    %2 = vector.broadcast %cst : f32 to vector<16x128xf32>
    %3 = arith.maximumf %1, %2 : vector<16x128xf32>
    %cst_3 = arith.constant dense<0.000000e+00> : vector<8x128xf32>
    %4 = tpu.matmul %0, %3, %cst_3 {dimension_numbers = #tpu.dot_dimension_numbers<[1], [0], [0], [1], [0, 0, 1, 1], [], []>} : vector<8x16xf32>, vector<16x128xf32>, vector<8x128xf32> -> vector<8x128xf32>
    %cst_4 = arith.constant dense<0.000000e+00> : vector<8xf32>
    %5 = vector.multi_reduction <add>, %4, %cst_4 [1] : vector<8x128xf32> to vector<8xf32>
    %6 = vector.shape_cast %5 : vector<8xf32> to vector<8x1xf32>
    %cst_5 = arith.constant 1.280000e+02 : f32
    %7 = vector.broadcast %cst_5 : f32 to vector<8x1xf32>
    %8 = arith.divf %6, %7 : vector<8x1xf32>
    %9 = vector.broadcast %8 : vector<8x1xf32> to vector<8x128xf32>
    %10 = arith.subf %4, %9 : vector<8x128xf32>
    %11 = arith.mulf %10, %10 : vector<8x128xf32>
    %cst_6 = arith.constant dense<0.000000e+00> : vector<8xf32>
    %12 = vector.multi_reduction <add>, %11, %cst_6 [1] : vector<8x128xf32> to vector<8xf32>
    %13 = vector.shape_cast %12 : vector<8xf32> to vector<8x1xf32>
    %cst_7 = arith.constant 1.280000e+02 : f32
    %14 = vector.broadcast %cst_7 : f32 to vector<8x1xf32>
    %15 = arith.divf %13, %14 : vector<8x1xf32>
    %16 = vector.broadcast %8 : vector<8x1xf32> to vector<8x128xf32>
    %17 = arith.subf %4, %16 : vector<8x128xf32>
    %cst_8 = arith.constant 9.99999974E-6 : f32
    %18 = vector.broadcast %cst_8 : f32 to vector<8x1xf32>
    %19 = arith.addf %15, %18 : vector<8x1xf32>
    %20 = math.rsqrt %19 : vector<8x1xf32>
    %21 = vector.broadcast %20 : vector<8x1xf32> to vector<8x128xf32>
    %22 = arith.mulf %17, %21 : vector<8x128xf32>
    %c0_9 = arith.constant 0 : index
    %c0_10 = arith.constant 0 : index
    %23 = vector.load %arg2[%c0_9, %c0_10] : memref<8x128xf32, #tpu.memory_space<vmem>>, vector<8x128xf32>
    tpu.vector_store %arg2[%c0_9, %c0_10], %22 {strides = array<i32>} : memref<8x128xf32, #tpu.memory_space<vmem>>, vector<8x128xf32>,
    return
  }
}

module attributes {stable_mosaic.version = 11 : i64} {
  func.func @mixed_stage1_s1_kernel(%arg0: memref<8xf32, #tpu.memory_space<smem>>, %arg1: memref<8x25x128xf32, #tpu.memory_space<vmem>>, %arg2: memref<8x25x128xf32, #tpu.memory_space<vmem>>, %arg3: memref<1x9x128xf32, #tpu.memory_space<vmem>>, %arg4: memref<1x128xf32, #tpu.memory_space<vmem>>, %arg5: memref<8x128xf32, #tpu.memory_space<vmem>>, %arg6: memref<8x9xf32, #tpu.memory_space<vmem>>, %arg7: memref<8x8xf32, #tpu.memory_space<vmem>>, %arg8: memref<8x25xf32, #tpu.memory_space<vmem>>, %arg9: memref<8x8xf32, #tpu.memory_space<vmem>>, %arg10: memref<8x9xf32, #tpu.memory_space<vmem>>, %arg11: memref<8x8xf32, #tpu.memory_space<vmem>>, %arg12: memref<8x25xf32, #tpu.memory_space<vmem>>, %arg13: memref<8x8xf32, #tpu.memory_space<vmem>>, %arg14: memref<8x128xf32, #tpu.memory_space<vmem>>, %arg15: memref<8x128xf32, #tpu.memory_space<vmem>>, %arg16: memref<8x128xf32, #tpu.memory_space<vmem>>) attributes {dimension_semantics = [], scalar_prefetch = 0 : i64, scratch_operands = 0 : i64, tpu.core_type = #tpu.core_type<tc>} {
    %c0 = arith.constant 0 : index
    %c0_0 = arith.constant 0 : index
    %c0_1 = arith.constant 0 : index
    %0 = vector.load %arg1[%c0, %c0_0, %c0_1] : memref<8x25x128xf32, #tpu.memory_space<vmem>>, vector<8x25x128xf32>
    %c0_2 = arith.constant 0 : index
    %c0_3 = arith.constant 0 : index
    %c0_4 = arith.constant 0 : index
    %1 = vector.load %arg3[%c0_2, %c0_3, %c0_4] : memref<1x9x128xf32, #tpu.memory_space<vmem>>, vector<1x9x128xf32>
    %2 = vector.extract_strided_slice %0 {offsets = [0, 6, 0], sizes = [8, 1, 128], strides = [1, 1, 1]} : vector<8x25x128xf32> to vector<8x1x128xf32>
    %3 = vector.shape_cast %2 : vector<8x1x128xf32> to vector<8x128xf32>
    %4 = vector.extract_strided_slice %1 {offsets = [0, 0, 0], sizes = [1, 1, 128], strides = [1, 1, 1]} : vector<1x9x128xf32> to vector<1x1x128xf32>
    %5 = vector.shape_cast %4 : vector<1x1x128xf32> to vector<1x128xf32>
    %6 = vector.broadcast %5 : vector<1x128xf32> to vector<8x128xf32>
    %7 = arith.addf %3, %6 : vector<8x128xf32>
    %8 = vector.extract_strided_slice %0 {offsets = [0, 6, 0], sizes = [8, 1, 128], strides = [1, 1, 1]} : vector<8x25x128xf32> to vector<8x1x128xf32>
    %9 = vector.shape_cast %8 : vector<8x1x128xf32> to vector<8x128xf32>
    %10 = vector.extract_strided_slice %0 {offsets = [0, 7, 0], sizes = [8, 1, 128], strides = [1, 1, 1]} : vector<8x25x128xf32> to vector<8x1x128xf32>
    %11 = vector.shape_cast %10 : vector<8x1x128xf32> to vector<8x128xf32>
    %12 = vector.extract_strided_slice %1 {offsets = [0, 1, 0], sizes = [1, 1, 128], strides = [1, 1, 1]} : vector<1x9x128xf32> to vector<1x1x128xf32>
    %13 = vector.shape_cast %12 : vector<1x1x128xf32> to vector<1x128xf32>
    %14 = vector.broadcast %13 : vector<1x128xf32> to vector<8x128xf32>
    %15 = arith.addf %11, %14 : vector<8x128xf32>
    %16 = arith.maximumf %7, %15 : vector<8x128xf32>
    %17 = arith.addf %9, %11 : vector<8x128xf32>
    %18 = vector.extract_strided_slice %0 {offsets = [0, 8, 0], sizes = [8, 1, 128], strides = [1, 1, 1]} : vector<8x25x128xf32> to vector<8x1x128xf32>
    %19 = vector.shape_cast %18 : vector<8x1x128xf32> to vector<8x128xf32>
    %20 = vector.extract_strided_slice %1 {offsets = [0, 2, 0], sizes = [1, 1, 128], strides = [1, 1, 1]} : vector<1x9x128xf32> to vector<1x1x128xf32>
    %21 = vector.shape_cast %20 : vector<1x1x128xf32> to vector<1x128xf32>
    %22 = vector.broadcast %21 : vector<1x128xf32> to vector<8x128xf32>
    %23 = arith.addf %19, %22 : vector<8x128xf32>
    %24 = arith.maximumf %16, %23 : vector<8x128xf32>
    %25 = arith.addf %17, %19 : vector<8x128xf32>
    %26 = vector.extract_strided_slice %0 {offsets = [0, 11, 0], sizes = [8, 1, 128], strides = [1, 1, 1]} : vector<8x25x128xf32> to vector<8x1x128xf32>
    %27 = vector.shape_cast %26 : vector<8x1x128xf32> to vector<8x128xf32>
    %28 = vector.extract_strided_slice %1 {offsets = [0, 3, 0], sizes = [1, 1, 128], strides = [1, 1, 1]} : vector<1x9x128xf32> to vector<1x1x128xf32>
    %29 = vector.shape_cast %28 : vector<1x1x128xf32> to vector<1x128xf32>
    %30 = vector.broadcast %29 : vector<1x128xf32> to vector<8x128xf32>
    %31 = arith.addf %27, %30 : vector<8x128xf32>
    %32 = arith.maximumf %24, %31 : vector<8x128xf32>
    %33 = arith.addf %25, %27 : vector<8x128xf32>
    %34 = vector.extract_strided_slice %0 {offsets = [0, 12, 0], sizes = [8, 1, 128], strides = [1, 1, 1]} : vector<8x25x128xf32> to vector<8x1x128xf32>
    %35 = vector.shape_cast %34 : vector<8x1x128xf32> to vector<8x128xf32>
    %36 = vector.extract_strided_slice %1 {offsets = [0, 4, 0], sizes = [1, 1, 128], strides = [1, 1, 1]} : vector<1x9x128xf32> to vector<1x1x128xf32>
    %37 = vector.shape_cast %36 : vector<1x1x128xf32> to vector<1x128xf32>
    %38 = vector.broadcast %37 : vector<1x128xf32> to vector<8x128xf32>
    %39 = arith.addf %35, %38 : vector<8x128xf32>
    %40 = arith.maximumf %32, %39 : vector<8x128xf32>
    %41 = arith.addf %33, %35 : vector<8x128xf32>
    %42 = vector.extract_strided_slice %0 {offsets = [0, 13, 0], sizes = [8, 1, 128], strides = [1, 1, 1]} : vector<8x25x128xf32> to vector<8x1x128xf32>
    %43 = vector.shape_cast %42 : vector<8x1x128xf32> to vector<8x128xf32>
    %44 = vector.extract_strided_slice %1 {offsets = [0, 5, 0], sizes = [1, 1, 128], strides = [1, 1, 1]} : vector<1x9x128xf32> to vector<1x1x128xf32>
    %45 = vector.shape_cast %44 : vector<1x1x128xf32> to vector<1x128xf32>
    %46 = vector.broadcast %45 : vector<1x128xf32> to vector<8x128xf32>
    %47 = arith.addf %43, %46 : vector<8x128xf32>
    %48 = arith.maximumf %40, %47 : vector<8x128xf32>
    %49 = arith.addf %41, %43 : vector<8x128xf32>
    %50 = vector.extract_strided_slice %0 {offsets = [0, 16, 0], sizes = [8, 1, 128], strides = [1, 1, 1]} : vector<8x25x128xf32> to vector<8x1x128xf32>
    %51 = vector.shape_cast %50 : vector<8x1x128xf32> to vector<8x128xf32>
    %52 = vector.extract_strided_slice %1 {offsets = [0, 6, 0], sizes = [1, 1, 128], strides = [1, 1, 1]} : vector<1x9x128xf32> to vector<1x1x128xf32>
    %53 = vector.shape_cast %52 : vector<1x1x128xf32> to vector<1x128xf32>
    %54 = vector.broadcast %53 : vector<1x128xf32> to vector<8x128xf32>
    %55 = arith.addf %51, %54 : vector<8x128xf32>
    %56 = arith.maximumf %48, %55 : vector<8x128xf32>
    %57 = arith.addf %49, %51 : vector<8x128xf32>
    %58 = vector.extract_strided_slice %0 {offsets = [0, 17, 0], sizes = [8, 1, 128], strides = [1, 1, 1]} : vector<8x25x128xf32> to vector<8x1x128xf32>
    %59 = vector.shape_cast %58 : vector<8x1x128xf32> to vector<8x128xf32>
    %60 = vector.extract_strided_slice %1 {offsets = [0, 7, 0], sizes = [1, 1, 128], strides = [1, 1, 1]} : vector<1x9x128xf32> to vector<1x1x128xf32>
    %61 = vector.shape_cast %60 : vector<1x1x128xf32> to vector<1x128xf32>
    %62 = vector.broadcast %61 : vector<1x128xf32> to vector<8x128xf32>
    %63 = arith.addf %59, %62 : vector<8x128xf32>
    %64 = arith.maximumf %56, %63 : vector<8x128xf32>
    %65 = arith.addf %57, %59 : vector<8x128xf32>
    %66 = vector.extract_strided_slice %0 {offsets = [0, 18, 0], sizes = [8, 1, 128], strides = [1, 1, 1]} : vector<8x25x128xf32> to vector<8x1x128xf32>
    %67 = vector.shape_cast %66 : vector<8x1x128xf32> to vector<8x128xf32>
    %68 = vector.extract_strided_slice %1 {offsets = [0, 8, 0], sizes = [1, 1, 128], strides = [1, 1, 1]} : vector<1x9x128xf32> to vector<1x1x128xf32>
    %69 = vector.shape_cast %68 : vector<1x1x128xf32> to vector<1x128xf32>
    %70 = vector.broadcast %69 : vector<1x128xf32> to vector<8x128xf32>
    %71 = arith.addf %67, %70 : vector<8x128xf32>
    %72 = arith.maximumf %64, %71 : vector<8x128xf32>
    %73 = arith.addf %65, %67 : vector<8x128xf32>
    %c0_5 = arith.constant 0 : index
    %c0_6 = arith.constant 0 : index
    %74 = vector.load %arg4[%c0_5, %c0_6] : memref<1x128xf32, #tpu.memory_space<vmem>>, vector<1x128xf32>
    %75 = vector.broadcast %74 : vector<1x128xf32> to vector<8x128xf32>
    %76 = arith.mulf %73, %75 : vector<8x128xf32>
    %c1 = arith.constant 1 : index
    %77 = memref.load %arg0[%c1] : memref<8xf32, #tpu.memory_space<smem>>
    %cst = arith.constant dense<0.000000e+00> : vector<8xf32>
    %78 = vector.multi_reduction <add>, %72, %cst [1] : vector<8x128xf32> to vector<8xf32>
    %79 = vector.shape_cast %78 : vector<8xf32> to vector<8x1xf32>
    %cst_7 = arith.constant 1.280000e+02 : f32
    %80 = vector.broadcast %cst_7 : f32 to vector<8x1xf32>
    %81 = arith.divf %79, %80 : vector<8x1xf32>
    %82 = vector.broadcast %81 : vector<8x1xf32> to vector<8x128xf32>
    %83 = arith.subf %72, %82 : vector<8x128xf32>
    %84 = arith.mulf %83, %83 : vector<8x128xf32>
    %cst_8 = arith.constant dense<0.000000e+00> : vector<8xf32>
    %85 = vector.multi_reduction <add>, %84, %cst_8 [1] : vector<8x128xf32> to vector<8xf32>
    %86 = vector.shape_cast %85 : vector<8xf32> to vector<8x1xf32>
    %cst_9 = arith.constant 1.280000e+02 : f32
    %87 = vector.broadcast %cst_9 : f32 to vector<8x1xf32>
    %88 = arith.divf %86, %87 : vector<8x1xf32>
    %89 = vector.broadcast %81 : vector<8x1xf32> to vector<8x128xf32>
    %90 = arith.subf %72, %89 : vector<8x128xf32>
    %cst_10 = arith.constant 9.99999974E-6 : f32
    %91 = vector.broadcast %cst_10 : f32 to vector<8x1xf32>
    %92 = arith.addf %88, %91 : vector<8x1xf32>
    %93 = math.rsqrt %92 : vector<8x1xf32>
    %94 = vector.broadcast %93 : vector<8x1xf32> to vector<8x128xf32>
    %95 = arith.mulf %90, %94 : vector<8x128xf32>
    %96 = vector.broadcast %77 : f32 to vector<8x128xf32>
    %97 = arith.mulf %96, %95 : vector<8x128xf32>
    %c2 = arith.constant 2 : index
    %98 = memref.load %arg0[%c2] : memref<8xf32, #tpu.memory_space<smem>>
    %cst_11 = arith.constant dense<0.000000e+00> : vector<8xf32>
    %99 = vector.multi_reduction <add>, %76, %cst_11 [1] : vector<8x128xf32> to vector<8xf32>
    %100 = vector.shape_cast %99 : vector<8xf32> to vector<8x1xf32>
    %cst_12 = arith.constant 1.280000e+02 : f32
    %101 = vector.broadcast %cst_12 : f32 to vector<8x1xf32>
    %102 = arith.divf %100, %101 : vector<8x1xf32>
    %103 = vector.broadcast %102 : vector<8x1xf32> to vector<8x128xf32>
    %104 = arith.subf %76, %103 : vector<8x128xf32>
    %105 = arith.mulf %104, %104 : vector<8x128xf32>
    %cst_13 = arith.constant dense<0.000000e+00> : vector<8xf32>
    %106 = vector.multi_reduction <add>, %105, %cst_13 [1] : vector<8x128xf32> to vector<8xf32>
    %107 = vector.shape_cast %106 : vector<8xf32> to vector<8x1xf32>
    %cst_14 = arith.constant 1.280000e+02 : f32
    %108 = vector.broadcast %cst_14 : f32 to vector<8x1xf32>
    %109 = arith.divf %107, %108 : vector<8x1xf32>
    %110 = vector.broadcast %102 : vector<8x1xf32> to vector<8x128xf32>
    %111 = arith.subf %76, %110 : vector<8x128xf32>
    %cst_15 = arith.constant 9.99999974E-6 : f32
    %112 = vector.broadcast %cst_15 : f32 to vector<8x1xf32>
    %113 = arith.addf %109, %112 : vector<8x1xf32>
    %114 = math.rsqrt %113 : vector<8x1xf32>
    %115 = vector.broadcast %114 : vector<8x1xf32> to vector<8x128xf32>
    %116 = arith.mulf %111, %115 : vector<8x128xf32>
    %117 = vector.broadcast %98 : f32 to vector<8x128xf32>
    %118 = arith.mulf %117, %116 : vector<8x128xf32>
    %119 = arith.addf %97, %118 : vector<8x128xf32>
    %cst_16 = arith.constant 0.000000e+00 : f32
    %120 = vector.broadcast %cst_16 : f32 to vector<8x25x128xf32>
    %121 = arith.maximumf %0, %120 : vector<8x25x128xf32>
    %c0_17 = arith.constant 0 : index
    %c0_18 = arith.constant 0 : index
    %c0_19 = arith.constant 0 : index
    %122 = vector.load %arg2[%c0_17, %c0_18, %c0_19] : memref<8x25x128xf32, #tpu.memory_space<vmem>>, vector<8x25x128xf32>
    %cst_20 = arith.constant 0.000000e+00 : f32
    %123 = vector.broadcast %cst_20 : f32 to vector<8x25x128xf32>
    %124 = arith.maximumf %122, %123 : vector<8x25x128xf32>
    %c0_21 = arith.constant 0 : index
    %c0_22 = arith.constant 0 : index
    %125 = vector.load %arg7[%c0_21, %c0_22] : memref<8x8xf32, #tpu.memory_space<vmem>>, vector<8x8xf32>
    %c0_23 = arith.constant 0 : index
    %c0_24 = arith.constant 0 : index
    %126 = vector.load %arg6[%c0_23, %c0_24] : memref<8x9xf32, #tpu.memory_space<vmem>>, vector<8x9xf32>
    %127 = vector.extract_strided_slice %126 {offsets = [0, 0], sizes = [8, 1], strides = [1, 1]} : vector<8x9xf32> to vector<8x1xf32>
    %128 = vector.shape_cast %127 : vector<8x1xf32> to vector<8xf32>
    %129 = vector.shape_cast %128 : vector<8xf32> to vector<8x1xf32>
    %130 = vector.extract_strided_slice %121 {offsets = [0, 0, 0], sizes = [8, 1, 128], strides = [1, 1, 1]} : vector<8x25x128xf32> to vector<8x1x128xf32>
    %131 = vector.shape_cast %130 : vector<8x1x128xf32> to vector<8x128xf32>
    %132 = vector.broadcast %129 : vector<8x1xf32> to vector<8x128xf32>
    %133 = arith.mulf %132, %131 : vector<8x128xf32>
    %134 = vector.extract_strided_slice %126 {offsets = [0, 1], sizes = [8, 1], strides = [1, 1]} : vector<8x9xf32> to vector<8x1xf32>
    %135 = vector.shape_cast %134 : vector<8x1xf32> to vector<8xf32>
    %136 = vector.shape_cast %135 : vector<8xf32> to vector<8x1xf32>
    %137 = vector.extract_strided_slice %121 {offsets = [0, 2, 0], sizes = [8, 1, 128], strides = [1, 1, 1]} : vector<8x25x128xf32> to vector<8x1x128xf32>
    %138 = vector.shape_cast %137 : vector<8x1x128xf32> to vector<8x128xf32>
    %139 = vector.broadcast %136 : vector<8x1xf32> to vector<8x128xf32>
    %140 = arith.mulf %139, %138 : vector<8x128xf32>
    %141 = arith.addf %133, %140 : vector<8x128xf32>
    %142 = vector.extract_strided_slice %126 {offsets = [0, 2], sizes = [8, 1], strides = [1, 1]} : vector<8x9xf32> to vector<8x1xf32>
    %143 = vector.shape_cast %142 : vector<8x1xf32> to vector<8xf32>
    %144 = vector.shape_cast %143 : vector<8xf32> to vector<8x1xf32>
    %145 = vector.extract_strided_slice %121 {offsets = [0, 4, 0], sizes = [8, 1, 128], strides = [1, 1, 1]} : vector<8x25x128xf32> to vector<8x1x128xf32>
    %146 = vector.shape_cast %145 : vector<8x1x128xf32> to vector<8x128xf32>
    %147 = vector.broadcast %144 : vector<8x1xf32> to vector<8x128xf32>
    %148 = arith.mulf %147, %146 : vector<8x128xf32>
    %149 = arith.addf %141, %148 : vector<8x128xf32>
    %150 = vector.extract_strided_slice %126 {offsets = [0, 3], sizes = [8, 1], strides = [1, 1]} : vector<8x9xf32> to vector<8x1xf32>
    %151 = vector.shape_cast %150 : vector<8x1xf32> to vector<8xf32>
    %152 = vector.shape_cast %151 : vector<8xf32> to vector<8x1xf32>
    %153 = vector.extract_strided_slice %121 {offsets = [0, 10, 0], sizes = [8, 1, 128], strides = [1, 1, 1]} : vector<8x25x128xf32> to vector<8x1x128xf32>
    %154 = vector.shape_cast %153 : vector<8x1x128xf32> to vector<8x128xf32>
    %155 = vector.broadcast %152 : vector<8x1xf32> to vector<8x128xf32>
    %156 = arith.mulf %155, %154 : vector<8x128xf32>
    %157 = arith.addf %149, %156 : vector<8x128xf32>
    %158 = vector.extract_strided_slice %126 {offsets = [0, 4], sizes = [8, 1], strides = [1, 1]} : vector<8x9xf32> to vector<8x1xf32>
    %159 = vector.shape_cast %158 : vector<8x1xf32> to vector<8xf32>
    %160 = vector.shape_cast %159 : vector<8xf32> to vector<8x1xf32>
    %161 = vector.extract_strided_slice %121 {offsets = [0, 12, 0], sizes = [8, 1, 128], strides = [1, 1, 1]} : vector<8x25x128xf32> to vector<8x1x128xf32>
    %162 = vector.shape_cast %161 : vector<8x1x128xf32> to vector<8x128xf32>
    %163 = vector.broadcast %160 : vector<8x1xf32> to vector<8x128xf32>
    %164 = arith.mulf %163, %162 : vector<8x128xf32>
    %165 = arith.addf %157, %164 : vector<8x128xf32>
    %166 = vector.extract_strided_slice %126 {offsets = [0, 5], sizes = [8, 1], strides = [1, 1]} : vector<8x9xf32> to vector<8x1xf32>
    %167 = vector.shape_cast %166 : vector<8x1xf32> to vector<8xf32>
    %168 = vector.shape_cast %167 : vector<8xf32> to vector<8x1xf32>
    %169 = vector.extract_strided_slice %121 {offsets = [0, 14, 0], sizes = [8, 1, 128], strides = [1, 1, 1]} : vector<8x25x128xf32> to vector<8x1x128xf32>
    %170 = vector.shape_cast %169 : vector<8x1x128xf32> to vector<8x128xf32>
    %171 = vector.broadcast %168 : vector<8x1xf32> to vector<8x128xf32>
    %172 = arith.mulf %171, %170 : vector<8x128xf32>
    %173 = arith.addf %165, %172 : vector<8x128xf32>
    %174 = vector.extract_strided_slice %126 {offsets = [0, 6], sizes = [8, 1], strides = [1, 1]} : vector<8x9xf32> to vector<8x1xf32>
    %175 = vector.shape_cast %174 : vector<8x1xf32> to vector<8xf32>
    %176 = vector.shape_cast %175 : vector<8xf32> to vector<8x1xf32>
    %177 = vector.extract_strided_slice %121 {offsets = [0, 20, 0], sizes = [8, 1, 128], strides = [1, 1, 1]} : vector<8x25x128xf32> to vector<8x1x128xf32>
    %178 = vector.shape_cast %177 : vector<8x1x128xf32> to vector<8x128xf32>
    %179 = vector.broadcast %176 : vector<8x1xf32> to vector<8x128xf32>
    %180 = arith.mulf %179, %178 : vector<8x128xf32>
    %181 = arith.addf %173, %180 : vector<8x128xf32>
    %182 = vector.extract_strided_slice %126 {offsets = [0, 7], sizes = [8, 1], strides = [1, 1]} : vector<8x9xf32> to vector<8x1xf32>
    %183 = vector.shape_cast %182 : vector<8x1xf32> to vector<8xf32>
    %184 = vector.shape_cast %183 : vector<8xf32> to vector<8x1xf32>
    %185 = vector.extract_strided_slice %121 {offsets = [0, 22, 0], sizes = [8, 1, 128], strides = [1, 1, 1]} : vector<8x25x128xf32> to vector<8x1x128xf32>
    %186 = vector.shape_cast %185 : vector<8x1x128xf32> to vector<8x128xf32>
    %187 = vector.broadcast %184 : vector<8x1xf32> to vector<8x128xf32>
    %188 = arith.mulf %187, %186 : vector<8x128xf32>
    %189 = arith.addf %181, %188 : vector<8x128xf32>
    %190 = vector.extract_strided_slice %126 {offsets = [0, 8], sizes = [8, 1], strides = [1, 1]} : vector<8x9xf32> to vector<8x1xf32>
    %191 = vector.shape_cast %190 : vector<8x1xf32> to vector<8xf32>
    %192 = vector.shape_cast %191 : vector<8xf32> to vector<8x1xf32>
    %193 = vector.extract_strided_slice %121 {offsets = [0, 24, 0], sizes = [8, 1, 128], strides = [1, 1, 1]} : vector<8x25x128xf32> to vector<8x1x128xf32>
    %194 = vector.shape_cast %193 : vector<8x1x128xf32> to vector<8x128xf32>
    %195 = vector.broadcast %192 : vector<8x1xf32> to vector<8x128xf32>
    %196 = arith.mulf %195, %194 : vector<8x128xf32>
    %197 = arith.addf %189, %196 : vector<8x128xf32>
    %cst_25 = arith.constant dense<0.000000e+00> : vector<8x128xf32>
    %198 = tpu.matmul %125, %197, %cst_25 {dimension_numbers = #tpu.dot_dimension_numbers<[1], [0], [0], [1], [0, 0, 1, 1], [], []>} : vector<8x8xf32>, vector<8x128xf32>, vector<8x128xf32> -> vector<8x128xf32>
    %c6 = arith.constant 6 : index
    %199 = memref.load %arg0[%c6] : memref<8xf32, #tpu.memory_space<smem>>
    %cst_26 = arith.constant dense<0.000000e+00> : vector<8xf32>
    %200 = vector.multi_reduction <add>, %198, %cst_26 [1] : vector<8x128xf32> to vector<8xf32>
    %201 = vector.shape_cast %200 : vector<8xf32> to vector<8x1xf32>
    %cst_27 = arith.constant 1.280000e+02 : f32
    %202 = vector.broadcast %cst_27 : f32 to vector<8x1xf32>
    %203 = arith.divf %201, %202 : vector<8x1xf32>
    %204 = vector.broadcast %203 : vector<8x1xf32> to vector<8x128xf32>
    %205 = arith.subf %198, %204 : vector<8x128xf32>
    %206 = arith.mulf %205, %205 : vector<8x128xf32>
    %cst_28 = arith.constant dense<0.000000e+00> : vector<8xf32>
    %207 = vector.multi_reduction <add>, %206, %cst_28 [1] : vector<8x128xf32> to vector<8xf32>
    %208 = vector.shape_cast %207 : vector<8xf32> to vector<8x1xf32>
    %cst_29 = arith.constant 1.280000e+02 : f32
    %209 = vector.broadcast %cst_29 : f32 to vector<8x1xf32>
    %210 = arith.divf %208, %209 : vector<8x1xf32>
    %211 = vector.broadcast %203 : vector<8x1xf32> to vector<8x128xf32>
    %212 = arith.subf %198, %211 : vector<8x128xf32>
    %cst_30 = arith.constant 9.99999974E-6 : f32
    %213 = vector.broadcast %cst_30 : f32 to vector<8x1xf32>
    %214 = arith.addf %210, %213 : vector<8x1xf32>
    %215 = math.rsqrt %214 : vector<8x1xf32>
    %216 = vector.broadcast %215 : vector<8x1xf32> to vector<8x128xf32>
    %217 = arith.mulf %212, %216 : vector<8x128xf32>
    %218 = vector.broadcast %199 : f32 to vector<8x128xf32>
    %219 = arith.mulf %218, %217 : vector<8x128xf32>
    %220 = arith.addf %119, %219 : vector<8x128xf32>
    %c0_31 = arith.constant 0 : index
    %c0_32 = arith.constant 0 : index
    %221 = vector.load %arg9[%c0_31, %c0_32] : memref<8x8xf32, #tpu.memory_space<vmem>>, vector<8x8xf32>
    %c0_33 = arith.constant 0 : index
    %c0_34 = arith.constant 0 : index
    %222 = vector.load %arg8[%c0_33, %c0_34] : memref<8x25xf32, #tpu.memory_space<vmem>>, vector<8x25xf32>
    %223 = vector.extract_strided_slice %222 {offsets = [0, 0], sizes = [8, 1], strides = [1, 1]} : vector<8x25xf32> to vector<8x1xf32>
    %224 = vector.shape_cast %223 : vector<8x1xf32> to vector<8xf32>
    %225 = vector.shape_cast %224 : vector<8xf32> to vector<8x1xf32>
    %226 = vector.extract_strided_slice %124 {offsets = [0, 0, 0], sizes = [8, 1, 128], strides = [1, 1, 1]} : vector<8x25x128xf32> to vector<8x1x128xf32>
    %227 = vector.shape_cast %226 : vector<8x1x128xf32> to vector<8x128xf32>
    %228 = vector.broadcast %225 : vector<8x1xf32> to vector<8x128xf32>
    %229 = arith.mulf %228, %227 : vector<8x128xf32>
    %230 = vector.extract_strided_slice %222 {offsets = [0, 1], sizes = [8, 1], strides = [1, 1]} : vector<8x25xf32> to vector<8x1xf32>
    %231 = vector.shape_cast %230 : vector<8x1xf32> to vector<8xf32>
    %232 = vector.shape_cast %231 : vector<8xf32> to vector<8x1xf32>
    %233 = vector.extract_strided_slice %124 {offsets = [0, 1, 0], sizes = [8, 1, 128], strides = [1, 1, 1]} : vector<8x25x128xf32> to vector<8x1x128xf32>
    %234 = vector.shape_cast %233 : vector<8x1x128xf32> to vector<8x128xf32>
    %235 = vector.broadcast %232 : vector<8x1xf32> to vector<8x128xf32>
    %236 = arith.mulf %235, %234 : vector<8x128xf32>
    %237 = arith.addf %229, %236 : vector<8x128xf32>
    %238 = vector.extract_strided_slice %222 {offsets = [0, 2], sizes = [8, 1], strides = [1, 1]} : vector<8x25xf32> to vector<8x1xf32>
    %239 = vector.shape_cast %238 : vector<8x1xf32> to vector<8xf32>
    %240 = vector.shape_cast %239 : vector<8xf32> to vector<8x1xf32>
    %241 = vector.extract_strided_slice %124 {offsets = [0, 2, 0], sizes = [8, 1, 128], strides = [1, 1, 1]} : vector<8x25x128xf32> to vector<8x1x128xf32>
    %242 = vector.shape_cast %241 : vector<8x1x128xf32> to vector<8x128xf32>
    %243 = vector.broadcast %240 : vector<8x1xf32> to vector<8x128xf32>
    %244 = arith.mulf %243, %242 : vector<8x128xf32>
    %245 = arith.addf %237, %244 : vector<8x128xf32>
    %246 = vector.extract_strided_slice %222 {offsets = [0, 3], sizes = [8, 1], strides = [1, 1]} : vector<8x25xf32> to vector<8x1xf32>
    %247 = vector.shape_cast %246 : vector<8x1xf32> to vector<8xf32>
    %248 = vector.shape_cast %247 : vector<8xf32> to vector<8x1xf32>
    %249 = vector.extract_strided_slice %124 {offsets = [0, 3, 0], sizes = [8, 1, 128], strides = [1, 1, 1]} : vector<8x25x128xf32> to vector<8x1x128xf32>
    %250 = vector.shape_cast %249 : vector<8x1x128xf32> to vector<8x128xf32>
    %251 = vector.broadcast %248 : vector<8x1xf32> to vector<8x128xf32>
    %252 = arith.mulf %251, %250 : vector<8x128xf32>
    %253 = arith.addf %245, %252 : vector<8x128xf32>
    %254 = vector.extract_strided_slice %222 {offsets = [0, 4], sizes = [8, 1], strides = [1, 1]} : vector<8x25xf32> to vector<8x1xf32>
    %255 = vector.shape_cast %254 : vector<8x1xf32> to vector<8xf32>
    %256 = vector.shape_cast %255 : vector<8xf32> to vector<8x1xf32>
    %257 = vector.extract_strided_slice %124 {offsets = [0, 4, 0], sizes = [8, 1, 128], strides = [1, 1, 1]} : vector<8x25x128xf32> to vector<8x1x128xf32>
    %258 = vector.shape_cast %257 : vector<8x1x128xf32> to vector<8x128xf32>
    %259 = vector.broadcast %256 : vector<8x1xf32> to vector<8x128xf32>
    %260 = arith.mulf %259, %258 : vector<8x128xf32>
    %261 = arith.addf %253, %260 : vector<8x128xf32>
    %262 = vector.extract_strided_slice %222 {offsets = [0, 5], sizes = [8, 1], strides = [1, 1]} : vector<8x25xf32> to vector<8x1xf32>
    %263 = vector.shape_cast %262 : vector<8x1xf32> to vector<8xf32>
    %264 = vector.shape_cast %263 : vector<8xf32> to vector<8x1xf32>
    %265 = vector.extract_strided_slice %124 {offsets = [0, 5, 0], sizes = [8, 1, 128], strides = [1, 1, 1]} : vector<8x25x128xf32> to vector<8x1x128xf32>
    %266 = vector.shape_cast %265 : vector<8x1x128xf32> to vector<8x128xf32>
    %267 = vector.broadcast %264 : vector<8x1xf32> to vector<8x128xf32>
    %268 = arith.mulf %267, %266 : vector<8x128xf32>
    %269 = arith.addf %261, %268 : vector<8x128xf32>
    %270 = vector.extract_strided_slice %222 {offsets = [0, 6], sizes = [8, 1], strides = [1, 1]} : vector<8x25xf32> to vector<8x1xf32>
    %271 = vector.shape_cast %270 : vector<8x1xf32> to vector<8xf32>
    %272 = vector.shape_cast %271 : vector<8xf32> to vector<8x1xf32>
    %273 = vector.extract_strided_slice %124 {offsets = [0, 6, 0], sizes = [8, 1, 128], strides = [1, 1, 1]} : vector<8x25x128xf32> to vector<8x1x128xf32>
    %274 = vector.shape_cast %273 : vector<8x1x128xf32> to vector<8x128xf32>
    %275 = vector.broadcast %272 : vector<8x1xf32> to vector<8x128xf32>
    %276 = arith.mulf %275, %274 : vector<8x128xf32>
    %277 = arith.addf %269, %276 : vector<8x128xf32>
    %278 = vector.extract_strided_slice %222 {offsets = [0, 7], sizes = [8, 1], strides = [1, 1]} : vector<8x25xf32> to vector<8x1xf32>
    %279 = vector.shape_cast %278 : vector<8x1xf32> to vector<8xf32>
    %280 = vector.shape_cast %279 : vector<8xf32> to vector<8x1xf32>
    %281 = vector.extract_strided_slice %124 {offsets = [0, 7, 0], sizes = [8, 1, 128], strides = [1, 1, 1]} : vector<8x25x128xf32> to vector<8x1x128xf32>
    %282 = vector.shape_cast %281 : vector<8x1x128xf32> to vector<8x128xf32>
    %283 = vector.broadcast %280 : vector<8x1xf32> to vector<8x128xf32>
    %284 = arith.mulf %283, %282 : vector<8x128xf32>
    %285 = arith.addf %277, %284 : vector<8x128xf32>
    %286 = vector.extract_strided_slice %222 {offsets = [0, 8], sizes = [8, 1], strides = [1, 1]} : vector<8x25xf32> to vector<8x1xf32>
    %287 = vector.shape_cast %286 : vector<8x1xf32> to vector<8xf32>
    %288 = vector.shape_cast %287 : vector<8xf32> to vector<8x1xf32>
    %289 = vector.extract_strided_slice %124 {offsets = [0, 8, 0], sizes = [8, 1, 128], strides = [1, 1, 1]} : vector<8x25x128xf32> to vector<8x1x128xf32>
    %290 = vector.shape_cast %289 : vector<8x1x128xf32> to vector<8x128xf32>
    %291 = vector.broadcast %288 : vector<8x1xf32> to vector<8x128xf32>
    %292 = arith.mulf %291, %290 : vector<8x128xf32>
    %293 = arith.addf %285, %292 : vector<8x128xf32>
    %294 = vector.extract_strided_slice %222 {offsets = [0, 9], sizes = [8, 1], strides = [1, 1]} : vector<8x25xf32> to vector<8x1xf32>
    %295 = vector.shape_cast %294 : vector<8x1xf32> to vector<8xf32>
    %296 = vector.shape_cast %295 : vector<8xf32> to vector<8x1xf32>
    %297 = vector.extract_strided_slice %124 {offsets = [0, 9, 0], sizes = [8, 1, 128], strides = [1, 1, 1]} : vector<8x25x128xf32> to vector<8x1x128xf32>
    %298 = vector.shape_cast %297 : vector<8x1x128xf32> to vector<8x128xf32>
    %299 = vector.broadcast %296 : vector<8x1xf32> to vector<8x128xf32>
    %300 = arith.mulf %299, %298 : vector<8x128xf32>
    %301 = arith.addf %293, %300 : vector<8x128xf32>
    %302 = vector.extract_strided_slice %222 {offsets = [0, 10], sizes = [8, 1], strides = [1, 1]} : vector<8x25xf32> to vector<8x1xf32>
    %303 = vector.shape_cast %302 : vector<8x1xf32> to vector<8xf32>
    %304 = vector.shape_cast %303 : vector<8xf32> to vector<8x1xf32>
    %305 = vector.extract_strided_slice %124 {offsets = [0, 10, 0], sizes = [8, 1, 128], strides = [1, 1, 1]} : vector<8x25x128xf32> to vector<8x1x128xf32>
    %306 = vector.shape_cast %305 : vector<8x1x128xf32> to vector<8x128xf32>
    %307 = vector.broadcast %304 : vector<8x1xf32> to vector<8x128xf32>
    %308 = arith.mulf %307, %306 : vector<8x128xf32>
    %309 = arith.addf %301, %308 : vector<8x128xf32>
    %310 = vector.extract_strided_slice %222 {offsets = [0, 11], sizes = [8, 1], strides = [1, 1]} : vector<8x25xf32> to vector<8x1xf32>
    %311 = vector.shape_cast %310 : vector<8x1xf32> to vector<8xf32>
    %312 = vector.shape_cast %311 : vector<8xf32> to vector<8x1xf32>
    %313 = vector.extract_strided_slice %124 {offsets = [0, 11, 0], sizes = [8, 1, 128], strides = [1, 1, 1]} : vector<8x25x128xf32> to vector<8x1x128xf32>
    %314 = vector.shape_cast %313 : vector<8x1x128xf32> to vector<8x128xf32>
    %315 = vector.broadcast %312 : vector<8x1xf32> to vector<8x128xf32>
    %316 = arith.mulf %315, %314 : vector<8x128xf32>
    %317 = arith.addf %309, %316 : vector<8x128xf32>
    %318 = vector.extract_strided_slice %222 {offsets = [0, 12], sizes = [8, 1], strides = [1, 1]} : vector<8x25xf32> to vector<8x1xf32>
    %319 = vector.shape_cast %318 : vector<8x1xf32> to vector<8xf32>
    %320 = vector.shape_cast %319 : vector<8xf32> to vector<8x1xf32>
    %321 = vector.extract_strided_slice %124 {offsets = [0, 12, 0], sizes = [8, 1, 128], strides = [1, 1, 1]} : vector<8x25x128xf32> to vector<8x1x128xf32>
    %322 = vector.shape_cast %321 : vector<8x1x128xf32> to vector<8x128xf32>
    %323 = vector.broadcast %320 : vector<8x1xf32> to vector<8x128xf32>
    %324 = arith.mulf %323, %322 : vector<8x128xf32>
    %325 = arith.addf %317, %324 : vector<8x128xf32>
    %326 = vector.extract_strided_slice %222 {offsets = [0, 13], sizes = [8, 1], strides = [1, 1]} : vector<8x25xf32> to vector<8x1xf32>
    %327 = vector.shape_cast %326 : vector<8x1xf32> to vector<8xf32>
    %328 = vector.shape_cast %327 : vector<8xf32> to vector<8x1xf32>
    %329 = vector.extract_strided_slice %124 {offsets = [0, 13, 0], sizes = [8, 1, 128], strides = [1, 1, 1]} : vector<8x25x128xf32> to vector<8x1x128xf32>
    %330 = vector.shape_cast %329 : vector<8x1x128xf32> to vector<8x128xf32>
    %331 = vector.broadcast %328 : vector<8x1xf32> to vector<8x128xf32>
    %332 = arith.mulf %331, %330 : vector<8x128xf32>
    %333 = arith.addf %325, %332 : vector<8x128xf32>
    %334 = vector.extract_strided_slice %222 {offsets = [0, 14], sizes = [8, 1], strides = [1, 1]} : vector<8x25xf32> to vector<8x1xf32>
    %335 = vector.shape_cast %334 : vector<8x1xf32> to vector<8xf32>
    %336 = vector.shape_cast %335 : vector<8xf32> to vector<8x1xf32>
    %337 = vector.extract_strided_slice %124 {offsets = [0, 14, 0], sizes = [8, 1, 128], strides = [1, 1, 1]} : vector<8x25x128xf32> to vector<8x1x128xf32>
    %338 = vector.shape_cast %337 : vector<8x1x128xf32> to vector<8x128xf32>
    %339 = vector.broadcast %336 : vector<8x1xf32> to vector<8x128xf32>
    %340 = arith.mulf %339, %338 : vector<8x128xf32>
    %341 = arith.addf %333, %340 : vector<8x128xf32>
    %342 = vector.extract_strided_slice %222 {offsets = [0, 15], sizes = [8, 1], strides = [1, 1]} : vector<8x25xf32> to vector<8x1xf32>
    %343 = vector.shape_cast %342 : vector<8x1xf32> to vector<8xf32>
    %344 = vector.shape_cast %343 : vector<8xf32> to vector<8x1xf32>
    %345 = vector.extract_strided_slice %124 {offsets = [0, 15, 0], sizes = [8, 1, 128], strides = [1, 1, 1]} : vector<8x25x128xf32> to vector<8x1x128xf32>
    %346 = vector.shape_cast %345 : vector<8x1x128xf32> to vector<8x128xf32>
    %347 = vector.broadcast %344 : vector<8x1xf32> to vector<8x128xf32>
    %348 = arith.mulf %347, %346 : vector<8x128xf32>
    %349 = arith.addf %341, %348 : vector<8x128xf32>
    %350 = vector.extract_strided_slice %222 {offsets = [0, 16], sizes = [8, 1], strides = [1, 1]} : vector<8x25xf32> to vector<8x1xf32>
    %351 = vector.shape_cast %350 : vector<8x1xf32> to vector<8xf32>
    %352 = vector.shape_cast %351 : vector<8xf32> to vector<8x1xf32>
    %353 = vector.extract_strided_slice %124 {offsets = [0, 16, 0], sizes = [8, 1, 128], strides = [1, 1, 1]} : vector<8x25x128xf32> to vector<8x1x128xf32>
    %354 = vector.shape_cast %353 : vector<8x1x128xf32> to vector<8x128xf32>
    %355 = vector.broadcast %352 : vector<8x1xf32> to vector<8x128xf32>
    %356 = arith.mulf %355, %354 : vector<8x128xf32>
    %357 = arith.addf %349, %356 : vector<8x128xf32>
    %358 = vector.extract_strided_slice %222 {offsets = [0, 17], sizes = [8, 1], strides = [1, 1]} : vector<8x25xf32> to vector<8x1xf32>
    %359 = vector.shape_cast %358 : vector<8x1xf32> to vector<8xf32>
    %360 = vector.shape_cast %359 : vector<8xf32> to vector<8x1xf32>
    %361 = vector.extract_strided_slice %124 {offsets = [0, 17, 0], sizes = [8, 1, 128], strides = [1, 1, 1]} : vector<8x25x128xf32> to vector<8x1x128xf32>
    %362 = vector.shape_cast %361 : vector<8x1x128xf32> to vector<8x128xf32>
    %363 = vector.broadcast %360 : vector<8x1xf32> to vector<8x128xf32>
    %364 = arith.mulf %363, %362 : vector<8x128xf32>
    %365 = arith.addf %357, %364 : vector<8x128xf32>
    %366 = vector.extract_strided_slice %222 {offsets = [0, 18], sizes = [8, 1], strides = [1, 1]} : vector<8x25xf32> to vector<8x1xf32>
    %367 = vector.shape_cast %366 : vector<8x1xf32> to vector<8xf32>
    %368 = vector.shape_cast %367 : vector<8xf32> to vector<8x1xf32>
    %369 = vector.extract_strided_slice %124 {offsets = [0, 18, 0], sizes = [8, 1, 128], strides = [1, 1, 1]} : vector<8x25x128xf32> to vector<8x1x128xf32>
    %370 = vector.shape_cast %369 : vector<8x1x128xf32> to vector<8x128xf32>
    %371 = vector.broadcast %368 : vector<8x1xf32> to vector<8x128xf32>
    %372 = arith.mulf %371, %370 : vector<8x128xf32>
    %373 = arith.addf %365, %372 : vector<8x128xf32>
    %374 = vector.extract_strided_slice %222 {offsets = [0, 19], sizes = [8, 1], strides = [1, 1]} : vector<8x25xf32> to vector<8x1xf32>
    %375 = vector.shape_cast %374 : vector<8x1xf32> to vector<8xf32>
    %376 = vector.shape_cast %375 : vector<8xf32> to vector<8x1xf32>
    %377 = vector.extract_strided_slice %124 {offsets = [0, 19, 0], sizes = [8, 1, 128], strides = [1, 1, 1]} : vector<8x25x128xf32> to vector<8x1x128xf32>
    %378 = vector.shape_cast %377 : vector<8x1x128xf32> to vector<8x128xf32>
    %379 = vector.broadcast %376 : vector<8x1xf32> to vector<8x128xf32>
    %380 = arith.mulf %379, %378 : vector<8x128xf32>
    %381 = arith.addf %373, %380 : vector<8x128xf32>
    %382 = vector.extract_strided_slice %222 {offsets = [0, 20], sizes = [8, 1], strides = [1, 1]} : vector<8x25xf32> to vector<8x1xf32>
    %383 = vector.shape_cast %382 : vector<8x1xf32> to vector<8xf32>
    %384 = vector.shape_cast %383 : vector<8xf32> to vector<8x1xf32>
    %385 = vector.extract_strided_slice %124 {offsets = [0, 20, 0], sizes = [8, 1, 128], strides = [1, 1, 1]} : vector<8x25x128xf32> to vector<8x1x128xf32>
    %386 = vector.shape_cast %385 : vector<8x1x128xf32> to vector<8x128xf32>
    %387 = vector.broadcast %384 : vector<8x1xf32> to vector<8x128xf32>
    %388 = arith.mulf %387, %386 : vector<8x128xf32>
    %389 = arith.addf %381, %388 : vector<8x128xf32>
    %390 = vector.extract_strided_slice %222 {offsets = [0, 21], sizes = [8, 1], strides = [1, 1]} : vector<8x25xf32> to vector<8x1xf32>
    %391 = vector.shape_cast %390 : vector<8x1xf32> to vector<8xf32>
    %392 = vector.shape_cast %391 : vector<8xf32> to vector<8x1xf32>
    %393 = vector.extract_strided_slice %124 {offsets = [0, 21, 0], sizes = [8, 1, 128], strides = [1, 1, 1]} : vector<8x25x128xf32> to vector<8x1x128xf32>
    %394 = vector.shape_cast %393 : vector<8x1x128xf32> to vector<8x128xf32>
    %395 = vector.broadcast %392 : vector<8x1xf32> to vector<8x128xf32>
    %396 = arith.mulf %395, %394 : vector<8x128xf32>
    %397 = arith.addf %389, %396 : vector<8x128xf32>
    %398 = vector.extract_strided_slice %222 {offsets = [0, 22], sizes = [8, 1], strides = [1, 1]} : vector<8x25xf32> to vector<8x1xf32>
    %399 = vector.shape_cast %398 : vector<8x1xf32> to vector<8xf32>
    %400 = vector.shape_cast %399 : vector<8xf32> to vector<8x1xf32>
    %401 = vector.extract_strided_slice %124 {offsets = [0, 22, 0], sizes = [8, 1, 128], strides = [1, 1, 1]} : vector<8x25x128xf32> to vector<8x1x128xf32>
    %402 = vector.shape_cast %401 : vector<8x1x128xf32> to vector<8x128xf32>
    %403 = vector.broadcast %400 : vector<8x1xf32> to vector<8x128xf32>
    %404 = arith.mulf %403, %402 : vector<8x128xf32>
    %405 = arith.addf %397, %404 : vector<8x128xf32>
    %406 = vector.extract_strided_slice %222 {offsets = [0, 23], sizes = [8, 1], strides = [1, 1]} : vector<8x25xf32> to vector<8x1xf32>
    %407 = vector.shape_cast %406 : vector<8x1xf32> to vector<8xf32>
    %408 = vector.shape_cast %407 : vector<8xf32> to vector<8x1xf32>
    %409 = vector.extract_strided_slice %124 {offsets = [0, 23, 0], sizes = [8, 1, 128], strides = [1, 1, 1]} : vector<8x25x128xf32> to vector<8x1x128xf32>
    %410 = vector.shape_cast %409 : vector<8x1x128xf32> to vector<8x128xf32>
    %411 = vector.broadcast %408 : vector<8x1xf32> to vector<8x128xf32>
    %412 = arith.mulf %411, %410 : vector<8x128xf32>
    %413 = arith.addf %405, %412 : vector<8x128xf32>
    %414 = vector.extract_strided_slice %222 {offsets = [0, 24], sizes = [8, 1], strides = [1, 1]} : vector<8x25xf32> to vector<8x1xf32>
    %415 = vector.shape_cast %414 : vector<8x1xf32> to vector<8xf32>
    %416 = vector.shape_cast %415 : vector<8xf32> to vector<8x1xf32>
    %417 = vector.extract_strided_slice %124 {offsets = [0, 24, 0], sizes = [8, 1, 128], strides = [1, 1, 1]} : vector<8x25x128xf32> to vector<8x1x128xf32>
    %418 = vector.shape_cast %417 : vector<8x1x128xf32> to vector<8x128xf32>
    %419 = vector.broadcast %416 : vector<8x1xf32> to vector<8x128xf32>
    %420 = arith.mulf %419, %418 : vector<8x128xf32>
    %421 = arith.addf %413, %420 : vector<8x128xf32>
    %cst_35 = arith.constant dense<0.000000e+00> : vector<8x128xf32>
    %422 = tpu.matmul %221, %421, %cst_35 {dimension_numbers = #tpu.dot_dimension_numbers<[1], [0], [0], [1], [0, 0, 1, 1], [], []>} : vector<8x8xf32>, vector<8x128xf32>, vector<8x128xf32> -> vector<8x128xf32>
    %c7 = arith.constant 7 : index
    %423 = memref.load %arg0[%c7] : memref<8xf32, #tpu.memory_space<smem>>
    %cst_36 = arith.constant dense<0.000000e+00> : vector<8xf32>
    %424 = vector.multi_reduction <add>, %422, %cst_36 [1] : vector<8x128xf32> to vector<8xf32>
    %425 = vector.shape_cast %424 : vector<8xf32> to vector<8x1xf32>
    %cst_37 = arith.constant 1.280000e+02 : f32
    %426 = vector.broadcast %cst_37 : f32 to vector<8x1xf32>
    %427 = arith.divf %425, %426 : vector<8x1xf32>
    %428 = vector.broadcast %427 : vector<8x1xf32> to vector<8x128xf32>
    %429 = arith.subf %422, %428 : vector<8x128xf32>
    %430 = arith.mulf %429, %429 : vector<8x128xf32>
    %cst_38 = arith.constant dense<0.000000e+00> : vector<8xf32>
    %431 = vector.multi_reduction <add>, %430, %cst_38 [1] : vector<8x128xf32> to vector<8xf32>
    %432 = vector.shape_cast %431 : vector<8xf32> to vector<8x1xf32>
    %cst_39 = arith.constant 1.280000e+02 : f32
    %433 = vector.broadcast %cst_39 : f32 to vector<8x1xf32>
    %434 = arith.divf %432, %433 : vector<8x1xf32>
    %435 = vector.broadcast %427 : vector<8x1xf32> to vector<8x128xf32>
    %436 = arith.subf %422, %435 : vector<8x128xf32>
    %cst_40 = arith.constant 9.99999974E-6 : f32
    %437 = vector.broadcast %cst_40 : f32 to vector<8x1xf32>
    %438 = arith.addf %434, %437 : vector<8x1xf32>
    %439 = math.rsqrt %438 : vector<8x1xf32>
    %440 = vector.broadcast %439 : vector<8x1xf32> to vector<8x128xf32>
    %441 = arith.mulf %436, %440 : vector<8x128xf32>
    %442 = vector.broadcast %423 : f32 to vector<8x128xf32>
    %443 = arith.mulf %442, %441 : vector<8x128xf32>
    %444 = arith.addf %220, %443 : vector<8x128xf32>
    %c0_41 = arith.constant 0 : index
    %c0_42 = arith.constant 0 : index
    %445 = vector.load %arg11[%c0_41, %c0_42] : memref<8x8xf32, #tpu.memory_space<vmem>>, vector<8x8xf32>
    %c0_43 = arith.constant 0 : index
    %c0_44 = arith.constant 0 : index
    %446 = vector.load %arg10[%c0_43, %c0_44] : memref<8x9xf32, #tpu.memory_space<vmem>>, vector<8x9xf32>
    %447 = vector.extract_strided_slice %446 {offsets = [0, 0], sizes = [8, 1], strides = [1, 1]} : vector<8x9xf32> to vector<8x1xf32>
    %448 = vector.shape_cast %447 : vector<8x1xf32> to vector<8xf32>
    %449 = vector.shape_cast %448 : vector<8xf32> to vector<8x1xf32>
    %450 = vector.extract_strided_slice %121 {offsets = [0, 6, 0], sizes = [8, 1, 128], strides = [1, 1, 1]} : vector<8x25x128xf32> to vector<8x1x128xf32>
    %451 = vector.shape_cast %450 : vector<8x1x128xf32> to vector<8x128xf32>
    %452 = vector.broadcast %449 : vector<8x1xf32> to vector<8x128xf32>
    %453 = arith.mulf %452, %451 : vector<8x128xf32>
    %454 = vector.extract_strided_slice %446 {offsets = [0, 1], sizes = [8, 1], strides = [1, 1]} : vector<8x9xf32> to vector<8x1xf32>
    %455 = vector.shape_cast %454 : vector<8x1xf32> to vector<8xf32>
    %456 = vector.shape_cast %455 : vector<8xf32> to vector<8x1xf32>
    %457 = vector.extract_strided_slice %121 {offsets = [0, 7, 0], sizes = [8, 1, 128], strides = [1, 1, 1]} : vector<8x25x128xf32> to vector<8x1x128xf32>
    %458 = vector.shape_cast %457 : vector<8x1x128xf32> to vector<8x128xf32>
    %459 = vector.broadcast %456 : vector<8x1xf32> to vector<8x128xf32>
    %460 = arith.mulf %459, %458 : vector<8x128xf32>
    %461 = arith.addf %453, %460 : vector<8x128xf32>
    %462 = vector.extract_strided_slice %446 {offsets = [0, 2], sizes = [8, 1], strides = [1, 1]} : vector<8x9xf32> to vector<8x1xf32>
    %463 = vector.shape_cast %462 : vector<8x1xf32> to vector<8xf32>
    %464 = vector.shape_cast %463 : vector<8xf32> to vector<8x1xf32>
    %465 = vector.extract_strided_slice %121 {offsets = [0, 8, 0], sizes = [8, 1, 128], strides = [1, 1, 1]} : vector<8x25x128xf32> to vector<8x1x128xf32>
    %466 = vector.shape_cast %465 : vector<8x1x128xf32> to vector<8x128xf32>
    %467 = vector.broadcast %464 : vector<8x1xf32> to vector<8x128xf32>
    %468 = arith.mulf %467, %466 : vector<8x128xf32>
    %469 = arith.addf %461, %468 : vector<8x128xf32>
    %470 = vector.extract_strided_slice %446 {offsets = [0, 3], sizes = [8, 1], strides = [1, 1]} : vector<8x9xf32> to vector<8x1xf32>
    %471 = vector.shape_cast %470 : vector<8x1xf32> to vector<8xf32>
    %472 = vector.shape_cast %471 : vector<8xf32> to vector<8x1xf32>
    %473 = vector.extract_strided_slice %121 {offsets = [0, 11, 0], sizes = [8, 1, 128], strides = [1, 1, 1]} : vector<8x25x128xf32> to vector<8x1x128xf32>
    %474 = vector.shape_cast %473 : vector<8x1x128xf32> to vector<8x128xf32>
    %475 = vector.broadcast %472 : vector<8x1xf32> to vector<8x128xf32>
    %476 = arith.mulf %475, %474 : vector<8x128xf32>
    %477 = arith.addf %469, %476 : vector<8x128xf32>
    %478 = vector.extract_strided_slice %446 {offsets = [0, 4], sizes = [8, 1], strides = [1, 1]} : vector<8x9xf32> to vector<8x1xf32>
    %479 = vector.shape_cast %478 : vector<8x1xf32> to vector<8xf32>
    %480 = vector.shape_cast %479 : vector<8xf32> to vector<8x1xf32>
    %481 = vector.extract_strided_slice %121 {offsets = [0, 12, 0], sizes = [8, 1, 128], strides = [1, 1, 1]} : vector<8x25x128xf32> to vector<8x1x128xf32>
    %482 = vector.shape_cast %481 : vector<8x1x128xf32> to vector<8x128xf32>
    %483 = vector.broadcast %480 : vector<8x1xf32> to vector<8x128xf32>
    %484 = arith.mulf %483, %482 : vector<8x128xf32>
    %485 = arith.addf %477, %484 : vector<8x128xf32>
    %486 = vector.extract_strided_slice %446 {offsets = [0, 5], sizes = [8, 1], strides = [1, 1]} : vector<8x9xf32> to vector<8x1xf32>
    %487 = vector.shape_cast %486 : vector<8x1xf32> to vector<8xf32>
    %488 = vector.shape_cast %487 : vector<8xf32> to vector<8x1xf32>
    %489 = vector.extract_strided_slice %121 {offsets = [0, 13, 0], sizes = [8, 1, 128], strides = [1, 1, 1]} : vector<8x25x128xf32> to vector<8x1x128xf32>
    %490 = vector.shape_cast %489 : vector<8x1x128xf32> to vector<8x128xf32>
    %491 = vector.broadcast %488 : vector<8x1xf32> to vector<8x128xf32>
    %492 = arith.mulf %491, %490 : vector<8x128xf32>
    %493 = arith.addf %485, %492 : vector<8x128xf32>
    %494 = vector.extract_strided_slice %446 {offsets = [0, 6], sizes = [8, 1], strides = [1, 1]} : vector<8x9xf32> to vector<8x1xf32>
    %495 = vector.shape_cast %494 : vector<8x1xf32> to vector<8xf32>
    %496 = vector.shape_cast %495 : vector<8xf32> to vector<8x1xf32>
    %497 = vector.extract_strided_slice %121 {offsets = [0, 16, 0], sizes = [8, 1, 128], strides = [1, 1, 1]} : vector<8x25x128xf32> to vector<8x1x128xf32>
    %498 = vector.shape_cast %497 : vector<8x1x128xf32> to vector<8x128xf32>
    %499 = vector.broadcast %496 : vector<8x1xf32> to vector<8x128xf32>
    %500 = arith.mulf %499, %498 : vector<8x128xf32>
    %501 = arith.addf %493, %500 : vector<8x128xf32>
    %502 = vector.extract_strided_slice %446 {offsets = [0, 7], sizes = [8, 1], strides = [1, 1]} : vector<8x9xf32> to vector<8x1xf32>
    %503 = vector.shape_cast %502 : vector<8x1xf32> to vector<8xf32>
    %504 = vector.shape_cast %503 : vector<8xf32> to vector<8x1xf32>
    %505 = vector.extract_strided_slice %121 {offsets = [0, 17, 0], sizes = [8, 1, 128], strides = [1, 1, 1]} : vector<8x25x128xf32> to vector<8x1x128xf32>
    %506 = vector.shape_cast %505 : vector<8x1x128xf32> to vector<8x128xf32>
    %507 = vector.broadcast %504 : vector<8x1xf32> to vector<8x128xf32>
    %508 = arith.mulf %507, %506 : vector<8x128xf32>
    %509 = arith.addf %501, %508 : vector<8x128xf32>
    %510 = vector.extract_strided_slice %446 {offsets = [0, 8], sizes = [8, 1], strides = [1, 1]} : vector<8x9xf32> to vector<8x1xf32>
    %511 = vector.shape_cast %510 : vector<8x1xf32> to vector<8xf32>
    %512 = vector.shape_cast %511 : vector<8xf32> to vector<8x1xf32>
    %513 = vector.extract_strided_slice %121 {offsets = [0, 18, 0], sizes = [8, 1, 128], strides = [1, 1, 1]} : vector<8x25x128xf32> to vector<8x1x128xf32>
    %514 = vector.shape_cast %513 : vector<8x1x128xf32> to vector<8x128xf32>
    %515 = vector.broadcast %512 : vector<8x1xf32> to vector<8x128xf32>
    %516 = arith.mulf %515, %514 : vector<8x128xf32>
    %517 = arith.addf %509, %516 : vector<8x128xf32>
    %cst_45 = arith.constant dense<0.000000e+00> : vector<8x128xf32>
    %518 = tpu.matmul %445, %517, %cst_45 {dimension_numbers = #tpu.dot_dimension_numbers<[1], [0], [0], [1], [0, 0, 1, 1], [], []>} : vector<8x8xf32>, vector<8x128xf32>, vector<8x128xf32> -> vector<8x128xf32>
    %cst_46 = arith.constant dense<0.000000e+00> : vector<8xf32>
    %519 = vector.multi_reduction <add>, %518, %cst_46 [1] : vector<8x128xf32> to vector<8xf32>
    %520 = vector.shape_cast %519 : vector<8xf32> to vector<8x1xf32>
    %cst_47 = arith.constant 1.280000e+02 : f32
    %521 = vector.broadcast %cst_47 : f32 to vector<8x1xf32>
    %522 = arith.divf %520, %521 : vector<8x1xf32>
    %523 = vector.broadcast %522 : vector<8x1xf32> to vector<8x128xf32>
    %524 = arith.subf %518, %523 : vector<8x128xf32>
    %525 = arith.mulf %524, %524 : vector<8x128xf32>
    %cst_48 = arith.constant dense<0.000000e+00> : vector<8xf32>
    %526 = vector.multi_reduction <add>, %525, %cst_48 [1] : vector<8x128xf32> to vector<8xf32>
    %527 = vector.shape_cast %526 : vector<8xf32> to vector<8x1xf32>
    %cst_49 = arith.constant 1.280000e+02 : f32
    %528 = vector.broadcast %cst_49 : f32 to vector<8x1xf32>
    %529 = arith.divf %527, %528 : vector<8x1xf32>
    %530 = vector.broadcast %522 : vector<8x1xf32> to vector<8x128xf32>
    %531 = arith.subf %518, %530 : vector<8x128xf32>
    %cst_50 = arith.constant 9.99999974E-6 : f32
    %532 = vector.broadcast %cst_50 : f32 to vector<8x1xf32>
    %533 = arith.addf %529, %532 : vector<8x1xf32>
    %534 = math.rsqrt %533 : vector<8x1xf32>
    %535 = vector.broadcast %534 : vector<8x1xf32> to vector<8x128xf32>
    %536 = arith.mulf %531, %535 : vector<8x128xf32>
    %c0_51 = arith.constant 0 : index
    %c0_52 = arith.constant 0 : index
    %537 = vector.load %arg15[%c0_51, %c0_52] : memref<8x128xf32, #tpu.memory_space<vmem>>, vector<8x128xf32>
    tpu.vector_store %arg15[%c0_51, %c0_52], %536 {strides = array<i32>} : memref<8x128xf32, #tpu.memory_space<vmem>>, vector<8x128xf32>,
    %c0_53 = arith.constant 0 : index
    %c0_54 = arith.constant 0 : index
    %538 = vector.load %arg13[%c0_53, %c0_54] : memref<8x8xf32, #tpu.memory_space<vmem>>, vector<8x8xf32>
    %c0_55 = arith.constant 0 : index
    %c0_56 = arith.constant 0 : index
    %539 = vector.load %arg12[%c0_55, %c0_56] : memref<8x25xf32, #tpu.memory_space<vmem>>, vector<8x25xf32>
    %540 = vector.extract_strided_slice %539 {offsets = [0, 0], sizes = [8, 1], strides = [1, 1]} : vector<8x25xf32> to vector<8x1xf32>
    %541 = vector.shape_cast %540 : vector<8x1xf32> to vector<8xf32>
    %542 = vector.shape_cast %541 : vector<8xf32> to vector<8x1xf32>
    %543 = vector.extract_strided_slice %121 {offsets = [0, 0, 0], sizes = [8, 1, 128], strides = [1, 1, 1]} : vector<8x25x128xf32> to vector<8x1x128xf32>
    %544 = vector.shape_cast %543 : vector<8x1x128xf32> to vector<8x128xf32>
    %545 = vector.broadcast %542 : vector<8x1xf32> to vector<8x128xf32>
    %546 = arith.mulf %545, %544 : vector<8x128xf32>
    %547 = vector.extract_strided_slice %539 {offsets = [0, 1], sizes = [8, 1], strides = [1, 1]} : vector<8x25xf32> to vector<8x1xf32>
    %548 = vector.shape_cast %547 : vector<8x1xf32> to vector<8xf32>
    %549 = vector.shape_cast %548 : vector<8xf32> to vector<8x1xf32>
    %550 = vector.extract_strided_slice %121 {offsets = [0, 1, 0], sizes = [8, 1, 128], strides = [1, 1, 1]} : vector<8x25x128xf32> to vector<8x1x128xf32>
    %551 = vector.shape_cast %550 : vector<8x1x128xf32> to vector<8x128xf32>
    %552 = vector.broadcast %549 : vector<8x1xf32> to vector<8x128xf32>
    %553 = arith.mulf %552, %551 : vector<8x128xf32>
    %554 = arith.addf %546, %553 : vector<8x128xf32>
    %555 = vector.extract_strided_slice %539 {offsets = [0, 2], sizes = [8, 1], strides = [1, 1]} : vector<8x25xf32> to vector<8x1xf32>
    %556 = vector.shape_cast %555 : vector<8x1xf32> to vector<8xf32>
    %557 = vector.shape_cast %556 : vector<8xf32> to vector<8x1xf32>
    %558 = vector.extract_strided_slice %121 {offsets = [0, 2, 0], sizes = [8, 1, 128], strides = [1, 1, 1]} : vector<8x25x128xf32> to vector<8x1x128xf32>
    %559 = vector.shape_cast %558 : vector<8x1x128xf32> to vector<8x128xf32>
    %560 = vector.broadcast %557 : vector<8x1xf32> to vector<8x128xf32>
    %561 = arith.mulf %560, %559 : vector<8x128xf32>
    %562 = arith.addf %554, %561 : vector<8x128xf32>
    %563 = vector.extract_strided_slice %539 {offsets = [0, 3], sizes = [8, 1], strides = [1, 1]} : vector<8x25xf32> to vector<8x1xf32>
    %564 = vector.shape_cast %563 : vector<8x1xf32> to vector<8xf32>
    %565 = vector.shape_cast %564 : vector<8xf32> to vector<8x1xf32>
    %566 = vector.extract_strided_slice %121 {offsets = [0, 3, 0], sizes = [8, 1, 128], strides = [1, 1, 1]} : vector<8x25x128xf32> to vector<8x1x128xf32>
    %567 = vector.shape_cast %566 : vector<8x1x128xf32> to vector<8x128xf32>
    %568 = vector.broadcast %565 : vector<8x1xf32> to vector<8x128xf32>
    %569 = arith.mulf %568, %567 : vector<8x128xf32>
    %570 = arith.addf %562, %569 : vector<8x128xf32>
    %571 = vector.extract_strided_slice %539 {offsets = [0, 4], sizes = [8, 1], strides = [1, 1]} : vector<8x25xf32> to vector<8x1xf32>
    %572 = vector.shape_cast %571 : vector<8x1xf32> to vector<8xf32>
    %573 = vector.shape_cast %572 : vector<8xf32> to vector<8x1xf32>
    %574 = vector.extract_strided_slice %121 {offsets = [0, 4, 0], sizes = [8, 1, 128], strides = [1, 1, 1]} : vector<8x25x128xf32> to vector<8x1x128xf32>
    %575 = vector.shape_cast %574 : vector<8x1x128xf32> to vector<8x128xf32>
    %576 = vector.broadcast %573 : vector<8x1xf32> to vector<8x128xf32>
    %577 = arith.mulf %576, %575 : vector<8x128xf32>
    %578 = arith.addf %570, %577 : vector<8x128xf32>
    %579 = vector.extract_strided_slice %539 {offsets = [0, 5], sizes = [8, 1], strides = [1, 1]} : vector<8x25xf32> to vector<8x1xf32>
    %580 = vector.shape_cast %579 : vector<8x1xf32> to vector<8xf32>
    %581 = vector.shape_cast %580 : vector<8xf32> to vector<8x1xf32>
    %582 = vector.extract_strided_slice %121 {offsets = [0, 5, 0], sizes = [8, 1, 128], strides = [1, 1, 1]} : vector<8x25x128xf32> to vector<8x1x128xf32>
    %583 = vector.shape_cast %582 : vector<8x1x128xf32> to vector<8x128xf32>
    %584 = vector.broadcast %581 : vector<8x1xf32> to vector<8x128xf32>
    %585 = arith.mulf %584, %583 : vector<8x128xf32>
    %586 = arith.addf %578, %585 : vector<8x128xf32>
    %587 = vector.extract_strided_slice %539 {offsets = [0, 6], sizes = [8, 1], strides = [1, 1]} : vector<8x25xf32> to vector<8x1xf32>
    %588 = vector.shape_cast %587 : vector<8x1xf32> to vector<8xf32>
    %589 = vector.shape_cast %588 : vector<8xf32> to vector<8x1xf32>
    %590 = vector.extract_strided_slice %121 {offsets = [0, 6, 0], sizes = [8, 1, 128], strides = [1, 1, 1]} : vector<8x25x128xf32> to vector<8x1x128xf32>
    %591 = vector.shape_cast %590 : vector<8x1x128xf32> to vector<8x128xf32>
    %592 = vector.broadcast %589 : vector<8x1xf32> to vector<8x128xf32>
    %593 = arith.mulf %592, %591 : vector<8x128xf32>
    %594 = arith.addf %586, %593 : vector<8x128xf32>
    %595 = vector.extract_strided_slice %539 {offsets = [0, 7], sizes = [8, 1], strides = [1, 1]} : vector<8x25xf32> to vector<8x1xf32>
    %596 = vector.shape_cast %595 : vector<8x1xf32> to vector<8xf32>
    %597 = vector.shape_cast %596 : vector<8xf32> to vector<8x1xf32>
    %598 = vector.extract_strided_slice %121 {offsets = [0, 7, 0], sizes = [8, 1, 128], strides = [1, 1, 1]} : vector<8x25x128xf32> to vector<8x1x128xf32>
    %599 = vector.shape_cast %598 : vector<8x1x128xf32> to vector<8x128xf32>
    %600 = vector.broadcast %597 : vector<8x1xf32> to vector<8x128xf32>
    %601 = arith.mulf %600, %599 : vector<8x128xf32>
    %602 = arith.addf %594, %601 : vector<8x128xf32>
    %603 = vector.extract_strided_slice %539 {offsets = [0, 8], sizes = [8, 1], strides = [1, 1]} : vector<8x25xf32> to vector<8x1xf32>
    %604 = vector.shape_cast %603 : vector<8x1xf32> to vector<8xf32>
    %605 = vector.shape_cast %604 : vector<8xf32> to vector<8x1xf32>
    %606 = vector.extract_strided_slice %121 {offsets = [0, 8, 0], sizes = [8, 1, 128], strides = [1, 1, 1]} : vector<8x25x128xf32> to vector<8x1x128xf32>
    %607 = vector.shape_cast %606 : vector<8x1x128xf32> to vector<8x128xf32>
    %608 = vector.broadcast %605 : vector<8x1xf32> to vector<8x128xf32>
    %609 = arith.mulf %608, %607 : vector<8x128xf32>
    %610 = arith.addf %602, %609 : vector<8x128xf32>
    %611 = vector.extract_strided_slice %539 {offsets = [0, 9], sizes = [8, 1], strides = [1, 1]} : vector<8x25xf32> to vector<8x1xf32>
    %612 = vector.shape_cast %611 : vector<8x1xf32> to vector<8xf32>
    %613 = vector.shape_cast %612 : vector<8xf32> to vector<8x1xf32>
    %614 = vector.extract_strided_slice %121 {offsets = [0, 9, 0], sizes = [8, 1, 128], strides = [1, 1, 1]} : vector<8x25x128xf32> to vector<8x1x128xf32>
    %615 = vector.shape_cast %614 : vector<8x1x128xf32> to vector<8x128xf32>
    %616 = vector.broadcast %613 : vector<8x1xf32> to vector<8x128xf32>
    %617 = arith.mulf %616, %615 : vector<8x128xf32>
    %618 = arith.addf %610, %617 : vector<8x128xf32>
    %619 = vector.extract_strided_slice %539 {offsets = [0, 10], sizes = [8, 1], strides = [1, 1]} : vector<8x25xf32> to vector<8x1xf32>
    %620 = vector.shape_cast %619 : vector<8x1xf32> to vector<8xf32>
    %621 = vector.shape_cast %620 : vector<8xf32> to vector<8x1xf32>
    %622 = vector.extract_strided_slice %121 {offsets = [0, 10, 0], sizes = [8, 1, 128], strides = [1, 1, 1]} : vector<8x25x128xf32> to vector<8x1x128xf32>
    %623 = vector.shape_cast %622 : vector<8x1x128xf32> to vector<8x128xf32>
    %624 = vector.broadcast %621 : vector<8x1xf32> to vector<8x128xf32>
    %625 = arith.mulf %624, %623 : vector<8x128xf32>
    %626 = arith.addf %618, %625 : vector<8x128xf32>
    %627 = vector.extract_strided_slice %539 {offsets = [0, 11], sizes = [8, 1], strides = [1, 1]} : vector<8x25xf32> to vector<8x1xf32>
    %628 = vector.shape_cast %627 : vector<8x1xf32> to vector<8xf32>
    %629 = vector.shape_cast %628 : vector<8xf32> to vector<8x1xf32>
    %630 = vector.extract_strided_slice %121 {offsets = [0, 11, 0], sizes = [8, 1, 128], strides = [1, 1, 1]} : vector<8x25x128xf32> to vector<8x1x128xf32>
    %631 = vector.shape_cast %630 : vector<8x1x128xf32> to vector<8x128xf32>
    %632 = vector.broadcast %629 : vector<8x1xf32> to vector<8x128xf32>
    %633 = arith.mulf %632, %631 : vector<8x128xf32>
    %634 = arith.addf %626, %633 : vector<8x128xf32>
    %635 = vector.extract_strided_slice %539 {offsets = [0, 12], sizes = [8, 1], strides = [1, 1]} : vector<8x25xf32> to vector<8x1xf32>
    %636 = vector.shape_cast %635 : vector<8x1xf32> to vector<8xf32>
    %637 = vector.shape_cast %636 : vector<8xf32> to vector<8x1xf32>
    %638 = vector.extract_strided_slice %121 {offsets = [0, 12, 0], sizes = [8, 1, 128], strides = [1, 1, 1]} : vector<8x25x128xf32> to vector<8x1x128xf32>
    %639 = vector.shape_cast %638 : vector<8x1x128xf32> to vector<8x128xf32>
    %640 = vector.broadcast %637 : vector<8x1xf32> to vector<8x128xf32>
    %641 = arith.mulf %640, %639 : vector<8x128xf32>
    %642 = arith.addf %634, %641 : vector<8x128xf32>
    %643 = vector.extract_strided_slice %539 {offsets = [0, 13], sizes = [8, 1], strides = [1, 1]} : vector<8x25xf32> to vector<8x1xf32>
    %644 = vector.shape_cast %643 : vector<8x1xf32> to vector<8xf32>
    %645 = vector.shape_cast %644 : vector<8xf32> to vector<8x1xf32>
    %646 = vector.extract_strided_slice %121 {offsets = [0, 13, 0], sizes = [8, 1, 128], strides = [1, 1, 1]} : vector<8x25x128xf32> to vector<8x1x128xf32>
    %647 = vector.shape_cast %646 : vector<8x1x128xf32> to vector<8x128xf32>
    %648 = vector.broadcast %645 : vector<8x1xf32> to vector<8x128xf32>
    %649 = arith.mulf %648, %647 : vector<8x128xf32>
    %650 = arith.addf %642, %649 : vector<8x128xf32>
    %651 = vector.extract_strided_slice %539 {offsets = [0, 14], sizes = [8, 1], strides = [1, 1]} : vector<8x25xf32> to vector<8x1xf32>
    %652 = vector.shape_cast %651 : vector<8x1xf32> to vector<8xf32>
    %653 = vector.shape_cast %652 : vector<8xf32> to vector<8x1xf32>
    %654 = vector.extract_strided_slice %121 {offsets = [0, 14, 0], sizes = [8, 1, 128], strides = [1, 1, 1]} : vector<8x25x128xf32> to vector<8x1x128xf32>
    %655 = vector.shape_cast %654 : vector<8x1x128xf32> to vector<8x128xf32>
    %656 = vector.broadcast %653 : vector<8x1xf32> to vector<8x128xf32>
    %657 = arith.mulf %656, %655 : vector<8x128xf32>
    %658 = arith.addf %650, %657 : vector<8x128xf32>
    %659 = vector.extract_strided_slice %539 {offsets = [0, 15], sizes = [8, 1], strides = [1, 1]} : vector<8x25xf32> to vector<8x1xf32>
    %660 = vector.shape_cast %659 : vector<8x1xf32> to vector<8xf32>
    %661 = vector.shape_cast %660 : vector<8xf32> to vector<8x1xf32>
    %662 = vector.extract_strided_slice %121 {offsets = [0, 15, 0], sizes = [8, 1, 128], strides = [1, 1, 1]} : vector<8x25x128xf32> to vector<8x1x128xf32>
    %663 = vector.shape_cast %662 : vector<8x1x128xf32> to vector<8x128xf32>
    %664 = vector.broadcast %661 : vector<8x1xf32> to vector<8x128xf32>
    %665 = arith.mulf %664, %663 : vector<8x128xf32>
    %666 = arith.addf %658, %665 : vector<8x128xf32>
    %667 = vector.extract_strided_slice %539 {offsets = [0, 16], sizes = [8, 1], strides = [1, 1]} : vector<8x25xf32> to vector<8x1xf32>
    %668 = vector.shape_cast %667 : vector<8x1xf32> to vector<8xf32>
    %669 = vector.shape_cast %668 : vector<8xf32> to vector<8x1xf32>
    %670 = vector.extract_strided_slice %121 {offsets = [0, 16, 0], sizes = [8, 1, 128], strides = [1, 1, 1]} : vector<8x25x128xf32> to vector<8x1x128xf32>
    %671 = vector.shape_cast %670 : vector<8x1x128xf32> to vector<8x128xf32>
    %672 = vector.broadcast %669 : vector<8x1xf32> to vector<8x128xf32>
    %673 = arith.mulf %672, %671 : vector<8x128xf32>
    %674 = arith.addf %666, %673 : vector<8x128xf32>
    %675 = vector.extract_strided_slice %539 {offsets = [0, 17], sizes = [8, 1], strides = [1, 1]} : vector<8x25xf32> to vector<8x1xf32>
    %676 = vector.shape_cast %675 : vector<8x1xf32> to vector<8xf32>
    %677 = vector.shape_cast %676 : vector<8xf32> to vector<8x1xf32>
    %678 = vector.extract_strided_slice %121 {offsets = [0, 17, 0], sizes = [8, 1, 128], strides = [1, 1, 1]} : vector<8x25x128xf32> to vector<8x1x128xf32>
    %679 = vector.shape_cast %678 : vector<8x1x128xf32> to vector<8x128xf32>
    %680 = vector.broadcast %677 : vector<8x1xf32> to vector<8x128xf32>
    %681 = arith.mulf %680, %679 : vector<8x128xf32>
    %682 = arith.addf %674, %681 : vector<8x128xf32>
    %683 = vector.extract_strided_slice %539 {offsets = [0, 18], sizes = [8, 1], strides = [1, 1]} : vector<8x25xf32> to vector<8x1xf32>
    %684 = vector.shape_cast %683 : vector<8x1xf32> to vector<8xf32>
    %685 = vector.shape_cast %684 : vector<8xf32> to vector<8x1xf32>
    %686 = vector.extract_strided_slice %121 {offsets = [0, 18, 0], sizes = [8, 1, 128], strides = [1, 1, 1]} : vector<8x25x128xf32> to vector<8x1x128xf32>
    %687 = vector.shape_cast %686 : vector<8x1x128xf32> to vector<8x128xf32>
    %688 = vector.broadcast %685 : vector<8x1xf32> to vector<8x128xf32>
    %689 = arith.mulf %688, %687 : vector<8x128xf32>
    %690 = arith.addf %682, %689 : vector<8x128xf32>
    %691 = vector.extract_strided_slice %539 {offsets = [0, 19], sizes = [8, 1], strides = [1, 1]} : vector<8x25xf32> to vector<8x1xf32>
    %692 = vector.shape_cast %691 : vector<8x1xf32> to vector<8xf32>
    %693 = vector.shape_cast %692 : vector<8xf32> to vector<8x1xf32>
    %694 = vector.extract_strided_slice %121 {offsets = [0, 19, 0], sizes = [8, 1, 128], strides = [1, 1, 1]} : vector<8x25x128xf32> to vector<8x1x128xf32>
    %695 = vector.shape_cast %694 : vector<8x1x128xf32> to vector<8x128xf32>
    %696 = vector.broadcast %693 : vector<8x1xf32> to vector<8x128xf32>
    %697 = arith.mulf %696, %695 : vector<8x128xf32>
    %698 = arith.addf %690, %697 : vector<8x128xf32>
    %699 = vector.extract_strided_slice %539 {offsets = [0, 20], sizes = [8, 1], strides = [1, 1]} : vector<8x25xf32> to vector<8x1xf32>
    %700 = vector.shape_cast %699 : vector<8x1xf32> to vector<8xf32>
    %701 = vector.shape_cast %700 : vector<8xf32> to vector<8x1xf32>
    %702 = vector.extract_strided_slice %121 {offsets = [0, 20, 0], sizes = [8, 1, 128], strides = [1, 1, 1]} : vector<8x25x128xf32> to vector<8x1x128xf32>
    %703 = vector.shape_cast %702 : vector<8x1x128xf32> to vector<8x128xf32>
    %704 = vector.broadcast %701 : vector<8x1xf32> to vector<8x128xf32>
    %705 = arith.mulf %704, %703 : vector<8x128xf32>
    %706 = arith.addf %698, %705 : vector<8x128xf32>
    %707 = vector.extract_strided_slice %539 {offsets = [0, 21], sizes = [8, 1], strides = [1, 1]} : vector<8x25xf32> to vector<8x1xf32>
    %708 = vector.shape_cast %707 : vector<8x1xf32> to vector<8xf32>
    %709 = vector.shape_cast %708 : vector<8xf32> to vector<8x1xf32>
    %710 = vector.extract_strided_slice %121 {offsets = [0, 21, 0], sizes = [8, 1, 128], strides = [1, 1, 1]} : vector<8x25x128xf32> to vector<8x1x128xf32>
    %711 = vector.shape_cast %710 : vector<8x1x128xf32> to vector<8x128xf32>
    %712 = vector.broadcast %709 : vector<8x1xf32> to vector<8x128xf32>
    %713 = arith.mulf %712, %711 : vector<8x128xf32>
    %714 = arith.addf %706, %713 : vector<8x128xf32>
    %715 = vector.extract_strided_slice %539 {offsets = [0, 22], sizes = [8, 1], strides = [1, 1]} : vector<8x25xf32> to vector<8x1xf32>
    %716 = vector.shape_cast %715 : vector<8x1xf32> to vector<8xf32>
    %717 = vector.shape_cast %716 : vector<8xf32> to vector<8x1xf32>
    %718 = vector.extract_strided_slice %121 {offsets = [0, 22, 0], sizes = [8, 1, 128], strides = [1, 1, 1]} : vector<8x25x128xf32> to vector<8x1x128xf32>
    %719 = vector.shape_cast %718 : vector<8x1x128xf32> to vector<8x128xf32>
    %720 = vector.broadcast %717 : vector<8x1xf32> to vector<8x128xf32>
    %721 = arith.mulf %720, %719 : vector<8x128xf32>
    %722 = arith.addf %714, %721 : vector<8x128xf32>
    %723 = vector.extract_strided_slice %539 {offsets = [0, 23], sizes = [8, 1], strides = [1, 1]} : vector<8x25xf32> to vector<8x1xf32>
    %724 = vector.shape_cast %723 : vector<8x1xf32> to vector<8xf32>
    %725 = vector.shape_cast %724 : vector<8xf32> to vector<8x1xf32>
    %726 = vector.extract_strided_slice %121 {offsets = [0, 23, 0], sizes = [8, 1, 128], strides = [1, 1, 1]} : vector<8x25x128xf32> to vector<8x1x128xf32>
    %727 = vector.shape_cast %726 : vector<8x1x128xf32> to vector<8x128xf32>
    %728 = vector.broadcast %725 : vector<8x1xf32> to vector<8x128xf32>
    %729 = arith.mulf %728, %727 : vector<8x128xf32>
    %730 = arith.addf %722, %729 : vector<8x128xf32>
    %731 = vector.extract_strided_slice %539 {offsets = [0, 24], sizes = [8, 1], strides = [1, 1]} : vector<8x25xf32> to vector<8x1xf32>
    %732 = vector.shape_cast %731 : vector<8x1xf32> to vector<8xf32>
    %733 = vector.shape_cast %732 : vector<8xf32> to vector<8x1xf32>
    %734 = vector.extract_strided_slice %121 {offsets = [0, 24, 0], sizes = [8, 1, 128], strides = [1, 1, 1]} : vector<8x25x128xf32> to vector<8x1x128xf32>
    %735 = vector.shape_cast %734 : vector<8x1x128xf32> to vector<8x128xf32>
    %736 = vector.broadcast %733 : vector<8x1xf32> to vector<8x128xf32>
    %737 = arith.mulf %736, %735 : vector<8x128xf32>
    %738 = arith.addf %730, %737 : vector<8x128xf32>
    %cst_57 = arith.constant dense<0.000000e+00> : vector<8x128xf32>
    %739 = tpu.matmul %538, %738, %cst_57 {dimension_numbers = #tpu.dot_dimension_numbers<[1], [0], [0], [1], [0, 0, 1, 1], [], []>} : vector<8x8xf32>, vector<8x128xf32>, vector<8x128xf32> -> vector<8x128xf32>
    %cst_58 = arith.constant dense<0.000000e+00> : vector<8xf32>
    %740 = vector.multi_reduction <add>, %739, %cst_58 [1] : vector<8x128xf32> to vector<8xf32>
    %741 = vector.shape_cast %740 : vector<8xf32> to vector<8x1xf32>
    %cst_59 = arith.constant 1.280000e+02 : f32
    %742 = vector.broadcast %cst_59 : f32 to vector<8x1xf32>
    %743 = arith.divf %741, %742 : vector<8x1xf32>
    %744 = vector.broadcast %743 : vector<8x1xf32> to vector<8x128xf32>
    %745 = arith.subf %739, %744 : vector<8x128xf32>
    %746 = arith.mulf %745, %745 : vector<8x128xf32>
    %cst_60 = arith.constant dense<0.000000e+00> : vector<8xf32>
    %747 = vector.multi_reduction <add>, %746, %cst_60 [1] : vector<8x128xf32> to vector<8xf32>
    %748 = vector.shape_cast %747 : vector<8xf32> to vector<8x1xf32>
    %cst_61 = arith.constant 1.280000e+02 : f32
    %749 = vector.broadcast %cst_61 : f32 to vector<8x1xf32>
    %750 = arith.divf %748, %749 : vector<8x1xf32>
    %751 = vector.broadcast %743 : vector<8x1xf32> to vector<8x128xf32>
    %752 = arith.subf %739, %751 : vector<8x128xf32>
    %cst_62 = arith.constant 9.99999974E-6 : f32
    %753 = vector.broadcast %cst_62 : f32 to vector<8x1xf32>
    %754 = arith.addf %750, %753 : vector<8x1xf32>
    %755 = math.rsqrt %754 : vector<8x1xf32>
    %756 = vector.broadcast %755 : vector<8x1xf32> to vector<8x128xf32>
    %757 = arith.mulf %752, %756 : vector<8x128xf32>
    %c0_63 = arith.constant 0 : index
    %c0_64 = arith.constant 0 : index
    %758 = vector.load %arg16[%c0_63, %c0_64] : memref<8x128xf32, #tpu.memory_space<vmem>>, vector<8x128xf32>
    tpu.vector_store %arg16[%c0_63, %c0_64], %757 {strides = array<i32>} : memref<8x128xf32, #tpu.memory_space<vmem>>, vector<8x128xf32>,
    %c3 = arith.constant 3 : index
    %759 = memref.load %arg0[%c3] : memref<8xf32, #tpu.memory_space<smem>>
    %c0_65 = arith.constant 0 : index
    %c0_66 = arith.constant 0 : index
    %760 = vector.load %arg5[%c0_65, %c0_66] : memref<8x128xf32, #tpu.memory_space<vmem>>, vector<8x128xf32>
    %761 = vector.broadcast %759 : f32 to vector<8x128xf32>
    %762 = arith.mulf %761, %760 : vector<8x128xf32>
    %763 = arith.addf %444, %762 : vector<8x128xf32>
    %c0_67 = arith.constant 0 : index
    %c0_68 = arith.constant 0 : index
    %764 = vector.load %arg14[%c0_67, %c0_68] : memref<8x128xf32, #tpu.memory_space<vmem>>, vector<8x128xf32>
    tpu.vector_store %arg14[%c0_67, %c0_68], %763 {strides = array<i32>} : memref<8x128xf32, #tpu.memory_space<vmem>>, vector<8x128xf32>,
    return
  }
}

module attributes {stable_mosaic.version = 11 : i64} {
  func.func @mixed_stage2_kernel(%arg0: memref<8xf32, #tpu.memory_space<smem>>, %arg1: memref<8x128xf32, #tpu.memory_space<vmem>>, %arg2: memref<8x128xf32, #tpu.memory_space<vmem>>, %arg3: memref<8x9x128xf32, #tpu.memory_space<vmem>>, %arg4: memref<8x25x128xf32, #tpu.memory_space<vmem>>, %arg5: memref<8x9xf32, #tpu.memory_space<vmem>>, %arg6: memref<8x8xf32, #tpu.memory_space<vmem>>, %arg7: memref<8x25xf32, #tpu.memory_space<vmem>>, %arg8: memref<8x8xf32, #tpu.memory_space<vmem>>, %arg9: memref<8x128xf32, #tpu.memory_space<vmem>>) attributes {dimension_semantics = [], scalar_prefetch = 0 : i64, scratch_operands = 0 : i64, tpu.core_type = #tpu.core_type<tc>} {
    %c0 = arith.constant 0 : index
    %c0_0 = arith.constant 0 : index
    %c0_1 = arith.constant 0 : index
    %0 = vector.load %arg3[%c0, %c0_0, %c0_1] : memref<8x9x128xf32, #tpu.memory_space<vmem>>, vector<8x9x128xf32>
    %cst = arith.constant 0.000000e+00 : f32
    %1 = vector.broadcast %cst : f32 to vector<8x9x128xf32>
    %2 = arith.maximumf %0, %1 : vector<8x9x128xf32>
    %c0_2 = arith.constant 0 : index
    %c0_3 = arith.constant 0 : index
    %c0_4 = arith.constant 0 : index
    %3 = vector.load %arg4[%c0_2, %c0_3, %c0_4] : memref<8x25x128xf32, #tpu.memory_space<vmem>>, vector<8x25x128xf32>
    %cst_5 = arith.constant 0.000000e+00 : f32
    %4 = vector.broadcast %cst_5 : f32 to vector<8x25x128xf32>
    %5 = arith.maximumf %3, %4 : vector<8x25x128xf32>
    %c0_6 = arith.constant 0 : index
    %c0_7 = arith.constant 0 : index
    %6 = vector.load %arg6[%c0_6, %c0_7] : memref<8x8xf32, #tpu.memory_space<vmem>>, vector<8x8xf32>
    %c0_8 = arith.constant 0 : index
    %c0_9 = arith.constant 0 : index
    %7 = vector.load %arg5[%c0_8, %c0_9] : memref<8x9xf32, #tpu.memory_space<vmem>>, vector<8x9xf32>
    %8 = vector.extract_strided_slice %7 {offsets = [0, 0], sizes = [8, 1], strides = [1, 1]} : vector<8x9xf32> to vector<8x1xf32>
    %9 = vector.shape_cast %8 : vector<8x1xf32> to vector<8xf32>
    %10 = vector.shape_cast %9 : vector<8xf32> to vector<8x1xf32>
    %11 = vector.extract_strided_slice %2 {offsets = [0, 0, 0], sizes = [8, 1, 128], strides = [1, 1, 1]} : vector<8x9x128xf32> to vector<8x1x128xf32>
    %12 = vector.shape_cast %11 : vector<8x1x128xf32> to vector<8x128xf32>
    %13 = vector.broadcast %10 : vector<8x1xf32> to vector<8x128xf32>
    %14 = arith.mulf %13, %12 : vector<8x128xf32>
    %15 = vector.extract_strided_slice %7 {offsets = [0, 1], sizes = [8, 1], strides = [1, 1]} : vector<8x9xf32> to vector<8x1xf32>
    %16 = vector.shape_cast %15 : vector<8x1xf32> to vector<8xf32>
    %17 = vector.shape_cast %16 : vector<8xf32> to vector<8x1xf32>
    %18 = vector.extract_strided_slice %2 {offsets = [0, 1, 0], sizes = [8, 1, 128], strides = [1, 1, 1]} : vector<8x9x128xf32> to vector<8x1x128xf32>
    %19 = vector.shape_cast %18 : vector<8x1x128xf32> to vector<8x128xf32>
    %20 = vector.broadcast %17 : vector<8x1xf32> to vector<8x128xf32>
    %21 = arith.mulf %20, %19 : vector<8x128xf32>
    %22 = arith.addf %14, %21 : vector<8x128xf32>
    %23 = vector.extract_strided_slice %7 {offsets = [0, 2], sizes = [8, 1], strides = [1, 1]} : vector<8x9xf32> to vector<8x1xf32>
    %24 = vector.shape_cast %23 : vector<8x1xf32> to vector<8xf32>
    %25 = vector.shape_cast %24 : vector<8xf32> to vector<8x1xf32>
    %26 = vector.extract_strided_slice %2 {offsets = [0, 2, 0], sizes = [8, 1, 128], strides = [1, 1, 1]} : vector<8x9x128xf32> to vector<8x1x128xf32>
    %27 = vector.shape_cast %26 : vector<8x1x128xf32> to vector<8x128xf32>
    %28 = vector.broadcast %25 : vector<8x1xf32> to vector<8x128xf32>
    %29 = arith.mulf %28, %27 : vector<8x128xf32>
    %30 = arith.addf %22, %29 : vector<8x128xf32>
    %31 = vector.extract_strided_slice %7 {offsets = [0, 3], sizes = [8, 1], strides = [1, 1]} : vector<8x9xf32> to vector<8x1xf32>
    %32 = vector.shape_cast %31 : vector<8x1xf32> to vector<8xf32>
    %33 = vector.shape_cast %32 : vector<8xf32> to vector<8x1xf32>
    %34 = vector.extract_strided_slice %2 {offsets = [0, 3, 0], sizes = [8, 1, 128], strides = [1, 1, 1]} : vector<8x9x128xf32> to vector<8x1x128xf32>
    %35 = vector.shape_cast %34 : vector<8x1x128xf32> to vector<8x128xf32>
    %36 = vector.broadcast %33 : vector<8x1xf32> to vector<8x128xf32>
    %37 = arith.mulf %36, %35 : vector<8x128xf32>
    %38 = arith.addf %30, %37 : vector<8x128xf32>
    %39 = vector.extract_strided_slice %7 {offsets = [0, 4], sizes = [8, 1], strides = [1, 1]} : vector<8x9xf32> to vector<8x1xf32>
    %40 = vector.shape_cast %39 : vector<8x1xf32> to vector<8xf32>
    %41 = vector.shape_cast %40 : vector<8xf32> to vector<8x1xf32>
    %42 = vector.extract_strided_slice %2 {offsets = [0, 4, 0], sizes = [8, 1, 128], strides = [1, 1, 1]} : vector<8x9x128xf32> to vector<8x1x128xf32>
    %43 = vector.shape_cast %42 : vector<8x1x128xf32> to vector<8x128xf32>
    %44 = vector.broadcast %41 : vector<8x1xf32> to vector<8x128xf32>
    %45 = arith.mulf %44, %43 : vector<8x128xf32>
    %46 = arith.addf %38, %45 : vector<8x128xf32>
    %47 = vector.extract_strided_slice %7 {offsets = [0, 5], sizes = [8, 1], strides = [1, 1]} : vector<8x9xf32> to vector<8x1xf32>
    %48 = vector.shape_cast %47 : vector<8x1xf32> to vector<8xf32>
    %49 = vector.shape_cast %48 : vector<8xf32> to vector<8x1xf32>
    %50 = vector.extract_strided_slice %2 {offsets = [0, 5, 0], sizes = [8, 1, 128], strides = [1, 1, 1]} : vector<8x9x128xf32> to vector<8x1x128xf32>
    %51 = vector.shape_cast %50 : vector<8x1x128xf32> to vector<8x128xf32>
    %52 = vector.broadcast %49 : vector<8x1xf32> to vector<8x128xf32>
    %53 = arith.mulf %52, %51 : vector<8x128xf32>
    %54 = arith.addf %46, %53 : vector<8x128xf32>
    %55 = vector.extract_strided_slice %7 {offsets = [0, 6], sizes = [8, 1], strides = [1, 1]} : vector<8x9xf32> to vector<8x1xf32>
    %56 = vector.shape_cast %55 : vector<8x1xf32> to vector<8xf32>
    %57 = vector.shape_cast %56 : vector<8xf32> to vector<8x1xf32>
    %58 = vector.extract_strided_slice %2 {offsets = [0, 6, 0], sizes = [8, 1, 128], strides = [1, 1, 1]} : vector<8x9x128xf32> to vector<8x1x128xf32>
    %59 = vector.shape_cast %58 : vector<8x1x128xf32> to vector<8x128xf32>
    %60 = vector.broadcast %57 : vector<8x1xf32> to vector<8x128xf32>
    %61 = arith.mulf %60, %59 : vector<8x128xf32>
    %62 = arith.addf %54, %61 : vector<8x128xf32>
    %63 = vector.extract_strided_slice %7 {offsets = [0, 7], sizes = [8, 1], strides = [1, 1]} : vector<8x9xf32> to vector<8x1xf32>
    %64 = vector.shape_cast %63 : vector<8x1xf32> to vector<8xf32>
    %65 = vector.shape_cast %64 : vector<8xf32> to vector<8x1xf32>
    %66 = vector.extract_strided_slice %2 {offsets = [0, 7, 0], sizes = [8, 1, 128], strides = [1, 1, 1]} : vector<8x9x128xf32> to vector<8x1x128xf32>
    %67 = vector.shape_cast %66 : vector<8x1x128xf32> to vector<8x128xf32>
    %68 = vector.broadcast %65 : vector<8x1xf32> to vector<8x128xf32>
    %69 = arith.mulf %68, %67 : vector<8x128xf32>
    %70 = arith.addf %62, %69 : vector<8x128xf32>
    %71 = vector.extract_strided_slice %7 {offsets = [0, 8], sizes = [8, 1], strides = [1, 1]} : vector<8x9xf32> to vector<8x1xf32>
    %72 = vector.shape_cast %71 : vector<8x1xf32> to vector<8xf32>
    %73 = vector.shape_cast %72 : vector<8xf32> to vector<8x1xf32>
    %74 = vector.extract_strided_slice %2 {offsets = [0, 8, 0], sizes = [8, 1, 128], strides = [1, 1, 1]} : vector<8x9x128xf32> to vector<8x1x128xf32>
    %75 = vector.shape_cast %74 : vector<8x1x128xf32> to vector<8x128xf32>
    %76 = vector.broadcast %73 : vector<8x1xf32> to vector<8x128xf32>
    %77 = arith.mulf %76, %75 : vector<8x128xf32>
    %78 = arith.addf %70, %77 : vector<8x128xf32>
    %cst_10 = arith.constant dense<0.000000e+00> : vector<8x128xf32>
    %79 = tpu.matmul %6, %78, %cst_10 {dimension_numbers = #tpu.dot_dimension_numbers<[1], [0], [0], [1], [0, 0, 1, 1], [], []>} : vector<8x8xf32>, vector<8x128xf32>, vector<8x128xf32> -> vector<8x128xf32>
    %cst_11 = arith.constant dense<0.000000e+00> : vector<8xf32>
    %80 = vector.multi_reduction <add>, %79, %cst_11 [1] : vector<8x128xf32> to vector<8xf32>
    %81 = vector.shape_cast %80 : vector<8xf32> to vector<8x1xf32>
    %cst_12 = arith.constant 1.280000e+02 : f32
    %82 = vector.broadcast %cst_12 : f32 to vector<8x1xf32>
    %83 = arith.divf %81, %82 : vector<8x1xf32>
    %84 = vector.broadcast %83 : vector<8x1xf32> to vector<8x128xf32>
    %85 = arith.subf %79, %84 : vector<8x128xf32>
    %86 = arith.mulf %85, %85 : vector<8x128xf32>
    %cst_13 = arith.constant dense<0.000000e+00> : vector<8xf32>
    %87 = vector.multi_reduction <add>, %86, %cst_13 [1] : vector<8x128xf32> to vector<8xf32>
    %88 = vector.shape_cast %87 : vector<8xf32> to vector<8x1xf32>
    %cst_14 = arith.constant 1.280000e+02 : f32
    %89 = vector.broadcast %cst_14 : f32 to vector<8x1xf32>
    %90 = arith.divf %88, %89 : vector<8x1xf32>
    %91 = vector.broadcast %83 : vector<8x1xf32> to vector<8x128xf32>
    %92 = arith.subf %79, %91 : vector<8x128xf32>
    %cst_15 = arith.constant 9.99999974E-6 : f32
    %93 = vector.broadcast %cst_15 : f32 to vector<8x1xf32>
    %94 = arith.addf %90, %93 : vector<8x1xf32>
    %95 = math.rsqrt %94 : vector<8x1xf32>
    %96 = vector.broadcast %95 : vector<8x1xf32> to vector<8x128xf32>
    %97 = arith.mulf %92, %96 : vector<8x128xf32>
    %c0_16 = arith.constant 0 : index
    %c0_17 = arith.constant 0 : index
    %98 = vector.load %arg8[%c0_16, %c0_17] : memref<8x8xf32, #tpu.memory_space<vmem>>, vector<8x8xf32>
    %c0_18 = arith.constant 0 : index
    %c0_19 = arith.constant 0 : index
    %99 = vector.load %arg7[%c0_18, %c0_19] : memref<8x25xf32, #tpu.memory_space<vmem>>, vector<8x25xf32>
    %100 = vector.extract_strided_slice %99 {offsets = [0, 0], sizes = [8, 1], strides = [1, 1]} : vector<8x25xf32> to vector<8x1xf32>
    %101 = vector.shape_cast %100 : vector<8x1xf32> to vector<8xf32>
    %102 = vector.shape_cast %101 : vector<8xf32> to vector<8x1xf32>
    %103 = vector.extract_strided_slice %5 {offsets = [0, 0, 0], sizes = [8, 1, 128], strides = [1, 1, 1]} : vector<8x25x128xf32> to vector<8x1x128xf32>
    %104 = vector.shape_cast %103 : vector<8x1x128xf32> to vector<8x128xf32>
    %105 = vector.broadcast %102 : vector<8x1xf32> to vector<8x128xf32>
    %106 = arith.mulf %105, %104 : vector<8x128xf32>
    %107 = vector.extract_strided_slice %99 {offsets = [0, 1], sizes = [8, 1], strides = [1, 1]} : vector<8x25xf32> to vector<8x1xf32>
    %108 = vector.shape_cast %107 : vector<8x1xf32> to vector<8xf32>
    %109 = vector.shape_cast %108 : vector<8xf32> to vector<8x1xf32>
    %110 = vector.extract_strided_slice %5 {offsets = [0, 1, 0], sizes = [8, 1, 128], strides = [1, 1, 1]} : vector<8x25x128xf32> to vector<8x1x128xf32>
    %111 = vector.shape_cast %110 : vector<8x1x128xf32> to vector<8x128xf32>
    %112 = vector.broadcast %109 : vector<8x1xf32> to vector<8x128xf32>
    %113 = arith.mulf %112, %111 : vector<8x128xf32>
    %114 = arith.addf %106, %113 : vector<8x128xf32>
    %115 = vector.extract_strided_slice %99 {offsets = [0, 2], sizes = [8, 1], strides = [1, 1]} : vector<8x25xf32> to vector<8x1xf32>
    %116 = vector.shape_cast %115 : vector<8x1xf32> to vector<8xf32>
    %117 = vector.shape_cast %116 : vector<8xf32> to vector<8x1xf32>
    %118 = vector.extract_strided_slice %5 {offsets = [0, 2, 0], sizes = [8, 1, 128], strides = [1, 1, 1]} : vector<8x25x128xf32> to vector<8x1x128xf32>
    %119 = vector.shape_cast %118 : vector<8x1x128xf32> to vector<8x128xf32>
    %120 = vector.broadcast %117 : vector<8x1xf32> to vector<8x128xf32>
    %121 = arith.mulf %120, %119 : vector<8x128xf32>
    %122 = arith.addf %114, %121 : vector<8x128xf32>
    %123 = vector.extract_strided_slice %99 {offsets = [0, 3], sizes = [8, 1], strides = [1, 1]} : vector<8x25xf32> to vector<8x1xf32>
    %124 = vector.shape_cast %123 : vector<8x1xf32> to vector<8xf32>
    %125 = vector.shape_cast %124 : vector<8xf32> to vector<8x1xf32>
    %126 = vector.extract_strided_slice %5 {offsets = [0, 3, 0], sizes = [8, 1, 128], strides = [1, 1, 1]} : vector<8x25x128xf32> to vector<8x1x128xf32>
    %127 = vector.shape_cast %126 : vector<8x1x128xf32> to vector<8x128xf32>
    %128 = vector.broadcast %125 : vector<8x1xf32> to vector<8x128xf32>
    %129 = arith.mulf %128, %127 : vector<8x128xf32>
    %130 = arith.addf %122, %129 : vector<8x128xf32>
    %131 = vector.extract_strided_slice %99 {offsets = [0, 4], sizes = [8, 1], strides = [1, 1]} : vector<8x25xf32> to vector<8x1xf32>
    %132 = vector.shape_cast %131 : vector<8x1xf32> to vector<8xf32>
    %133 = vector.shape_cast %132 : vector<8xf32> to vector<8x1xf32>
    %134 = vector.extract_strided_slice %5 {offsets = [0, 4, 0], sizes = [8, 1, 128], strides = [1, 1, 1]} : vector<8x25x128xf32> to vector<8x1x128xf32>
    %135 = vector.shape_cast %134 : vector<8x1x128xf32> to vector<8x128xf32>
    %136 = vector.broadcast %133 : vector<8x1xf32> to vector<8x128xf32>
    %137 = arith.mulf %136, %135 : vector<8x128xf32>
    %138 = arith.addf %130, %137 : vector<8x128xf32>
    %139 = vector.extract_strided_slice %99 {offsets = [0, 5], sizes = [8, 1], strides = [1, 1]} : vector<8x25xf32> to vector<8x1xf32>
    %140 = vector.shape_cast %139 : vector<8x1xf32> to vector<8xf32>
    %141 = vector.shape_cast %140 : vector<8xf32> to vector<8x1xf32>
    %142 = vector.extract_strided_slice %5 {offsets = [0, 5, 0], sizes = [8, 1, 128], strides = [1, 1, 1]} : vector<8x25x128xf32> to vector<8x1x128xf32>
    %143 = vector.shape_cast %142 : vector<8x1x128xf32> to vector<8x128xf32>
    %144 = vector.broadcast %141 : vector<8x1xf32> to vector<8x128xf32>
    %145 = arith.mulf %144, %143 : vector<8x128xf32>
    %146 = arith.addf %138, %145 : vector<8x128xf32>
    %147 = vector.extract_strided_slice %99 {offsets = [0, 6], sizes = [8, 1], strides = [1, 1]} : vector<8x25xf32> to vector<8x1xf32>
    %148 = vector.shape_cast %147 : vector<8x1xf32> to vector<8xf32>
    %149 = vector.shape_cast %148 : vector<8xf32> to vector<8x1xf32>
    %150 = vector.extract_strided_slice %5 {offsets = [0, 6, 0], sizes = [8, 1, 128], strides = [1, 1, 1]} : vector<8x25x128xf32> to vector<8x1x128xf32>
    %151 = vector.shape_cast %150 : vector<8x1x128xf32> to vector<8x128xf32>
    %152 = vector.broadcast %149 : vector<8x1xf32> to vector<8x128xf32>
    %153 = arith.mulf %152, %151 : vector<8x128xf32>
    %154 = arith.addf %146, %153 : vector<8x128xf32>
    %155 = vector.extract_strided_slice %99 {offsets = [0, 7], sizes = [8, 1], strides = [1, 1]} : vector<8x25xf32> to vector<8x1xf32>
    %156 = vector.shape_cast %155 : vector<8x1xf32> to vector<8xf32>
    %157 = vector.shape_cast %156 : vector<8xf32> to vector<8x1xf32>
    %158 = vector.extract_strided_slice %5 {offsets = [0, 7, 0], sizes = [8, 1, 128], strides = [1, 1, 1]} : vector<8x25x128xf32> to vector<8x1x128xf32>
    %159 = vector.shape_cast %158 : vector<8x1x128xf32> to vector<8x128xf32>
    %160 = vector.broadcast %157 : vector<8x1xf32> to vector<8x128xf32>
    %161 = arith.mulf %160, %159 : vector<8x128xf32>
    %162 = arith.addf %154, %161 : vector<8x128xf32>
    %163 = vector.extract_strided_slice %99 {offsets = [0, 8], sizes = [8, 1], strides = [1, 1]} : vector<8x25xf32> to vector<8x1xf32>
    %164 = vector.shape_cast %163 : vector<8x1xf32> to vector<8xf32>
    %165 = vector.shape_cast %164 : vector<8xf32> to vector<8x1xf32>
    %166 = vector.extract_strided_slice %5 {offsets = [0, 8, 0], sizes = [8, 1, 128], strides = [1, 1, 1]} : vector<8x25x128xf32> to vector<8x1x128xf32>
    %167 = vector.shape_cast %166 : vector<8x1x128xf32> to vector<8x128xf32>
    %168 = vector.broadcast %165 : vector<8x1xf32> to vector<8x128xf32>
    %169 = arith.mulf %168, %167 : vector<8x128xf32>
    %170 = arith.addf %162, %169 : vector<8x128xf32>
    %171 = vector.extract_strided_slice %99 {offsets = [0, 9], sizes = [8, 1], strides = [1, 1]} : vector<8x25xf32> to vector<8x1xf32>
    %172 = vector.shape_cast %171 : vector<8x1xf32> to vector<8xf32>
    %173 = vector.shape_cast %172 : vector<8xf32> to vector<8x1xf32>
    %174 = vector.extract_strided_slice %5 {offsets = [0, 9, 0], sizes = [8, 1, 128], strides = [1, 1, 1]} : vector<8x25x128xf32> to vector<8x1x128xf32>
    %175 = vector.shape_cast %174 : vector<8x1x128xf32> to vector<8x128xf32>
    %176 = vector.broadcast %173 : vector<8x1xf32> to vector<8x128xf32>
    %177 = arith.mulf %176, %175 : vector<8x128xf32>
    %178 = arith.addf %170, %177 : vector<8x128xf32>
    %179 = vector.extract_strided_slice %99 {offsets = [0, 10], sizes = [8, 1], strides = [1, 1]} : vector<8x25xf32> to vector<8x1xf32>
    %180 = vector.shape_cast %179 : vector<8x1xf32> to vector<8xf32>
    %181 = vector.shape_cast %180 : vector<8xf32> to vector<8x1xf32>
    %182 = vector.extract_strided_slice %5 {offsets = [0, 10, 0], sizes = [8, 1, 128], strides = [1, 1, 1]} : vector<8x25x128xf32> to vector<8x1x128xf32>
    %183 = vector.shape_cast %182 : vector<8x1x128xf32> to vector<8x128xf32>
    %184 = vector.broadcast %181 : vector<8x1xf32> to vector<8x128xf32>
    %185 = arith.mulf %184, %183 : vector<8x128xf32>
    %186 = arith.addf %178, %185 : vector<8x128xf32>
    %187 = vector.extract_strided_slice %99 {offsets = [0, 11], sizes = [8, 1], strides = [1, 1]} : vector<8x25xf32> to vector<8x1xf32>
    %188 = vector.shape_cast %187 : vector<8x1xf32> to vector<8xf32>
    %189 = vector.shape_cast %188 : vector<8xf32> to vector<8x1xf32>
    %190 = vector.extract_strided_slice %5 {offsets = [0, 11, 0], sizes = [8, 1, 128], strides = [1, 1, 1]} : vector<8x25x128xf32> to vector<8x1x128xf32>
    %191 = vector.shape_cast %190 : vector<8x1x128xf32> to vector<8x128xf32>
    %192 = vector.broadcast %189 : vector<8x1xf32> to vector<8x128xf32>
    %193 = arith.mulf %192, %191 : vector<8x128xf32>
    %194 = arith.addf %186, %193 : vector<8x128xf32>
    %195 = vector.extract_strided_slice %99 {offsets = [0, 12], sizes = [8, 1], strides = [1, 1]} : vector<8x25xf32> to vector<8x1xf32>
    %196 = vector.shape_cast %195 : vector<8x1xf32> to vector<8xf32>
    %197 = vector.shape_cast %196 : vector<8xf32> to vector<8x1xf32>
    %198 = vector.extract_strided_slice %5 {offsets = [0, 12, 0], sizes = [8, 1, 128], strides = [1, 1, 1]} : vector<8x25x128xf32> to vector<8x1x128xf32>
    %199 = vector.shape_cast %198 : vector<8x1x128xf32> to vector<8x128xf32>
    %200 = vector.broadcast %197 : vector<8x1xf32> to vector<8x128xf32>
    %201 = arith.mulf %200, %199 : vector<8x128xf32>
    %202 = arith.addf %194, %201 : vector<8x128xf32>
    %203 = vector.extract_strided_slice %99 {offsets = [0, 13], sizes = [8, 1], strides = [1, 1]} : vector<8x25xf32> to vector<8x1xf32>
    %204 = vector.shape_cast %203 : vector<8x1xf32> to vector<8xf32>
    %205 = vector.shape_cast %204 : vector<8xf32> to vector<8x1xf32>
    %206 = vector.extract_strided_slice %5 {offsets = [0, 13, 0], sizes = [8, 1, 128], strides = [1, 1, 1]} : vector<8x25x128xf32> to vector<8x1x128xf32>
    %207 = vector.shape_cast %206 : vector<8x1x128xf32> to vector<8x128xf32>
    %208 = vector.broadcast %205 : vector<8x1xf32> to vector<8x128xf32>
    %209 = arith.mulf %208, %207 : vector<8x128xf32>
    %210 = arith.addf %202, %209 : vector<8x128xf32>
    %211 = vector.extract_strided_slice %99 {offsets = [0, 14], sizes = [8, 1], strides = [1, 1]} : vector<8x25xf32> to vector<8x1xf32>
    %212 = vector.shape_cast %211 : vector<8x1xf32> to vector<8xf32>
    %213 = vector.shape_cast %212 : vector<8xf32> to vector<8x1xf32>
    %214 = vector.extract_strided_slice %5 {offsets = [0, 14, 0], sizes = [8, 1, 128], strides = [1, 1, 1]} : vector<8x25x128xf32> to vector<8x1x128xf32>
    %215 = vector.shape_cast %214 : vector<8x1x128xf32> to vector<8x128xf32>
    %216 = vector.broadcast %213 : vector<8x1xf32> to vector<8x128xf32>
    %217 = arith.mulf %216, %215 : vector<8x128xf32>
    %218 = arith.addf %210, %217 : vector<8x128xf32>
    %219 = vector.extract_strided_slice %99 {offsets = [0, 15], sizes = [8, 1], strides = [1, 1]} : vector<8x25xf32> to vector<8x1xf32>
    %220 = vector.shape_cast %219 : vector<8x1xf32> to vector<8xf32>
    %221 = vector.shape_cast %220 : vector<8xf32> to vector<8x1xf32>
    %222 = vector.extract_strided_slice %5 {offsets = [0, 15, 0], sizes = [8, 1, 128], strides = [1, 1, 1]} : vector<8x25x128xf32> to vector<8x1x128xf32>
    %223 = vector.shape_cast %222 : vector<8x1x128xf32> to vector<8x128xf32>
    %224 = vector.broadcast %221 : vector<8x1xf32> to vector<8x128xf32>
    %225 = arith.mulf %224, %223 : vector<8x128xf32>
    %226 = arith.addf %218, %225 : vector<8x128xf32>
    %227 = vector.extract_strided_slice %99 {offsets = [0, 16], sizes = [8, 1], strides = [1, 1]} : vector<8x25xf32> to vector<8x1xf32>
    %228 = vector.shape_cast %227 : vector<8x1xf32> to vector<8xf32>
    %229 = vector.shape_cast %228 : vector<8xf32> to vector<8x1xf32>
    %230 = vector.extract_strided_slice %5 {offsets = [0, 16, 0], sizes = [8, 1, 128], strides = [1, 1, 1]} : vector<8x25x128xf32> to vector<8x1x128xf32>
    %231 = vector.shape_cast %230 : vector<8x1x128xf32> to vector<8x128xf32>
    %232 = vector.broadcast %229 : vector<8x1xf32> to vector<8x128xf32>
    %233 = arith.mulf %232, %231 : vector<8x128xf32>
    %234 = arith.addf %226, %233 : vector<8x128xf32>
    %235 = vector.extract_strided_slice %99 {offsets = [0, 17], sizes = [8, 1], strides = [1, 1]} : vector<8x25xf32> to vector<8x1xf32>
    %236 = vector.shape_cast %235 : vector<8x1xf32> to vector<8xf32>
    %237 = vector.shape_cast %236 : vector<8xf32> to vector<8x1xf32>
    %238 = vector.extract_strided_slice %5 {offsets = [0, 17, 0], sizes = [8, 1, 128], strides = [1, 1, 1]} : vector<8x25x128xf32> to vector<8x1x128xf32>
    %239 = vector.shape_cast %238 : vector<8x1x128xf32> to vector<8x128xf32>
    %240 = vector.broadcast %237 : vector<8x1xf32> to vector<8x128xf32>
    %241 = arith.mulf %240, %239 : vector<8x128xf32>
    %242 = arith.addf %234, %241 : vector<8x128xf32>
    %243 = vector.extract_strided_slice %99 {offsets = [0, 18], sizes = [8, 1], strides = [1, 1]} : vector<8x25xf32> to vector<8x1xf32>
    %244 = vector.shape_cast %243 : vector<8x1xf32> to vector<8xf32>
    %245 = vector.shape_cast %244 : vector<8xf32> to vector<8x1xf32>
    %246 = vector.extract_strided_slice %5 {offsets = [0, 18, 0], sizes = [8, 1, 128], strides = [1, 1, 1]} : vector<8x25x128xf32> to vector<8x1x128xf32>
    %247 = vector.shape_cast %246 : vector<8x1x128xf32> to vector<8x128xf32>
    %248 = vector.broadcast %245 : vector<8x1xf32> to vector<8x128xf32>
    %249 = arith.mulf %248, %247 : vector<8x128xf32>
    %250 = arith.addf %242, %249 : vector<8x128xf32>
    %251 = vector.extract_strided_slice %99 {offsets = [0, 19], sizes = [8, 1], strides = [1, 1]} : vector<8x25xf32> to vector<8x1xf32>
    %252 = vector.shape_cast %251 : vector<8x1xf32> to vector<8xf32>
    %253 = vector.shape_cast %252 : vector<8xf32> to vector<8x1xf32>
    %254 = vector.extract_strided_slice %5 {offsets = [0, 19, 0], sizes = [8, 1, 128], strides = [1, 1, 1]} : vector<8x25x128xf32> to vector<8x1x128xf32>
    %255 = vector.shape_cast %254 : vector<8x1x128xf32> to vector<8x128xf32>
    %256 = vector.broadcast %253 : vector<8x1xf32> to vector<8x128xf32>
    %257 = arith.mulf %256, %255 : vector<8x128xf32>
    %258 = arith.addf %250, %257 : vector<8x128xf32>
    %259 = vector.extract_strided_slice %99 {offsets = [0, 20], sizes = [8, 1], strides = [1, 1]} : vector<8x25xf32> to vector<8x1xf32>
    %260 = vector.shape_cast %259 : vector<8x1xf32> to vector<8xf32>
    %261 = vector.shape_cast %260 : vector<8xf32> to vector<8x1xf32>
    %262 = vector.extract_strided_slice %5 {offsets = [0, 20, 0], sizes = [8, 1, 128], strides = [1, 1, 1]} : vector<8x25x128xf32> to vector<8x1x128xf32>
    %263 = vector.shape_cast %262 : vector<8x1x128xf32> to vector<8x128xf32>
    %264 = vector.broadcast %261 : vector<8x1xf32> to vector<8x128xf32>
    %265 = arith.mulf %264, %263 : vector<8x128xf32>
    %266 = arith.addf %258, %265 : vector<8x128xf32>
    %267 = vector.extract_strided_slice %99 {offsets = [0, 21], sizes = [8, 1], strides = [1, 1]} : vector<8x25xf32> to vector<8x1xf32>
    %268 = vector.shape_cast %267 : vector<8x1xf32> to vector<8xf32>
    %269 = vector.shape_cast %268 : vector<8xf32> to vector<8x1xf32>
    %270 = vector.extract_strided_slice %5 {offsets = [0, 21, 0], sizes = [8, 1, 128], strides = [1, 1, 1]} : vector<8x25x128xf32> to vector<8x1x128xf32>
    %271 = vector.shape_cast %270 : vector<8x1x128xf32> to vector<8x128xf32>
    %272 = vector.broadcast %269 : vector<8x1xf32> to vector<8x128xf32>
    %273 = arith.mulf %272, %271 : vector<8x128xf32>
    %274 = arith.addf %266, %273 : vector<8x128xf32>
    %275 = vector.extract_strided_slice %99 {offsets = [0, 22], sizes = [8, 1], strides = [1, 1]} : vector<8x25xf32> to vector<8x1xf32>
    %276 = vector.shape_cast %275 : vector<8x1xf32> to vector<8xf32>
    %277 = vector.shape_cast %276 : vector<8xf32> to vector<8x1xf32>
    %278 = vector.extract_strided_slice %5 {offsets = [0, 22, 0], sizes = [8, 1, 128], strides = [1, 1, 1]} : vector<8x25x128xf32> to vector<8x1x128xf32>
    %279 = vector.shape_cast %278 : vector<8x1x128xf32> to vector<8x128xf32>
    %280 = vector.broadcast %277 : vector<8x1xf32> to vector<8x128xf32>
    %281 = arith.mulf %280, %279 : vector<8x128xf32>
    %282 = arith.addf %274, %281 : vector<8x128xf32>
    %283 = vector.extract_strided_slice %99 {offsets = [0, 23], sizes = [8, 1], strides = [1, 1]} : vector<8x25xf32> to vector<8x1xf32>
    %284 = vector.shape_cast %283 : vector<8x1xf32> to vector<8xf32>
    %285 = vector.shape_cast %284 : vector<8xf32> to vector<8x1xf32>
    %286 = vector.extract_strided_slice %5 {offsets = [0, 23, 0], sizes = [8, 1, 128], strides = [1, 1, 1]} : vector<8x25x128xf32> to vector<8x1x128xf32>
    %287 = vector.shape_cast %286 : vector<8x1x128xf32> to vector<8x128xf32>
    %288 = vector.broadcast %285 : vector<8x1xf32> to vector<8x128xf32>
    %289 = arith.mulf %288, %287 : vector<8x128xf32>
    %290 = arith.addf %282, %289 : vector<8x128xf32>
    %291 = vector.extract_strided_slice %99 {offsets = [0, 24], sizes = [8, 1], strides = [1, 1]} : vector<8x25xf32> to vector<8x1xf32>
    %292 = vector.shape_cast %291 : vector<8x1xf32> to vector<8xf32>
    %293 = vector.shape_cast %292 : vector<8xf32> to vector<8x1xf32>
    %294 = vector.extract_strided_slice %5 {offsets = [0, 24, 0], sizes = [8, 1, 128], strides = [1, 1, 1]} : vector<8x25x128xf32> to vector<8x1x128xf32>
    %295 = vector.shape_cast %294 : vector<8x1x128xf32> to vector<8x128xf32>
    %296 = vector.broadcast %293 : vector<8x1xf32> to vector<8x128xf32>
    %297 = arith.mulf %296, %295 : vector<8x128xf32>
    %298 = arith.addf %290, %297 : vector<8x128xf32>
    %cst_20 = arith.constant dense<0.000000e+00> : vector<8x128xf32>
    %299 = tpu.matmul %98, %298, %cst_20 {dimension_numbers = #tpu.dot_dimension_numbers<[1], [0], [0], [1], [0, 0, 1, 1], [], []>} : vector<8x8xf32>, vector<8x128xf32>, vector<8x128xf32> -> vector<8x128xf32>
    %cst_21 = arith.constant dense<0.000000e+00> : vector<8xf32>
    %300 = vector.multi_reduction <add>, %299, %cst_21 [1] : vector<8x128xf32> to vector<8xf32>
    %301 = vector.shape_cast %300 : vector<8xf32> to vector<8x1xf32>
    %cst_22 = arith.constant 1.280000e+02 : f32
    %302 = vector.broadcast %cst_22 : f32 to vector<8x1xf32>
    %303 = arith.divf %301, %302 : vector<8x1xf32>
    %304 = vector.broadcast %303 : vector<8x1xf32> to vector<8x128xf32>
    %305 = arith.subf %299, %304 : vector<8x128xf32>
    %306 = arith.mulf %305, %305 : vector<8x128xf32>
    %cst_23 = arith.constant dense<0.000000e+00> : vector<8xf32>
    %307 = vector.multi_reduction <add>, %306, %cst_23 [1] : vector<8x128xf32> to vector<8xf32>
    %308 = vector.shape_cast %307 : vector<8xf32> to vector<8x1xf32>
    %cst_24 = arith.constant 1.280000e+02 : f32
    %309 = vector.broadcast %cst_24 : f32 to vector<8x1xf32>
    %310 = arith.divf %308, %309 : vector<8x1xf32>
    %311 = vector.broadcast %303 : vector<8x1xf32> to vector<8x128xf32>
    %312 = arith.subf %299, %311 : vector<8x128xf32>
    %cst_25 = arith.constant 9.99999974E-6 : f32
    %313 = vector.broadcast %cst_25 : f32 to vector<8x1xf32>
    %314 = arith.addf %310, %313 : vector<8x1xf32>
    %315 = math.rsqrt %314 : vector<8x1xf32>
    %316 = vector.broadcast %315 : vector<8x1xf32> to vector<8x128xf32>
    %317 = arith.mulf %312, %316 : vector<8x128xf32>
    %c0_26 = arith.constant 0 : index
    %c0_27 = arith.constant 0 : index
    %318 = vector.load %arg1[%c0_26, %c0_27] : memref<8x128xf32, #tpu.memory_space<vmem>>, vector<8x128xf32>
    %c0_28 = arith.constant 0 : index
    %c0_29 = arith.constant 0 : index
    %319 = vector.load %arg2[%c0_28, %c0_29] : memref<8x128xf32, #tpu.memory_space<vmem>>, vector<8x128xf32>
    %320 = arith.addf %318, %319 : vector<8x128xf32>
    %c4 = arith.constant 4 : index
    %321 = memref.load %arg0[%c4] : memref<8xf32, #tpu.memory_space<smem>>
    %322 = vector.broadcast %321 : f32 to vector<8x128xf32>
    %323 = arith.mulf %322, %97 : vector<8x128xf32>
    %324 = arith.addf %320, %323 : vector<8x128xf32>
    %c5 = arith.constant 5 : index
    %325 = memref.load %arg0[%c5] : memref<8xf32, #tpu.memory_space<smem>>
    %326 = vector.broadcast %325 : f32 to vector<8x128xf32>
    %327 = arith.mulf %326, %317 : vector<8x128xf32>
    %328 = arith.addf %324, %327 : vector<8x128xf32>
    %c0_30 = arith.constant 0 : index
    %c0_31 = arith.constant 0 : index
    %329 = vector.load %arg9[%c0_30, %c0_31] : memref<8x128xf32, #tpu.memory_space<vmem>>, vector<8x128xf32>
    tpu.vector_store %arg9[%c0_30, %c0_31], %328 {strides = array<i32>} : memref<8x128xf32, #tpu.memory_space<vmem>>, vector<8x128xf32>,
    return
  }
}

</mosaic_0001>

<llo_original>
// kernel: cell_forward.12
$region0: #{cell_forward.12}
  #allocation0 [shape = 'u32[]', space=smem, size = 0x4, offset = 0x4, fixed_abs, tag = 'smem constant byte address 0x4 - core index']
  #allocation1 [shape = 'u32[144,128]{1,0:T(1,128)}', space=vmem, size = 0x12000, scoped, tag = 'internal scratch']
  %s0 = inlined_call_operand.vmem [shape: f32[16,128], index: 0, kind: input, shape index: {}]
  %s1 = inlined_call_operand.vmem [shape: f32[8,16], index: 1, kind: input, shape index: {}]
  %s2 = inlined_call_operand.vmem [shape: f32[8,128], index: 2, kind: output, shape index: {}]
  %s3 = sld [smem:[#allocation0]]
  $region18: #{cell_forward.12} parent=0
    _
  %s5 = ssub.s32 1, %s3
  %s6 = scalar_select 0, %s5, %s3
  // Predicated region
  $region2: #{cell_forward.12} parent=0 // pred_check
    _
  $region3: #{cell_forward.12} parent=0 // pred_check_branch
    %8 = sbr.rel (0) target = $region5
  $region4: #{cell_forward.12} parent=0 // pred_region
    _
  $region5: #{cell_forward.12} parent=0 // pred_fallthru
    _
  // Predicated region
  $region6: #{cell_forward.12} parent=0 // pred_check
    _
  $region7: #{cell_forward.12} parent=0 // pred_check_branch
    %10 = sbr.rel (0) target = $region9
  $region8: #{cell_forward.12} parent=0 // pred_region
    _
  $region9: #{cell_forward.12} parent=0 // pred_fallthru
    _
  %v11 = vld [vmem:[%s1] sm:$0xff]
  %v12 = vld [vmem:[%s0] sm:$0xff]
  %v13 = vld [vmem:[%s0 + $0x8] sm:$0xff]
  %v14 = vmax.f32 %v12, 0.0
  %v15 = vmax.f32 %v13, 0.0
  %vm16 = vcmask 130048
  %v18 = vsel %vm16, %v11, 0
  %20 = vmatprep.subr.mxu0 0.0
  %21 = vmatpush1.msra.mxu0 %v14
  %22 = vmatprep.subr.mxu0 0.0
  %23 = vmatpush1.msra.mxu0 %v15
  %24 = vmatprep.subr.mxu0 0.0
  %25 = vmatpush1.msra.mxu0 0.0
  %26 = vmatprep.subr.mxu0 0.0
  %27 = vmatpush1.msra.mxu0 0.0
  %28 = vmatprep.subr.mxu0 0.0
  %29 = vmatpush1.msra.mxu0 0.0
  %30 = vmatprep.subr.mxu0 0.0
  %31 = vmatpush1.msra.mxu0 0.0
  %32 = vmatprep.subr.mxu0 0.0
  %33 = vmatpush1.msra.mxu0 0.0
  %34 = vmatprep.subr.mxu0 0.0
  %35 = vmatpush1.msra.mxu0 0.0
  %36 = vmatprep.subr.mxu0 0.0
  %37 = vmatpush1.msra.mxu0 0.0
  %38 = vmatprep.subr.mxu0 0.0
  %39 = vmatpush1.msra.mxu0 0.0
  %40 = vmatprep.subr.mxu0 0.0
  %41 = vmatpush1.msra.mxu0 0.0
  %42 = vmatprep.subr.mxu0 0.0
  %43 = vmatpush1.msra.mxu0 0.0
  %44 = vmatprep.subr.mxu0 0.0
  %45 = vmatpush1.msra.mxu0 0.0
  %46 = vmatprep.subr.mxu0 0.0
  %47 = vmatpush1.msra.mxu0 0.0
  %48 = vmatprep.subr.mxu0 0.0
  %49 = vmatpush1.msra.mxu0 0.0
  %50 = vmatprep.subr.mxu0 0.0
  %51 = vmatpush1.msra.mxu0 0.0
  %52 = vmatprep.subr.mxu0 0.0
  %53 = vmatpush1.msra.mxu0 0.0
  %54 = vmatprep.subr.mxu0 0.0
  %55 = vmatpush1.msra.mxu0 0.0
  %56 = vmatprep.subr.mxu0 0.0
  %57 = vmatpush1.msra.mxu0 0.0
  %58 = vmatprep.subr.mxu0 0.0
  %59 = vmatpush1.msra.mxu0 0.0
  %60 = vmatprep.subr.mxu0 0.0
  %61 = vmatpush1.msra.mxu0 0.0
  %62 = vmatprep.subr.mxu0 0.0
  %63 = vmatpush1.msra.mxu0 0.0
  %64 = vmatprep.subr.mxu0 0.0
  %65 = vmatpush1.msra.mxu0 0.0
  %66 = vmatprep.subr.mxu0 0.0
  %67 = vmatpush1.msra.mxu0 0.0
  %68 = vmatprep.subr.mxu0 0.0
  %69 = vmatpush1.msra.mxu0 0.0
  %70 = vmatprep.subr.mxu0 0.0
  %71 = vmatpush1.msra.mxu0 0.0
  %72 = vmatprep.subr.mxu0 0.0
  %73 = vmatpush1.msra.mxu0 0.0
  %74 = vmatprep.subr.mxu0 0.0
  %75 = vmatpush1.msra.mxu0 0.0
  %76 = vmatprep.subr.mxu0 0.0
  %77 = vmatpush1.msra.mxu0 0.0
  %78 = vmatprep.subr.mxu0 0.0
  %79 = vmatpush1.msra.mxu0 0.0
  %80 = vmatprep.subr.mxu0 0.0
  %81 = vmatpush1.msra.mxu0 0.0
  %82 = vmatprep.subr.mxu0 0.0
  %83 = vmatpush1.msra.mxu0 0.0
  %84 = vmatprep.mubr.f32.mxu0 0.0
  %85 = vmatmul.mubr.f32.gmra.mrb[0].mxu0 %v18
  %v86 = vpop.f32.mrb[0].mxu0
  %v87 = vadd.f32 0.0, %v86
  %v88 = vpop.f32.mrb[0].mxu0
  %89 = vdwg.mxu0
  %90 = vadd.xlane.f32.xlu0 %v87
  %v91 = vpop.xlane.xlu0 %90
  %v92 = vrcp.pop 128.0
  %v93 = vmul.f32 %v91, %v92
  %v94 = vsub.f32 %v87, %v93
  %v95 = vmul.f32 %v94, %v94
  %96 = vadd.xlane.f32.xlu0 %v95
  %v97 = vpop.xlane.xlu0 %96
  %v98 = vmul.f32 %v97, %v92
  %v99 = vadd.f32 %v98, 1e-05
  %v100 = vrsqrt.pop %v99
  %v101 = vmul.f32 %v94, %v100
  %102 = vst [vmem:[%s2] sm:$0xff] %v101
  // Predicated region
  $region10: #{cell_forward.12} parent=0 // pred_check
    _
  $region11: #{cell_forward.12} parent=0 // pred_check_branch
    %104 = sbr.rel (0) target = $region13
  $region12: #{cell_forward.12} parent=0 // pred_region
    _
  $region13: #{cell_forward.12} parent=0 // pred_fallthru
    _
  // Predicated region
  $region14: #{cell_forward.12} parent=0 // pred_check
    _
  $region15: #{cell_forward.12} parent=0 // pred_check_branch
    %106 = sbr.rel (0) target = $region17
  $region16: #{cell_forward.12} parent=0 // pred_region
    _
  $region17: #{cell_forward.12} parent=0 // pred_fallthru
    _

// kernel: cell_forward.18
$region0: #{cell_forward.18}
  #allocation0 [shape = 'u32[]', space=smem, size = 0x4, offset = 0x4, fixed_abs, tag = 'smem constant byte address 0x4 - core index']
  #allocation1 [shape = 'u32[144,128]{1,0:T(1,128)}', space=vmem, size = 0x12000, scoped, tag = 'internal scratch']
  %s0 = inlined_call_operand.vmem [shape: f32[8], index: 0, kind: input, shape index: {}]
  %s1 = inlined_call_operand.vmem [shape: f32[8,25,128], index: 1, kind: input, shape index: {}]
  %s2 = inlined_call_operand.vmem [shape: f32[8,25,128], index: 2, kind: input, shape index: {}]
  %s3 = inlined_call_operand.vmem [shape: f32[1,9,128], index: 3, kind: input, shape index: {}]
  %s4 = inlined_call_operand.vmem [shape: f32[1,128], index: 4, kind: input, shape index: {}]
  %s5 = inlined_call_operand.vmem [shape: f32[8,128], index: 5, kind: input, shape index: {}]
  %s6 = inlined_call_operand.vmem [shape: f32[8,9], index: 6, kind: input, shape index: {}]
  %s7 = inlined_call_operand.vmem [shape: f32[8,8], index: 7, kind: input, shape index: {}]
  %s8 = inlined_call_operand.vmem [shape: f32[8,25], index: 8, kind: input, shape index: {}]
  %s9 = inlined_call_operand.vmem [shape: f32[8,8], index: 9, kind: input, shape index: {}]
  %s10 = inlined_call_operand.vmem [shape: f32[8,9], index: 10, kind: input, shape index: {}]
  %s11 = inlined_call_operand.vmem [shape: f32[8,8], index: 11, kind: input, shape index: {}]
  %s12 = inlined_call_operand.vmem [shape: f32[8,25], index: 12, kind: input, shape index: {}]
  %s13 = inlined_call_operand.vmem [shape: f32[8,8], index: 13, kind: input, shape index: {}]
  %s14 = inlined_call_operand.vmem [shape: f32[8,128], index: 14, kind: output, shape index: {0}]
  %s15 = inlined_call_operand.vmem [shape: f32[8,128], index: 15, kind: output, shape index: {1}]
  %s16 = inlined_call_operand.vmem [shape: f32[8,128], index: 16, kind: output, shape index: {2}]
  %17 = xla_tuple %s14, %s15, %s16
  %s18 = sld [smem:[#allocation0]]
  $region86: #{cell_forward.18} parent=0
    _
  %s20 = ssub.s32 1, %s18
  %s21 = scalar_select 0, %s20, %s18
  $region1: #{cell_forward.18} parent=0
    #allocation2 [shape = 'u8[512]{0}', space=smem, size = 0x200, scoped, tag = 'input window, operand 0, single buffered']
    #allocation3 [shape = 's32[1]{0}', space=sflag, size = 0x4, scoped, tag = 'scoped memory for cell_forward.18']
    %22 = vsyncpa [#allocation3], 0
    // Predicated region
    $region2: #{cell_forward.18} parent=1 // pred_check
      _
    $region3: #{cell_forward.18} parent=1 // pred_check_branch
      %24 = sbr.rel (0) target = $region5
    $region4: #{cell_forward.18} parent=1 // pred_region
      %s26 = ssub.s32 16, 16
      %27 = vsyncadd [#allocation3], %s26
      %s29 = sshll.u32 %s0, 4
      %s30 = int_to_ptr.vmem [resolvable:$true] %s29
      %32 = dma.vmem_to_smem %s30, 16, [#allocation2], [#allocation3]
    $region5: #{cell_forward.18} parent=1 // pred_fallthru
      _
    // Predicated region
    $region6: #{cell_forward.18} parent=1 // pred_check
      _
    $region7: #{cell_forward.18} parent=1 // pred_check_branch
      %34 = sbr.rel (0) target = $region9
    $region8: #{cell_forward.18} parent=1 // pred_region
      _
    $region9: #{cell_forward.18} parent=1 // pred_fallthru
      _
    // Predicated region
    $region10: #{cell_forward.18} parent=1 // pred_check
      _
    $region11: #{cell_forward.18} parent=1 // pred_check_branch
      %36 = sbr.rel (0) target = $region13
    $region12: #{cell_forward.18} parent=1 // pred_region
      _
    $region13: #{cell_forward.18} parent=1 // pred_fallthru
      _
    // Predicated region
    $region14: #{cell_forward.18} parent=1 // pred_check
      _
    $region15: #{cell_forward.18} parent=1 // pred_check_branch
      %38 = sbr.rel (0) target = $region17
    $region16: #{cell_forward.18} parent=1 // pred_region
      _
    $region17: #{cell_forward.18} parent=1 // pred_fallthru
      _
    // Predicated region
    $region18: #{cell_forward.18} parent=1 // pred_check
      _
    $region19: #{cell_forward.18} parent=1 // pred_check_branch
      %40 = sbr.rel (0) target = $region21
    $region20: #{cell_forward.18} parent=1 // pred_region
      _
    $region21: #{cell_forward.18} parent=1 // pred_fallthru
      _
    // Predicated region
    $region22: #{cell_forward.18} parent=1 // pred_check
      _
    $region23: #{cell_forward.18} parent=1 // pred_check_branch
      %42 = sbr.rel (0) target = $region25
    $region24: #{cell_forward.18} parent=1 // pred_region
      _
    $region25: #{cell_forward.18} parent=1 // pred_fallthru
      _
    // Predicated region
    $region26: #{cell_forward.18} parent=1 // pred_check
      _
    $region27: #{cell_forward.18} parent=1 // pred_check_branch
      %44 = sbr.rel (0) target = $region29
    $region28: #{cell_forward.18} parent=1 // pred_region
      _
    $region29: #{cell_forward.18} parent=1 // pred_fallthru
      _
    // Predicated region
    $region30: #{cell_forward.18} parent=1 // pred_check
      _
    $region31: #{cell_forward.18} parent=1 // pred_check_branch
      %46 = sbr.rel (0) target = $region33
    $region32: #{cell_forward.18} parent=1 // pred_region
      _
    $region33: #{cell_forward.18} parent=1 // pred_fallthru
      _
    // Predicated region
    $region34: #{cell_forward.18} parent=1 // pred_check
      _
    $region35: #{cell_forward.18} parent=1 // pred_check_branch
      %48 = sbr.rel (0) target = $region37
    $region36: #{cell_forward.18} parent=1 // pred_region
      _
    $region37: #{cell_forward.18} parent=1 // pred_fallthru
      _
    // Predicated region
    $region38: #{cell_forward.18} parent=1 // pred_check
      _
    $region39: #{cell_forward.18} parent=1 // pred_check_branch
      %50 = sbr.rel (0) target = $region41
    $region40: #{cell_forward.18} parent=1 // pred_region
      _
    $region41: #{cell_forward.18} parent=1 // pred_fallthru
      _
    // Predicated region
    $region42: #{cell_forward.18} parent=1 // pred_check
      _
    $region43: #{cell_forward.18} parent=1 // pred_check_branch
      %52 = sbr.rel (0) target = $region45
    $region44: #{cell_forward.18} parent=1 // pred_region
      _
    $region45: #{cell_forward.18} parent=1 // pred_fallthru
      _
    // Predicated region
    $region46: #{cell_forward.18} parent=1 // pred_check
      _
    $region47: #{cell_forward.18} parent=1 // pred_check_branch
      %54 = sbr.rel (0) target = $region49
    $region48: #{cell_forward.18} parent=1 // pred_region
      _
    $region49: #{cell_forward.18} parent=1 // pred_fallthru
      _
    // Predicated region
    $region50: #{cell_forward.18} parent=1 // pred_check
      _
    $region51: #{cell_forward.18} parent=1 // pred_check_branch
      %56 = sbr.rel (0) target = $region53
    $region52: #{cell_forward.18} parent=1 // pred_region
      _
    $region53: #{cell_forward.18} parent=1 // pred_fallthru
      _
    // Predicated region
    $region54: #{cell_forward.18} parent=1 // pred_check
      _
    $region55: #{cell_forward.18} parent=1 // pred_check_branch
      %58 = sbr.rel (0) target = $region57
    $region56: #{cell_forward.18} parent=1 // pred_region
      _
    $region57: #{cell_forward.18} parent=1 // pred_fallthru
      _
    // Predicated region
    $region58: #{cell_forward.18} parent=1 // pred_check
      _
    $region59: #{cell_forward.18} parent=1 // pred_check_branch
      %60 = sbr.rel (0) target = $region61
    $region60: #{cell_forward.18} parent=1 // pred_region
      %61 = dma.done [#allocation3], 16
    $region61: #{cell_forward.18} parent=1 // pred_fallthru
      _
    %62 = sfence
    %v63 = vld [vmem:[%s1] sm:$0xff]
    %v64 = vld [vmem:[%s1 + $0x8] sm:$0xff]
    %v65 = vld [vmem:[%s1 + $0x10] sm:$0xff]
    %v66 = vld [vmem:[%s1 + $0x18] sm:$0x1]
    %v67 = vld [vmem:[%s1 + $0x20] sm:$0xff]
    %v68 = vld [vmem:[%s1 + $0x28] sm:$0xff]
    %v69 = vld [vmem:[%s1 + $0x30] sm:$0xff]
    %v70 = vld [vmem:[%s1 + $0x38] sm:$0x1]
    %v71 = vld [vmem:[%s1 + $0x40] sm:$0xff]
    %v72 = vld [vmem:[%s1 + $0x48] sm:$0xff]
    %v73 = vld [vmem:[%s1 + $0x50] sm:$0xff]
    %v74 = vld [vmem:[%s1 + $0x58] sm:$0x1]
    %v75 = vld [vmem:[%s1 + $0x60] sm:$0xff]
    %v76 = vld [vmem:[%s1 + $0x68] sm:$0xff]
    %v77 = vld [vmem:[%s1 + $0x70] sm:$0xff]
    %v78 = vld [vmem:[%s1 + $0x78] sm:$0x1]
    %v79 = vld [vmem:[%s1 + $0x80] sm:$0xff]
    %v80 = vld [vmem:[%s1 + $0x88] sm:$0xff]
    %v81 = vld [vmem:[%s1 + $0x90] sm:$0xff]
    %v82 = vld [vmem:[%s1 + $0x98] sm:$0x1]
    %v83 = vld [vmem:[%s1 + $0xa0] sm:$0xff]
    %v84 = vld [vmem:[%s1 + $0xa8] sm:$0xff]
    %v85 = vld [vmem:[%s1 + $0xb0] sm:$0xff]
    %v86 = vld [vmem:[%s1 + $0xb8] sm:$0x1]
    %v87 = vld [vmem:[%s1 + $0xc0] sm:$0xff]
    %v88 = vld [vmem:[%s1 + $0xc8] sm:$0xff]
    %v89 = vld [vmem:[%s1 + $0xd0] sm:$0xff]
    %v90 = vld [vmem:[%s1 + $0xd8] sm:$0x1]
    %v91 = vld [vmem:[%s1 + $0xe0] sm:$0xff]
    %v92 = vld [vmem:[%s1 + $0xe8] sm:$0xff]
    %v93 = vld [vmem:[%s1 + $0xf0] sm:$0xff]
    %v94 = vld [vmem:[%s1 + $0xf8] sm:$0x1]
    %v95 = vld [vmem:[%s3] sm:$0xff]
    %v96 = vld [vmem:[%s3 + $0x8] sm:$0x1]
    %v97 = vlaneseq
    %v98 = vshrl.u32 %v97, 7
    %v99 = vsub.s32 0, %v98
    %v100 = vrot.slane %v95, %v99
    %v101 = vadd.f32 %v63, %v100
    %v102 = vadd.f32 %v67, %v100
    %v103 = vadd.f32 %v71, %v100
    %v104 = vadd.f32 %v75, %v100
    %v105 = vadd.f32 %v79, %v100
    %v106 = vadd.f32 %v83, %v100
    %v107 = vadd.f32 %v87, %v100
    %v108 = vadd.f32 %v91, %v100
    %v109 = vlaneseq
    %v110 = vshrl.u32 %v109, 7
    %v111 = vsub.s32 1, %v110
    %v112 = vrot.slane %v95, %v111
    %v113 = vadd.f32 %v63, %v112
    %v114 = vadd.f32 %v67, %v112
    %v115 = vadd.f32 %v71, %v112
    %v116 = vadd.f32 %v75, %v112
    %v117 = vadd.f32 %v79, %v112
    %v118 = vadd.f32 %v83, %v112
    %v119 = vadd.f32 %v87, %v112
    %v120 = vadd.f32 %v91, %v112
    %v129 = vrot.slane %v113, 1
    %v130 = vrot.slane %v114, 1
    %v131 = vrot.slane %v115, 1
    %v132 = vrot.slane %v116, 1
    %v133 = vrot.slane %v117, 1
    %v134 = vrot.slane %v118, 1
    %v135 = vrot.slane %v119, 1
    %v136 = vrot.slane %v120, 1
    %v145 = vmax.f32 %v101, %v129
    %v146 = vmax.f32 %v102, %v130
    %v147 = vmax.f32 %v103, %v131
    %v148 = vmax.f32 %v104, %v132
    %v149 = vmax.f32 %v105, %v133
    %v150 = vmax.f32 %v106, %v134
    %v151 = vmax.f32 %v107, %v135
    %v152 = vmax.f32 %v108, %v136
    %v161 = vrot.slane %v63, 1
    %v162 = vrot.slane %v67, 1
    %v163 = vrot.slane %v71, 1
    %v164 = vrot.slane %v75, 1
    %v165 = vrot.slane %v79, 1
    %v166 = vrot.slane %v83, 1
    %v167 = vrot.slane %v87, 1
    %v168 = vrot.slane %v91, 1
    %v177 = vadd.f32 %v63, %v161
    %v178 = vadd.f32 %v67, %v162
    %v179 = vadd.f32 %v71, %v163
    %v180 = vadd.f32 %v75, %v164
    %v181 = vadd.f32 %v79, %v165
    %v182 = vadd.f32 %v83, %v166
    %v183 = vadd.f32 %v87, %v167
    %v184 = vadd.f32 %v91, %v168
    %v185 = vlaneseq
    %v186 = vshrl.u32 %v185, 7
    %v187 = vsub.s32 2, %v186
    %v188 = vrot.slane %v95, %v187
    %v189 = vadd.f32 %v64, %v188
    %v190 = vadd.f32 %v68, %v188
    %v191 = vadd.f32 %v72, %v188
    %v192 = vadd.f32 %v76, %v188
    %v193 = vadd.f32 %v80, %v188
    %v194 = vadd.f32 %v84, %v188
    %v195 = vadd.f32 %v88, %v188
    %v196 = vadd.f32 %v92, %v188
    %v205 = vrot.slane %v189, 2
    %v206 = vrot.slane %v190, 2
    %v207 = vrot.slane %v191, 2
    %v208 = vrot.slane %v192, 2
    %v209 = vrot.slane %v193, 2
    %v210 = vrot.slane %v194, 2
    %v211 = vrot.slane %v195, 2
    %v212 = vrot.slane %v196, 2
    %v221 = vmax.f32 %v145, %v205
    %v222 = vmax.f32 %v146, %v206
    %v223 = vmax.f32 %v147, %v207
    %v224 = vmax.f32 %v148, %v208
    %v225 = vmax.f32 %v149, %v209
    %v226 = vmax.f32 %v150, %v210
    %v227 = vmax.f32 %v151, %v211
    %v228 = vmax.f32 %v152, %v212
    %v237 = vrot.slane %v64, 2
    %v238 = vrot.slane %v68, 2
    %v239 = vrot.slane %v72, 2
    %v240 = vrot.slane %v76, 2
    %v241 = vrot.slane %v80, 2
    %v242 = vrot.slane %v84, 2
    %v243 = vrot.slane %v88, 2
    %v244 = vrot.slane %v92, 2
    %v253 = vadd.f32 %v177, %v237
    %v254 = vadd.f32 %v178, %v238
    %v255 = vadd.f32 %v179, %v239
    %v256 = vadd.f32 %v180, %v240
    %v257 = vadd.f32 %v181, %v241
    %v258 = vadd.f32 %v182, %v242
    %v259 = vadd.f32 %v183, %v243
    %v260 = vadd.f32 %v184, %v244
    %v261 = vlaneseq
    %v262 = vshrl.u32 %v261, 7
    %v263 = vsub.s32 3, %v262
    %v264 = vrot.slane %v95, %v263
    %v265 = vadd.f32 %v64, %v264
    %v266 = vadd.f32 %v68, %v264
    %v267 = vadd.f32 %v72, %v264
    %v268 = vadd.f32 %v76, %v264
    %v269 = vadd.f32 %v80, %v264
    %v270 = vadd.f32 %v84, %v264
    %v271 = vadd.f32 %v88, %v264
    %v272 = vadd.f32 %v92, %v264
    %v281 = vrot.slane %v265, 5
    %v282 = vrot.slane %v266, 5
    %v283 = vrot.slane %v267, 5
    %v284 = vrot.slane %v268, 5
    %v285 = vrot.slane %v269, 5
    %v286 = vrot.slane %v270, 5
    %v287 = vrot.slane %v271, 5
    %v288 = vrot.slane %v272, 5
    %v297 = vmax.f32 %v221, %v281
    %v298 = vmax.f32 %v222, %v282
    %v299 = vmax.f32 %v223, %v283
    %v300 = vmax.f32 %v224, %v284
    %v301 = vmax.f32 %v225, %v285
    %v302 = vmax.f32 %v226, %v286
    %v303 = vmax.f32 %v227, %v287
    %v304 = vmax.f32 %v228, %v288
    %v305 = vrot.slane %v64, 5
    %v306 = vrot.slane %v68, 5
    %v307 = vrot.slane %v72, 5
    %v308 = vrot.slane %v76, 5
    %v309 = vrot.slane %v80, 5
    %v310 = vrot.slane %v84, 5
    %v311 = vrot.slane %v88, 5
    %v312 = vrot.slane %v92, 5
    %v321 = vadd.f32 %v253, %v305
    %v322 = vadd.f32 %v254, %v306
    %v323 = vadd.f32 %v255, %v307
    %v324 = vadd.f32 %v256, %v308
    %v325 = vadd.f32 %v257, %v309
    %v326 = vadd.f32 %v258, %v310
    %v327 = vadd.f32 %v259, %v311
    %v328 = vadd.f32 %v260, %v312
    %v329 = vlaneseq
    %v330 = vshrl.u32 %v329, 7
    %v331 = vsub.s32 4, %v330
    %v332 = vrot.slane %v95, %v331
    %v333 = vadd.f32 %v64, %v332
    %v334 = vadd.f32 %v68, %v332
    %v335 = vadd.f32 %v72, %v332
    %v336 = vadd.f32 %v76, %v332
    %v337 = vadd.f32 %v80, %v332
    %v338 = vadd.f32 %v84, %v332
    %v339 = vadd.f32 %v88, %v332
    %v340 = vadd.f32 %v92, %v332
    %v349 = vrot.slane %v333, 6
    %v350 = vrot.slane %v334, 6
    %v351 = vrot.slane %v335, 6
    %v352 = vrot.slane %v336, 6
    %v353 = vrot.slane %v337, 6
    %v354 = vrot.slane %v338, 6
    %v355 = vrot.slane %v339, 6
    %v356 = vrot.slane %v340, 6
    %v365 = vmax.f32 %v297, %v349
    %v366 = vmax.f32 %v298, %v350
    %v367 = vmax.f32 %v299, %v351
    %v368 = vmax.f32 %v300, %v352
    %v369 = vmax.f32 %v301, %v353
    %v370 = vmax.f32 %v302, %v354
    %v371 = vmax.f32 %v303, %v355
    %v372 = vmax.f32 %v304, %v356
    %v373 = vrot.slane %v64, 6
    %v374 = vrot.slane %v68, 6
    %v375 = vrot.slane %v72, 6
    %v376 = vrot.slane %v76, 6
    %v377 = vrot.slane %v80, 6
    %v378 = vrot.slane %v84, 6
    %v379 = vrot.slane %v88, 6
    %v380 = vrot.slane %v92, 6
    %v389 = vadd.f32 %v321, %v373
    %v390 = vadd.f32 %v322, %v374
    %v391 = vadd.f32 %v323, %v375
    %v392 = vadd.f32 %v324, %v376
    %v393 = vadd.f32 %v325, %v377
    %v394 = vadd.f32 %v326, %v378
    %v395 = vadd.f32 %v327, %v379
    %v396 = vadd.f32 %v328, %v380
    %v397 = vlaneseq
    %v398 = vshrl.u32 %v397, 7
    %v399 = vsub.s32 5, %v398
    %v400 = vrot.slane %v95, %v399
    %v401 = vadd.f32 %v64, %v400
    %v402 = vadd.f32 %v68, %v400
    %v403 = vadd.f32 %v72, %v400
    %v404 = vadd.f32 %v76, %v400
    %v405 = vadd.f32 %v80, %v400
    %v406 = vadd.f32 %v84, %v400
    %v407 = vadd.f32 %v88, %v400
    %v408 = vadd.f32 %v92, %v400
    %v417 = vrot.slane %v401, 7
    %v418 = vrot.slane %v402, 7
    %v419 = vrot.slane %v403, 7
    %v420 = vrot.slane %v404, 7
    %v421 = vrot.slane %v405, 7
    %v422 = vrot.slane %v406, 7
    %v423 = vrot.slane %v407, 7
    %v424 = vrot.slane %v408, 7
    %v433 = vmax.f32 %v365, %v417
    %v434 = vmax.f32 %v366, %v418
    %v435 = vmax.f32 %v367, %v419
    %v436 = vmax.f32 %v368, %v420
    %v437 = vmax.f32 %v369, %v421
    %v438 = vmax.f32 %v370, %v422
    %v439 = vmax.f32 %v371, %v423
    %v440 = vmax.f32 %v372, %v424
    %v441 = vrot.slane %v64, 7
    %v442 = vrot.slane %v68, 7
    %v443 = vrot.slane %v72, 7
    %v444 = vrot.slane %v76, 7
    %v445 = vrot.slane %v80, 7
    %v446 = vrot.slane %v84, 7
    %v447 = vrot.slane %v88, 7
    %v448 = vrot.slane %v92, 7
    %v457 = vadd.f32 %v389, %v441
    %v458 = vadd.f32 %v390, %v442
    %v459 = vadd.f32 %v391, %v443
    %v460 = vadd.f32 %v392, %v444
    %v461 = vadd.f32 %v393, %v445
    %v462 = vadd.f32 %v394, %v446
    %v463 = vadd.f32 %v395, %v447
    %v464 = vadd.f32 %v396, %v448
    %v465 = vlaneseq
    %v466 = vshrl.u32 %v465, 7
    %v467 = vsub.s32 6, %v466
    %v468 = vrot.slane %v95, %v467
    %v469 = vadd.f32 %v65, %v468
    %v470 = vadd.f32 %v69, %v468
    %v471 = vadd.f32 %v73, %v468
    %v472 = vadd.f32 %v77, %v468
    %v473 = vadd.f32 %v81, %v468
    %v474 = vadd.f32 %v85, %v468
    %v475 = vadd.f32 %v89, %v468
    %v476 = vadd.f32 %v93, %v468
    %v485 = vrot.slane %v469, 2
    %v486 = vrot.slane %v470, 2
    %v487 = vrot.slane %v471, 2
    %v488 = vrot.slane %v472, 2
    %v489 = vrot.slane %v473, 2
    %v490 = vrot.slane %v474, 2
    %v491 = vrot.slane %v475, 2
    %v492 = vrot.slane %v476, 2
    %v501 = vmax.f32 %v433, %v485
    %v502 = vmax.f32 %v434, %v486
    %v503 = vmax.f32 %v435, %v487
    %v504 = vmax.f32 %v436, %v488
    %v505 = vmax.f32 %v437, %v489
    %v506 = vmax.f32 %v438, %v490
    %v507 = vmax.f32 %v439, %v491
    %v508 = vmax.f32 %v440, %v492
    %v517 = vrot.slane %v65, 2
    %v518 = vrot.slane %v69, 2
    %v519 = vrot.slane %v73, 2
    %v520 = vrot.slane %v77, 2
    %v521 = vrot.slane %v81, 2
    %v522 = vrot.slane %v85, 2
    %v523 = vrot.slane %v89, 2
    %v524 = vrot.slane %v93, 2
    %v533 = vadd.f32 %v457, %v517
    %v534 = vadd.f32 %v458, %v518
    %v535 = vadd.f32 %v459, %v519
    %v536 = vadd.f32 %v460, %v520
    %v537 = vadd.f32 %v461, %v521
    %v538 = vadd.f32 %v462, %v522
    %v539 = vadd.f32 %v463, %v523
    %v540 = vadd.f32 %v464, %v524
    %v541 = vlaneseq
    %v542 = vshrl.u32 %v541, 7
    %v543 = vsub.s32 7, %v542
    %v544 = vrot.slane %v95, %v543
    %v545 = vadd.f32 %v65, %v544
    %v546 = vadd.f32 %v69, %v544
    %v547 = vadd.f32 %v73, %v544
    %v548 = vadd.f32 %v77, %v544
    %v549 = vadd.f32 %v81, %v544
    %v550 = vadd.f32 %v85, %v544
    %v551 = vadd.f32 %v89, %v544
    %v552 = vadd.f32 %v93, %v544
    %v561 = vrot.slane %v545, 3
    %v562 = vrot.slane %v546, 3
    %v563 = vrot.slane %v547, 3
    %v564 = vrot.slane %v548, 3
    %v565 = vrot.slane %v549, 3
    %v566 = vrot.slane %v550, 3
    %v567 = vrot.slane %v551, 3
    %v568 = vrot.slane %v552, 3
    %v577 = vmax.f32 %v501, %v561
    %v578 = vmax.f32 %v502, %v562
    %v579 = vmax.f32 %v503, %v563
    %v580 = vmax.f32 %v504, %v564
    %v581 = vmax.f32 %v505, %v565
    %v582 = vmax.f32 %v506, %v566
    %v583 = vmax.f32 %v507, %v567
    %v584 = vmax.f32 %v508, %v568
    %v585 = vrot.slane %v65, 3
    %v586 = vrot.slane %v69, 3
    %v587 = vrot.slane %v73, 3
    %v588 = vrot.slane %v77, 3
    %v589 = vrot.slane %v81, 3
    %v590 = vrot.slane %v85, 3
    %v591 = vrot.slane %v89, 3
    %v592 = vrot.slane %v93, 3
    %v601 = vadd.f32 %v533, %v585
    %v602 = vadd.f32 %v534, %v586
    %v603 = vadd.f32 %v535, %v587
    %v604 = vadd.f32 %v536, %v588
    %v605 = vadd.f32 %v537, %v589
    %v606 = vadd.f32 %v538, %v590
    %v607 = vadd.f32 %v539, %v591
    %v608 = vadd.f32 %v540, %v592
    %v609 = vlaneseq
    %v610 = vshrl.u32 %v609, 7
    %v611 = vsub.s32 0, %v610
    %v612 = vrot.slane %v96, %v611
    %v613 = vadd.f32 %v65, %v612
    %v614 = vadd.f32 %v69, %v612
    %v615 = vadd.f32 %v73, %v612
    %v616 = vadd.f32 %v77, %v612
    %v617 = vadd.f32 %v81, %v612
    %v618 = vadd.f32 %v85, %v612
    %v619 = vadd.f32 %v89, %v612
    %v620 = vadd.f32 %v93, %v612
    %v629 = vrot.slane %v613, 4
    %v630 = vrot.slane %v614, 4
    %v631 = vrot.slane %v615, 4
    %v632 = vrot.slane %v616, 4
    %v633 = vrot.slane %v617, 4
    %v634 = vrot.slane %v618, 4
    %v635 = vrot.slane %v619, 4
    %v636 = vrot.slane %v620, 4
    %v645 = vmax.f32 %v577, %v629
    %v646 = vmax.f32 %v578, %v630
    %v647 = vmax.f32 %v579, %v631
    %v648 = vmax.f32 %v580, %v632
    %v649 = vmax.f32 %v581, %v633
    %v650 = vmax.f32 %v582, %v634
    %v651 = vmax.f32 %v583, %v635
    %v652 = vmax.f32 %v584, %v636
    %v653 = vrot.slane %v65, 4
    %v654 = vrot.slane %v69, 4
    %v655 = vrot.slane %v73, 4
    %v656 = vrot.slane %v77, 4
    %v657 = vrot.slane %v81, 4
    %v658 = vrot.slane %v85, 4
    %v659 = vrot.slane %v89, 4
    %v660 = vrot.slane %v93, 4
    %v669 = vadd.f32 %v601, %v653
    %v670 = vadd.f32 %v602, %v654
    %v671 = vadd.f32 %v603, %v655
    %v672 = vadd.f32 %v604, %v656
    %v673 = vadd.f32 %v605, %v657
    %v674 = vadd.f32 %v606, %v658
    %v675 = vadd.f32 %v607, %v659
    %v676 = vadd.f32 %v608, %v660
    %v677 = vld [vmem:[%s4] sm:$0x1]
    %v679 = vlaneseq
    %v680 = vshrl.u32 %v679, 7
    %v681 = vsub.s32 0, %v680
    %v682 = vrot.slane %v677, %v681
    %v684 = vmul.f32 %v669, %v682
    %v685 = vmul.f32 %v670, %v682
    %v686 = vmul.f32 %v671, %v682
    %v687 = vmul.f32 %v672, %v682
    %v688 = vmul.f32 %v673, %v682
    %v689 = vmul.f32 %v674, %v682
    %v690 = vmul.f32 %v675, %v682
    %v691 = vmul.f32 %v676, %v682
    %s692 = sld [smem:[#allocation2 + $0x1]]
    %v701 = vrot.slane %v646, 7
    %vm702 = vcmask 1047559
    %v703 = vsel %vm702, %v701, %v645
    %v704 = vrot.slane %v647, 6
    %v705 = vrot.slane %v648, 5
    %vm706 = vcmask 1041409
    %v707 = vsel %vm706, %v705, %v704
    %v708 = vrot.slane %v649, 4
    %vm709 = vcmask 1042434
    %v710 = vsel %vm709, %v708, %v707
    %v711 = vrot.slane %v650, 3
    %vm712 = vcmask 1043459
    %v713 = vsel %vm712, %v711, %v710
    %v714 = vrot.slane %v651, 2
    %vm715 = vcmask 1044484
    %v716 = vsel %vm715, %v714, %v713
    %v717 = vrot.slane %v652, 1
    %vm718 = vcmask 1045509
    %v719 = vsel %vm718, %v717, %v716
    %vm722 = vcmask 1047558
    %v723 = vsel %vm722, %v703, 0.0
    %724 = vadd.xlane.f32.xlu0 %v723
    %v725 = vpop.xlane.xlu0 %724
    %vm726 = vcmask 1045504
    %v727 = vsel %vm726, %v719, 0.0
    %728 = vadd.xlane.f32.xlu0 %v727
    %v729 = vpop.xlane.xlu0 %728
    %v730 = vrcp.pop 128.0
    %v731 = vmul.f32 %v725, %v730
    %v732 = vmul.f32 %v729, %v730
    %v735 = vrot.slane %v731, 1
    %v736 = vrot.slane %v732, 2
    %v737 = vrot.slane %v732, 3
    %v738 = vrot.slane %v732, 4
    %v739 = vrot.slane %v732, 5
    %v740 = vrot.slane %v732, 6
    %v741 = vrot.slane %v732, 7
    %v750 = vsub.f32 %v645, %v731
    %v751 = vsub.f32 %v646, %v735
    %v752 = vsub.f32 %v647, %v736
    %v753 = vsub.f32 %v648, %v737
    %v754 = vsub.f32 %v649, %v738
    %v755 = vsub.f32 %v650, %v739
    %v756 = vsub.f32 %v651, %v740
    %v757 = vsub.f32 %v652, %v741
    %v758 = vmul.f32 %v750, %v750
    %v759 = vmul.f32 %v751, %v751
    %v760 = vmul.f32 %v752, %v752
    %v761 = vmul.f32 %v753, %v753
    %v762 = vmul.f32 %v754, %v754
    %v763 = vmul.f32 %v755, %v755
    %v764 = vmul.f32 %v756, %v756
    %v765 = vmul.f32 %v757, %v757
    %v774 = vrot.slane %v759, 7
    %v775 = vsel %vm702, %v774, %v758
    %v776 = vrot.slane %v760, 6
    %v777 = vrot.slane %v761, 5
    %v778 = vsel %vm706, %v777, %v776
    %v779 = vrot.slane %v762, 4
    %v780 = vsel %vm709, %v779, %v778
    %v781 = vrot.slane %v763, 3
    %v782 = vsel %vm712, %v781, %v780
    %v783 = vrot.slane %v764, 2
    %v784 = vsel %vm715, %v783, %v782
    %v785 = vrot.slane %v765, 1
    %v786 = vsel %vm718, %v785, %v784
    %v789 = vsel %vm722, %v775, 0.0
    %790 = vadd.xlane.f32.xlu0 %v789
    %v791 = vpop.xlane.xlu0 %790
    %v792 = vsel %vm726, %v786, 0.0
    %793 = vadd.xlane.f32.xlu0 %v792
    %v794 = vpop.xlane.xlu0 %793
    %v795 = vmul.f32 %v791, %v730
    %v796 = vmul.f32 %v794, %v730
    %v797 = vadd.f32 %v795, 1e-05
    %v798 = vadd.f32 %v796, 1e-05
    %v799 = vrsqrt.pop %v797
    %v800 = vrsqrt.pop %v798
    %v803 = vrot.slane %v799, 1
    %v804 = vrot.slane %v800, 2
    %v805 = vrot.slane %v800, 3
    %v806 = vrot.slane %v800, 4
    %v807 = vrot.slane %v800, 5
    %v808 = vrot.slane %v800, 6
    %v809 = vrot.slane %v800, 7
    %v818 = vmul.f32 %v750, %v799
    %v819 = vmul.f32 %v751, %v803
    %v820 = vmul.f32 %v752, %v804
    %v821 = vmul.f32 %v753, %v805
    %v822 = vmul.f32 %v754, %v806
    %v823 = vmul.f32 %v755, %v807
    %v824 = vmul.f32 %v756, %v808
    %v825 = vmul.f32 %v757, %v809
    %v826 = vstv %s692
    %v827 = vmul.f32 %v826, %v818
    %v828 = vmul.f32 %v826, %v819
    %v829 = vmul.f32 %v826, %v820
    %v830 = vmul.f32 %v826, %v821
    %v831 = vmul.f32 %v826, %v822
    %v832 = vmul.f32 %v826, %v823
    %v833 = vmul.f32 %v826, %v824
    %v834 = vmul.f32 %v826, %v825
    %s835 = sld [smem:[#allocation2 + $0x2]]
    %v844 = vrot.slane %v685, 7
    %v845 = vsel %vm702, %v844, %v684
    %v846 = vrot.slane %v686, 6
    %v847 = vrot.slane %v687, 5
    %v848 = vsel %vm706, %v847, %v846
    %v849 = vrot.slane %v688, 4
    %v850 = vsel %vm709, %v849, %v848
    %v851 = vrot.slane %v689, 3
    %v852 = vsel %vm712, %v851, %v850
    %v853 = vrot.slane %v690, 2
    %v854 = vsel %vm715, %v853, %v852
    %v855 = vrot.slane %v691, 1
    %v856 = vsel %vm718, %v855, %v854
    %v859 = vsel %vm722, %v845, 0.0
    %860 = vadd.xlane.f32.xlu0 %v859
    %v861 = vpop.xlane.xlu0 %860
    %v862 = vsel %vm726, %v856, 0.0
    %863 = vadd.xlane.f32.xlu0 %v862
    %v864 = vpop.xlane.xlu0 %863
    %v865 = vmul.f32 %v861, %v730
    %v866 = vmul.f32 %v864, %v730
    %v869 = vrot.slane %v865, 1
    %v870 = vrot.slane %v866, 2
    %v871 = vrot.slane %v866, 3
    %v872 = vrot.slane %v866, 4
    %v873 = vrot.slane %v866, 5
    %v874 = vrot.slane %v866, 6
    %v875 = vrot.slane %v866, 7
    %v884 = vsub.f32 %v684, %v865
    %v885 = vsub.f32 %v685, %v869
    %v886 = vsub.f32 %v686, %v870
    %v887 = vsub.f32 %v687, %v871
    %v888 = vsub.f32 %v688, %v872
    %v889 = vsub.f32 %v689, %v873
    %v890 = vsub.f32 %v690, %v874
    %v891 = vsub.f32 %v691, %v875
    %v892 = vmul.f32 %v884, %v884
    %v893 = vmul.f32 %v885, %v885
    %v894 = vmul.f32 %v886, %v886
    %v895 = vmul.f32 %v887, %v887
    %v896 = vmul.f32 %v888, %v888
    %v897 = vmul.f32 %v889, %v889
    %v898 = vmul.f32 %v890, %v890
    %v899 = vmul.f32 %v891, %v891
    %v908 = vrot.slane %v893, 7
    %v909 = vsel %vm702, %v908, %v892
    %v910 = vrot.slane %v894, 6
    %v911 = vrot.slane %v895, 5
    %v912 = vsel %vm706, %v911, %v910
    %v913 = vrot.slane %v896, 4
    %v914 = vsel %vm709, %v913, %v912
    %v915 = vrot.slane %v897, 3
    %v916 = vsel %vm712, %v915, %v914
    %v917 = vrot.slane %v898, 2
    %v918 = vsel %vm715, %v917, %v916
    %v919 = vrot.slane %v899, 1
    %v920 = vsel %vm718, %v919, %v918
    %v923 = vsel %vm722, %v909, 0.0
    %924 = vadd.xlane.f32.xlu0 %v923
    %v925 = vpop.xlane.xlu0 %924
    %v926 = vsel %vm726, %v920, 0.0
    %927 = vadd.xlane.f32.xlu0 %v926
    %v928 = vpop.xlane.xlu0 %927
    %v929 = vmul.f32 %v925, %v730
    %v930 = vmul.f32 %v928, %v730
    %v931 = vadd.f32 %v929, 1e-05
    %v932 = vadd.f32 %v930, 1e-05
    %v933 = vrsqrt.pop %v931
    %v934 = vrsqrt.pop %v932
    %v937 = vrot.slane %v933, 1
    %v938 = vrot.slane %v934, 2
    %v939 = vrot.slane %v934, 3
    %v940 = vrot.slane %v934, 4
    %v941 = vrot.slane %v934, 5
    %v942 = vrot.slane %v934, 6
    %v943 = vrot.slane %v934, 7
    %v952 = vmul.f32 %v884, %v933
    %v953 = vmul.f32 %v885, %v937
    %v954 = vmul.f32 %v886, %v938
    %v955 = vmul.f32 %v887, %v939
    %v956 = vmul.f32 %v888, %v940
    %v957 = vmul.f32 %v889, %v941
    %v958 = vmul.f32 %v890, %v942
    %v959 = vmul.f32 %v891, %v943
    %v960 = vstv %s835
    %v961 = vmul.f32 %v960, %v952
    %v962 = vmul.f32 %v960, %v953
    %v963 = vmul.f32 %v960, %v954
    %v964 = vmul.f32 %v960, %v955
    %v965 = vmul.f32 %v960, %v956
    %v966 = vmul.f32 %v960, %v957
    %v967 = vmul.f32 %v960, %v958
    %v968 = vmul.f32 %v960, %v959
    %v969 = vadd.f32 %v827, %v961
    %v970 = vadd.f32 %v828, %v962
    %v971 = vadd.f32 %v829, %v963
    %v972 = vadd.f32 %v830, %v964
    %v973 = vadd.f32 %v831, %v965
    %v974 = vadd.f32 %v832, %v966
    %v975 = vadd.f32 %v833, %v967
    %v976 = vadd.f32 %v834, %v968
    %v977 = vmax.f32 %v63, 0.0
    %v978 = vmax.f32 %v64, 0.0
    %v979 = vmax.f32 %v65, 0.0
    %v980 = vmax.f32 %v66, 0.0
    %v981 = vmax.f32 %v67, 0.0
    %v982 = vmax.f32 %v68, 0.0
    %v983 = vmax.f32 %v69, 0.0
    %v984 = vmax.f32 %v70, 0.0
    %v985 = vmax.f32 %v71, 0.0
    %v986 = vmax.f32 %v72, 0.0
    %v987 = vmax.f32 %v73, 0.0
    %v988 = vmax.f32 %v74, 0.0
    %v989 = vmax.f32 %v75, 0.0
    %v990 = vmax.f32 %v76, 0.0
    %v991 = vmax.f32 %v77, 0.0
    %v992 = vmax.f32 %v78, 0.0
    %v993 = vmax.f32 %v79, 0.0
    %v994 = vmax.f32 %v80, 0.0
    %v995 = vmax.f32 %v81, 0.0
    %v996 = vmax.f32 %v82, 0.0
    %v997 = vmax.f32 %v83, 0.0
    %v998 = vmax.f32 %v84, 0.0
    %v999 = vmax.f32 %v85, 0.0
    %v1000 = vmax.f32 %v86, 0.0
    %v1001 = vmax.f32 %v87, 0.0
    %v1002 = vmax.f32 %v88, 0.0
    %v1003 = vmax.f32 %v89, 0.0
    %v1004 = vmax.f32 %v90, 0.0
    %v1005 = vmax.f32 %v91, 0.0
    %v1006 = vmax.f32 %v92, 0.0
    %v1007 = vmax.f32 %v93, 0.0
    %v1008 = vmax.f32 %v94, 0.0
    %v1009 = vld [vmem:[%s2] sm:$0xff]
    %v1010 = vld [vmem:[%s2 + $0x8] sm:$0xff]
    %v1011 = vld [vmem:[%s2 + $0x10] sm:$0xff]
    %v1012 = vld [vmem:[%s2 + $0x18] sm:$0x1]
    %v1013 = vld [vmem:[%s2 + $0x20] sm:$0xff]
    %v1014 = vld [vmem:[%s2 + $0x28] sm:$0xff]
    %v1015 = vld [vmem:[%s2 + $0x30] sm:$0xff]
    %v1016 = vld [vmem:[%s2 + $0x38] sm:$0x1]
    %v1017 = vld [vmem:[%s2 + $0x40] sm:$0xff]
    %v1018 = vld [vmem:[%s2 + $0x48] sm:$0xff]
    %v1019 = vld [vmem:[%s2 + $0x50] sm:$0xff]
    %v1020 = vld [vmem:[%s2 + $0x58] sm:$0x1]
    %v1021 = vld [vmem:[%s2 + $0x60] sm:$0xff]
    %v1022 = vld [vmem:[%s2 + $0x68] sm:$0xff]
    %v1023 = vld [vmem:[%s2 + $0x70] sm:$0xff]
    %v1024 = vld [vmem:[%s2 + $0x78] sm:$0x1]
    %v1025 = vld [vmem:[%s2 + $0x80] sm:$0xff]
    %v1026 = vld [vmem:[%s2 + $0x88] sm:$0xff]
    %v1027 = vld [vmem:[%s2 + $0x90] sm:$0xff]
    %v1028 = vld [vmem:[%s2 + $0x98] sm:$0x1]
    %v1029 = vld [vmem:[%s2 + $0xa0] sm:$0xff]
    %v1030 = vld [vmem:[%s2 + $0xa8] sm:$0xff]
    %v1031 = vld [vmem:[%s2 + $0xb0] sm:$0xff]
    %v1032 = vld [vmem:[%s2 + $0xb8] sm:$0x1]
    %v1033 = vld [vmem:[%s2 + $0xc0] sm:$0xff]
    %v1034 = vld [vmem:[%s2 + $0xc8] sm:$0xff]
    %v1035 = vld [vmem:[%s2 + $0xd0] sm:$0xff]
    %v1036 = vld [vmem:[%s2 + $0xd8] sm:$0x1]
    %v1037 = vld [vmem:[%s2 + $0xe0] sm:$0xff]
    %v1038 = vld [vmem:[%s2 + $0xe8] sm:$0xff]
    %v1039 = vld [vmem:[%s2 + $0xf0] sm:$0xff]
    %v1040 = vld [vmem:[%s2 + $0xf8] sm:$0x1]
    %v1041 = vmax.f32 %v1009, 0.0
    %v1042 = vmax.f32 %v1010, 0.0
    %v1043 = vmax.f32 %v1011, 0.0
    %v1044 = vmax.f32 %v1012, 0.0
    %v1045 = vmax.f32 %v1013, 0.0
    %v1046 = vmax.f32 %v1014, 0.0
    %v1047 = vmax.f32 %v1015, 0.0
    %v1048 = vmax.f32 %v1016, 0.0
    %v1049 = vmax.f32 %v1017, 0.0
    %v1050 = vmax.f32 %v1018, 0.0
    %v1051 = vmax.f32 %v1019, 0.0
    %v1052 = vmax.f32 %v1020, 0.0
    %v1053 = vmax.f32 %v1021, 0.0
    %v1054 = vmax.f32 %v1022, 0.0
    %v1055 = vmax.f32 %v1023, 0.0
    %v1056 = vmax.f32 %v1024, 0.0
    %v1057 = vmax.f32 %v1025, 0.0
    %v1058 = vmax.f32 %v1026, 0.0
    %v1059 = vmax.f32 %v1027, 0.0
    %v1060 = vmax.f32 %v1028, 0.0
    %v1061 = vmax.f32 %v1029, 0.0
    %v1062 = vmax.f32 %v1030, 0.0
    %v1063 = vmax.f32 %v1031, 0.0
    %v1064 = vmax.f32 %v1032, 0.0
    %v1065 = vmax.f32 %v1033, 0.0
    %v1066 = vmax.f32 %v1034, 0.0
    %v1067 = vmax.f32 %v1035, 0.0
    %v1068 = vmax.f32 %v1036, 0.0
    %v1069 = vmax.f32 %v1037, 0.0
    %v1070 = vmax.f32 %v1038, 0.0
    %v1071 = vmax.f32 %v1039, 0.0
    %v1072 = vmax.f32 %v1040, 0.0
    %v1073 = vld [vmem:[%s7] sm:$0xff]
    %v1074 = vld [vmem:[%s6] sm:$0xff]
    %1076 = vset.pattern.permute.xlu0 0
    %1077 = vperm.xlu0 %1076, %v1074
    %v1078 = vpop.permute.xlu0 %1077
    %v1088 = vrot.slane %v981, 7
    %v1089 = vsel %vm706, %v1088, %v977
    %v1090 = vrot.slane %v985, 6
    %v1091 = vsel %vm709, %v1090, %v1089
    %v1092 = vrot.slane %v989, 5
    %v1093 = vsel %vm712, %v1092, %v1091
    %v1094 = vrot.slane %v993, 4
    %v1095 = vsel %vm715, %v1094, %v1093
    %v1096 = vrot.slane %v997, 3
    %v1097 = vsel %vm718, %v1096, %v1095
    %v1098 = vrot.slane %v1001, 2
    %vm1099 = vcmask 1046534
    %v1100 = vsel %vm1099, %v1098, %v1097
    %v1101 = vrot.slane %v1005, 1
    %v1102 = vsel %vm702, %v1101, %v1100
    %v1104 = vmul.f32 %v1078, %v1102
    %1105 = vset.pattern.permute.xlu0 1
    %1106 = vperm.xlu0 %1105, %v1074
    %v1107 = vpop.permute.xlu0 %1106
    %v1109 = vrot.slane %v977, 2
    %v1110 = vrot.slane %v981, 1
    %v1111 = vsel %vm706, %v1110, %v1109
    %v1112 = vsel %vm709, %v985, %v1111
    %v1113 = vrot.slane %v989, 7
    %v1114 = vsel %vm712, %v1113, %v1112
    %v1115 = vrot.slane %v993, 6
    %v1116 = vsel %vm715, %v1115, %v1114
    %v1117 = vrot.slane %v997, 5
    %v1118 = vsel %vm718, %v1117, %v1116
    %v1119 = vrot.slane %v1001, 4
    %v1120 = vsel %vm1099, %v1119, %v1118
    %v1121 = vrot.slane %v1005, 3
    %v1122 = vsel %vm702, %v1121, %v1120
    %v1124 = vmul.f32 %v1107, %v1122
    %v1125 = vadd.f32 %v1104, %v1124
    %1126 = vset.pattern.permute.xlu0 2
    %1127 = vperm.xlu0 %1126, %v1074
    %v1128 = vpop.permute.xlu0 %1127
    %v1130 = vrot.slane %v977, 4
    %v1131 = vrot.slane %v981, 3
    %v1132 = vsel %vm706, %v1131, %v1130
    %v1133 = vrot.slane %v985, 2
    %v1134 = vsel %vm709, %v1133, %v1132
    %v1135 = vrot.slane %v989, 1
    %v1136 = vsel %vm712, %v1135, %v1134
    %v1137 = vsel %vm715, %v993, %v1136
    %v1138 = vrot.slane %v997, 7
    %v1139 = vsel %vm718, %v1138, %v1137
    %v1140 = vrot.slane %v1001, 6
    %v1141 = vsel %vm1099, %v1140, %v1139
    %v1142 = vrot.slane %v1005, 5
    %v1143 = vsel %vm702, %v1142, %v1141
    %v1145 = vmul.f32 %v1128, %v1143
    %v1146 = vadd.f32 %v1125, %v1145
    %1147 = vset.pattern.permute.xlu0 3
    %1148 = vperm.xlu0 %1147, %v1074
    %v1149 = vpop.permute.xlu0 %1148
    %v1159 = vrot.slane %v978, 2
    %v1160 = vrot.slane %v982, 1
    %v1161 = vsel %vm706, %v1160, %v1159
    %v1162 = vsel %vm709, %v986, %v1161
    %v1163 = vrot.slane %v990, 7
    %v1164 = vsel %vm712, %v1163, %v1162
    %v1165 = vrot.slane %v994, 6
    %v1166 = vsel %vm715, %v1165, %v1164
    %v1167 = vrot.slane %v998, 5
    %v1168 = vsel %vm718, %v1167, %v1166
    %v1169 = vrot.slane %v1002, 4
    %v1170 = vsel %vm1099, %v1169, %v1168
    %v1171 = vrot.slane %v1006, 3
    %v1172 = vsel %vm702, %v1171, %v1170
    %v1174 = vmul.f32 %v1149, %v1172
    %v1175 = vadd.f32 %v1146, %v1174
    %1176 = vset.pattern.permute.xlu0 4
    %1177 = vperm.xlu0 %1176, %v1074
    %v1178 = vpop.permute.xlu0 %1177
    %v1180 = vrot.slane %v978, 4
    %v1181 = vrot.slane %v982, 3
    %v1182 = vsel %vm706, %v1181, %v1180
    %v1183 = vrot.slane %v986, 2
    %v1184 = vsel %vm709, %v1183, %v1182
    %v1185 = vrot.slane %v990, 1
    %v1186 = vsel %vm712, %v1185, %v1184
    %v1187 = vsel %vm715, %v994, %v1186
    %v1188 = vrot.slane %v998, 7
    %v1189 = vsel %vm718, %v1188, %v1187
    %v1190 = vrot.slane %v1002, 6
    %v1191 = vsel %vm1099, %v1190, %v1189
    %v1192 = vrot.slane %v1006, 5
    %v1193 = vsel %vm702, %v1192, %v1191
    %v1195 = vmul.f32 %v1178, %v1193
    %v1196 = vadd.f32 %v1175, %v1195
    %1197 = vset.pattern.permute.xlu0 5
    %1198 = vperm.xlu0 %1197, %v1074
    %v1199 = vpop.permute.xlu0 %1198
    %v1201 = vrot.slane %v978, 6
    %v1202 = vrot.slane %v982, 5
    %v1203 = vsel %vm706, %v1202, %v1201
    %v1204 = vrot.slane %v986, 4
    %v1205 = vsel %vm709, %v1204, %v1203
    %v1206 = vrot.slane %v990, 3
    %v1207 = vsel %vm712, %v1206, %v1205
    %v1208 = vrot.slane %v994, 2
    %v1209 = vsel %vm715, %v1208, %v1207
    %v1210 = vrot.slane %v998, 1
    %v1211 = vsel %vm718, %v1210, %v1209
    %v1212 = vsel %vm1099, %v1002, %v1211
    %v1213 = vrot.slane %v1006, 7
    %v1214 = vsel %vm702, %v1213, %v1212
    %v1216 = vmul.f32 %v1199, %v1214
    %v1217 = vadd.f32 %v1196, %v1216
    %1218 = vset.pattern.permute.xlu0 6
    %1219 = vperm.xlu0 %1218, %v1074
    %v1220 = vpop.permute.xlu0 %1219
    %v1230 = vrot.slane %v979, 4
    %v1231 = vrot.slane %v983, 3
    %v1232 = vsel %vm706, %v1231, %v1230
    %v1233 = vrot.slane %v987, 2
    %v1234 = vsel %vm709, %v1233, %v1232
    %v1235 = vrot.slane %v991, 1
    %v1236 = vsel %vm712, %v1235, %v1234
    %v1237 = vsel %vm715, %v995, %v1236
    %v1238 = vrot.slane %v999, 7
    %v1239 = vsel %vm718, %v1238, %v1237
    %v1240 = vrot.slane %v1003, 6
    %v1241 = vsel %vm1099, %v1240, %v1239
    %v1242 = vrot.slane %v1007, 5
    %v1243 = vsel %vm702, %v1242, %v1241
    %v1245 = vmul.f32 %v1220, %v1243
    %v1246 = vadd.f32 %v1217, %v1245
    %1247 = vset.pattern.permute.xlu0 7
    %1248 = vperm.xlu0 %1247, %v1074
    %v1249 = vpop.permute.xlu0 %1248
    %v1251 = vrot.slane %v979, 6
    %v1252 = vrot.slane %v983, 5
    %v1253 = vsel %vm706, %v1252, %v1251
    %v1254 = vrot.slane %v987, 4
    %v1255 = vsel %vm709, %v1254, %v1253
    %v1256 = vrot.slane %v991, 3
    %v1257 = vsel %vm712, %v1256, %v1255
    %v1258 = vrot.slane %v995, 2
    %v1259 = vsel %vm715, %v1258, %v1257
    %v1260 = vrot.slane %v999, 1
    %v1261 = vsel %vm718, %v1260, %v1259
    %v1262 = vsel %vm1099, %v1003, %v1261
    %v1263 = vrot.slane %v1007, 7
    %v1264 = vsel %vm702, %v1263, %v1262
    %v1266 = vmul.f32 %v1249, %v1264
    %v1267 = vadd.f32 %v1246, %v1266
    %1268 = vset.pattern.permute.xlu0 8
    %1269 = vperm.xlu0 %1268, %v1074
    %v1270 = vpop.permute.xlu0 %1269
    %v1280 = vrot.slane %v984, 7
    %v1281 = vsel %vm706, %v1280, %v980
    %v1282 = vrot.slane %v988, 6
    %v1283 = vsel %vm709, %v1282, %v1281
    %v1284 = vrot.slane %v992, 5
    %v1285 = vsel %vm712, %v1284, %v1283
    %v1286 = vrot.slane %v996, 4
    %v1287 = vsel %vm715, %v1286, %v1285
    %v1288 = vrot.slane %v1000, 3
    %v1289 = vsel %vm718, %v1288, %v1287
    %v1290 = vrot.slane %v1004, 2
    %v1291 = vsel %vm1099, %v1290, %v1289
    %v1292 = vrot.slane %v1008, 1
    %v1293 = vsel %vm702, %v1292, %v1291
    %v1295 = vmul.f32 %v1270, %v1293
    %v1296 = vadd.f32 %v1267, %v1295
    %vm1297 = vcmask 64512
    %v1299 = vsel %vm1297, %v1073, 0
    %1301 = vmatprep.subr.mxu0 0.0
    %1302 = vmatpush1.msra.mxu0 %v1296
    %1303 = vmatprep.subr.mxu0 0.0
    %1304 = vmatpush1.msra.mxu0 0.0
    %1305 = vmatprep.subr.mxu0 0.0
    %1306 = vmatpush1.msra.mxu0 0.0
    %1307 = vmatprep.subr.mxu0 0.0
    %1308 = vmatpush1.msra.mxu0 0.0
    %1309 = vmatprep.subr.mxu0 0.0
    %1310 = vmatpush1.msra.mxu0 0.0
    %1311 = vmatprep.subr.mxu0 0.0
    %1312 = vmatpush1.msra.mxu0 0.0
    %1313 = vmatprep.subr.mxu0 0.0
    %1314 = vmatpush1.msra.mxu0 0.0
    %1315 = vmatprep.subr.mxu0 0.0
    %1316 = vmatpush1.msra.mxu0 0.0
    %1317 = vmatprep.subr.mxu0 0.0
    %1318 = vmatpush1.msra.mxu0 0.0
    %1319 = vmatprep.subr.mxu0 0.0
    %1320 = vmatpush1.msra.mxu0 0.0
    %1321 = vmatprep.subr.mxu0 0.0
    %1322 = vmatpush1.msra.mxu0 0.0
    %1323 = vmatprep.subr.mxu0 0.0
    %1324 = vmatpush1.msra.mxu0 0.0
    %1325 = vmatprep.subr.mxu0 0.0
    %1326 = vmatpush1.msra.mxu0 0.0
    %1327 = vmatprep.subr.mxu0 0.0
    %1328 = vmatpush1.msra.mxu0 0.0
    %1329 = vmatprep.subr.mxu0 0.0
    %1330 = vmatpush1.msra.mxu0 0.0
    %1331 = vmatprep.subr.mxu0 0.0
    %1332 = vmatpush1.msra.mxu0 0.0
    %1333 = vmatprep.subr.mxu0 0.0
    %1334 = vmatpush1.msra.mxu0 0.0
    %1335 = vmatprep.subr.mxu0 0.0
    %1336 = vmatpush1.msra.mxu0 0.0
    %1337 = vmatprep.subr.mxu0 0.0
    %1338 = vmatpush1.msra.mxu0 0.0
    %1339 = vmatprep.subr.mxu0 0.0
    %1340 = vmatpush1.msra.mxu0 0.0
    %1341 = vmatprep.subr.mxu0 0.0
    %1342 = vmatpush1.msra.mxu0 0.0
    %1343 = vmatprep.subr.mxu0 0.0
    %1344 = vmatpush1.msra.mxu0 0.0
    %1345 = vmatprep.subr.mxu0 0.0
    %1346 = vmatpush1.msra.mxu0 0.0
    %1347 = vmatprep.subr.mxu0 0.0
    %1348 = vmatpush1.msra.mxu0 0.0
    %1349 = vmatprep.subr.mxu0 0.0
    %1350 = vmatpush1.msra.mxu0 0.0
    %1351 = vmatprep.subr.mxu0 0.0
    %1352 = vmatpush1.msra.mxu0 0.0
    %1353 = vmatprep.subr.mxu0 0.0
    %1354 = vmatpush1.msra.mxu0 0.0
    %1355 = vmatprep.subr.mxu0 0.0
    %1356 = vmatpush1.msra.mxu0 0.0
    %1357 = vmatprep.subr.mxu0 0.0
    %1358 = vmatpush1.msra.mxu0 0.0
    %1359 = vmatprep.subr.mxu0 0.0
    %1360 = vmatpush1.msra.mxu0 0.0
    %1361 = vmatprep.subr.mxu0 0.0
    %1362 = vmatpush1.msra.mxu0 0.0
    %1363 = vmatprep.subr.mxu0 0.0
    %1364 = vmatpush1.msra.mxu0 0.0
    %1365 = vmatprep.mubr.f32.mxu0 0.0
    %1366 = vmatmul.mubr.f32.gmra.mrb[0].mxu0 %v1299
    %v1367 = vpop.f32.mrb[0].mxu0
    %v1368 = vadd.f32 0.0, %v1367
    %v1369 = vpop.f32.mrb[0].mxu0
    %1370 = vdwg.mxu0
    %s1371 = sld [smem:[#allocation2 + $0x6]]
    %1372 = vadd.xlane.f32.xlu0 %v1368
    %v1373 = vpop.xlane.xlu0 %1372
    %v1374 = vmul.f32 %v1373, %v730
    %v1375 = vsub.f32 %v1368, %v1374
    %v1376 = vmul.f32 %v1375, %v1375
    %1377 = vadd.xlane.f32.xlu0 %v1376
    %v1378 = vpop.xlane.xlu0 %1377
    %v1379 = vmul.f32 %v1378, %v730
    %v1380 = vadd.f32 %v1379, 1e-05
    %v1381 = vrsqrt.pop %v1380
    %v1382 = vmul.f32 %v1375, %v1381
    %v1383 = vstv %s1371
    %v1384 = vmul.f32 %v1383, %v1382
    %v1386 = vrot.slane %v1384, 2
    %v1387 = vrot.slane %v1384, 3
    %v1388 = vrot.slane %v1384, 4
    %v1389 = vrot.slane %v1384, 5
    %v1390 = vrot.slane %v1384, 6
    %v1391 = vrot.slane %v1384, 7
    %v1392 = vrot.slane %v1384, 1
    %v1401 = vadd.f32 %v969, %v1386
    %v1402 = vadd.f32 %v970, %v1387
    %v1403 = vadd.f32 %v971, %v1388
    %v1404 = vadd.f32 %v972, %v1389
    %v1405 = vadd.f32 %v973, %v1390
    %v1406 = vadd.f32 %v974, %v1391
    %v1407 = vadd.f32 %v975, %v1384
    %v1408 = vadd.f32 %v976, %v1392
    %v1409 = vld [vmem:[%s9] sm:$0xff]
    %v1410 = vld [vmem:[%s8] sm:$0xff]
    %1412 = vset.pattern.permute.xlu0 0
    %1413 = vperm.xlu0 %1412, %v1410
    %v1414 = vpop.permute.xlu0 %1413
    %v1424 = vrot.slane %v1045, 7
    %v1425 = vsel %vm706, %v1424, %v1041
    %v1426 = vrot.slane %v1049, 6
    %v1427 = vsel %vm709, %v1426, %v1425
    %v1428 = vrot.slane %v1053, 5
    %v1429 = vsel %vm712, %v1428, %v1427
    %v1430 = vrot.slane %v1057, 4
    %v1431 = vsel %vm715, %v1430, %v1429
    %v1432 = vrot.slane %v1061, 3
    %v1433 = vsel %vm718, %v1432, %v1431
    %v1434 = vrot.slane %v1065, 2
    %v1435 = vsel %vm1099, %v1434, %v1433
    %v1436 = vrot.slane %v1069, 1
    %v1437 = vsel %vm702, %v1436, %v1435
    %v1439 = vmul.f32 %v1414, %v1437
    %1440 = vset.pattern.permute.xlu0 1
    %1441 = vperm.xlu0 %1440, %v1410
    %v1442 = vpop.permute.xlu0 %1441
    %v1444 = vrot.slane %v1041, 1
    %v1445 = vsel %vm706, %v1045, %v1444
    %v1446 = vrot.slane %v1049, 7
    %v1447 = vsel %vm709, %v1446, %v1445
    %v1448 = vrot.slane %v1053, 6
    %v1449 = vsel %vm712, %v1448, %v1447
    %v1450 = vrot.slane %v1057, 5
    %v1451 = vsel %vm715, %v1450, %v1449
    %v1452 = vrot.slane %v1061, 4
    %v1453 = vsel %vm718, %v1452, %v1451
    %v1454 = vrot.slane %v1065, 3
    %v1455 = vsel %vm1099, %v1454, %v1453
    %v1456 = vrot.slane %v1069, 2
    %v1457 = vsel %vm702, %v1456, %v1455
    %v1459 = vmul.f32 %v1442, %v1457
    %v1460 = vadd.f32 %v1439, %v1459
    %1461 = vset.pattern.permute.xlu0 2
    %1462 = vperm.xlu0 %1461, %v1410
    %v1463 = vpop.permute.xlu0 %1462
    %v1465 = vrot.slane %v1041, 2
    %v1466 = vrot.slane %v1045, 1
    %v1467 = vsel %vm706, %v1466, %v1465
    %v1468 = vsel %vm709, %v1049, %v1467
    %v1469 = vrot.slane %v1053, 7
    %v1470 = vsel %vm712, %v1469, %v1468
    %v1471 = vrot.slane %v1057, 6
    %v1472 = vsel %vm715, %v1471, %v1470
    %v1473 = vrot.slane %v1061, 5
    %v1474 = vsel %vm718, %v1473, %v1472
    %v1475 = vrot.slane %v1065, 4
    %v1476 = vsel %vm1099, %v1475, %v1474
    %v1477 = vrot.slane %v1069, 3
    %v1478 = vsel %vm702, %v1477, %v1476
    %v1480 = vmul.f32 %v1463, %v1478
    %v1481 = vadd.f32 %v1460, %v1480
    %1482 = vset.pattern.permute.xlu0 3
    %1483 = vperm.xlu0 %1482, %v1410
    %v1484 = vpop.permute.xlu0 %1483
    %v1486 = vrot.slane %v1041, 3
    %v1487 = vrot.slane %v1045, 2
    %v1488 = vsel %vm706, %v1487, %v1486
    %v1489 = vrot.slane %v1049, 1
    %v1490 = vsel %vm709, %v1489, %v1488
    %v1491 = vsel %vm712, %v1053, %v1490
    %v1492 = vrot.slane %v1057, 7
    %v1493 = vsel %vm715, %v1492, %v1491
    %v1494 = vrot.slane %v1061, 6
    %v1495 = vsel %vm718, %v1494, %v1493
    %v1496 = vrot.slane %v1065, 5
    %v1497 = vsel %vm1099, %v1496, %v1495
    %v1498 = vrot.slane %v1069, 4
    %v1499 = vsel %vm702, %v1498, %v1497
    %v1501 = vmul.f32 %v1484, %v1499
    %v1502 = vadd.f32 %v1481, %v1501
    %1503 = vset.pattern.permute.xlu0 4
    %1504 = vperm.xlu0 %1503, %v1410
    %v1505 = vpop.permute.xlu0 %1504
    %v1507 = vrot.slane %v1041, 4
    %v1508 = vrot.slane %v1045, 3
    %v1509 = vsel %vm706, %v1508, %v1507
    %v1510 = vrot.slane %v1049, 2
    %v1511 = vsel %vm709, %v1510, %v1509
    %v1512 = vrot.slane %v1053, 1
    %v1513 = vsel %vm712, %v1512, %v1511
    %v1514 = vsel %vm715, %v1057, %v1513
    %v1515 = vrot.slane %v1061, 7
    %v1516 = vsel %vm718, %v1515, %v1514
    %v1517 = vrot.slane %v1065, 6
    %v1518 = vsel %vm1099, %v1517, %v1516
    %v1519 = vrot.slane %v1069, 5
    %v1520 = vsel %vm702, %v1519, %v1518
    %v1522 = vmul.f32 %v1505, %v1520
    %v1523 = vadd.f32 %v1502, %v1522
    %1524 = vset.pattern.permute.xlu0 5
    %1525 = vperm.xlu0 %1524, %v1410
    %v1526 = vpop.permute.xlu0 %1525
    %v1528 = vrot.slane %v1041, 5
    %v1529 = vrot.slane %v1045, 4
    %v1530 = vsel %vm706, %v1529, %v1528
    %v1531 = vrot.slane %v1049, 3
    %v1532 = vsel %vm709, %v1531, %v1530
    %v1533 = vrot.slane %v1053, 2
    %v1534 = vsel %vm712, %v1533, %v1532
    %v1535 = vrot.slane %v1057, 1
    %v1536 = vsel %vm715, %v1535, %v1534
    %v1537 = vsel %vm718, %v1061, %v1536
    %v1538 = vrot.slane %v1065, 7
    %v1539 = vsel %vm1099, %v1538, %v1537
    %v1540 = vrot.slane %v1069, 6
    %v1541 = vsel %vm702, %v1540, %v1539
    %v1543 = vmul.f32 %v1526, %v1541
    %v1544 = vadd.f32 %v1523, %v1543
    %1545 = vset.pattern.permute.xlu0 6
    %1546 = vperm.xlu0 %1545, %v1410
    %v1547 = vpop.permute.xlu0 %1546
    %v1549 = vrot.slane %v1041, 6
    %v1550 = vrot.slane %v1045, 5
    %v1551 = vsel %vm706, %v1550, %v1549
    %v1552 = vrot.slane %v1049, 4
    %v1553 = vsel %vm709, %v1552, %v1551
    %v1554 = vrot.slane %v1053, 3
    %v1555 = vsel %vm712, %v1554, %v1553
    %v1556 = vrot.slane %v1057, 2
    %v1557 = vsel %vm715, %v1556, %v1555
    %v1558 = vrot.slane %v1061, 1
    %v1559 = vsel %vm718, %v1558, %v1557
    %v1560 = vsel %vm1099, %v1065, %v1559
    %v1561 = vrot.slane %v1069, 7
    %v1562 = vsel %vm702, %v1561, %v1560
    %v1564 = vmul.f32 %v1547, %v1562
    %v1565 = vadd.f32 %v1544, %v1564
    %1566 = vset.pattern.permute.xlu0 7
    %1567 = vperm.xlu0 %1566, %v1410
    %v1568 = vpop.permute.xlu0 %1567
    %v1570 = vrot.slane %v1041, 7
    %v1571 = vrot.slane %v1045, 6
    %v1572 = vsel %vm706, %v1571, %v1570
    %v1573 = vrot.slane %v1049, 5
    %v1574 = vsel %vm709, %v1573, %v1572
    %v1575 = vrot.slane %v1053, 4
    %v1576 = vsel %vm712, %v1575, %v1574
    %v1577 = vrot.slane %v1057, 3
    %v1578 = vsel %vm715, %v1577, %v1576
    %v1579 = vrot.slane %v1061, 2
    %v1580 = vsel %vm718, %v1579, %v1578
    %v1581 = vrot.slane %v1065, 1
    %v1582 = vsel %vm1099, %v1581, %v1580
    %v1583 = vsel %vm702, %v1069, %v1582
    %v1585 = vmul.f32 %v1568, %v1583
    %v1586 = vadd.f32 %v1565, %v1585
    %1587 = vset.pattern.permute.xlu0 8
    %1588 = vperm.xlu0 %1587, %v1410
    %v1589 = vpop.permute.xlu0 %1588
    %v1599 = vrot.slane %v1046, 7
    %v1600 = vsel %vm706, %v1599, %v1042
    %v1601 = vrot.slane %v1050, 6
    %v1602 = vsel %vm709, %v1601, %v1600
    %v1603 = vrot.slane %v1054, 5
    %v1604 = vsel %vm712, %v1603, %v1602
    %v1605 = vrot.slane %v1058, 4
    %v1606 = vsel %vm715, %v1605, %v1604
    %v1607 = vrot.slane %v1062, 3
    %v1608 = vsel %vm718, %v1607, %v1606
    %v1609 = vrot.slane %v1066, 2
    %v1610 = vsel %vm1099, %v1609, %v1608
    %v1611 = vrot.slane %v1070, 1
    %v1612 = vsel %vm702, %v1611, %v1610
    %v1614 = vmul.f32 %v1589, %v1612
    %v1615 = vadd.f32 %v1586, %v1614
    %1616 = vset.pattern.permute.xlu0 9
    %1617 = vperm.xlu0 %1616, %v1410
    %v1618 = vpop.permute.xlu0 %1617
    %v1620 = vrot.slane %v1042, 1
    %v1621 = vsel %vm706, %v1046, %v1620
    %v1622 = vrot.slane %v1050, 7
    %v1623 = vsel %vm709, %v1622, %v1621
    %v1624 = vrot.slane %v1054, 6
    %v1625 = vsel %vm712, %v1624, %v1623
    %v1626 = vrot.slane %v1058, 5
    %v1627 = vsel %vm715, %v1626, %v1625
    %v1628 = vrot.slane %v1062, 4
    %v1629 = vsel %vm718, %v1628, %v1627
    %v1630 = vrot.slane %v1066, 3
    %v1631 = vsel %vm1099, %v1630, %v1629
    %v1632 = vrot.slane %v1070, 2
    %v1633 = vsel %vm702, %v1632, %v1631
    %v1635 = vmul.f32 %v1618, %v1633
    %v1636 = vadd.f32 %v1615, %v1635
    %1637 = vset.pattern.permute.xlu0 10
    %1638 = vperm.xlu0 %1637, %v1410
    %v1639 = vpop.permute.xlu0 %1638
    %v1641 = vrot.slane %v1042, 2
    %v1642 = vrot.slane %v1046, 1
    %v1643 = vsel %vm706, %v1642, %v1641
    %v1644 = vsel %vm709, %v1050, %v1643
    %v1645 = vrot.slane %v1054, 7
    %v1646 = vsel %vm712, %v1645, %v1644
    %v1647 = vrot.slane %v1058, 6
    %v1648 = vsel %vm715, %v1647, %v1646
    %v1649 = vrot.slane %v1062, 5
    %v1650 = vsel %vm718, %v1649, %v1648
    %v1651 = vrot.slane %v1066, 4
    %v1652 = vsel %vm1099, %v1651, %v1650
    %v1653 = vrot.slane %v1070, 3
    %v1654 = vsel %vm702, %v1653, %v1652
    %v1656 = vmul.f32 %v1639, %v1654
    %v1657 = vadd.f32 %v1636, %v1656
    %1658 = vset.pattern.permute.xlu0 11
    %1659 = vperm.xlu0 %1658, %v1410
    %v1660 = vpop.permute.xlu0 %1659
    %v1662 = vrot.slane %v1042, 3
    %v1663 = vrot.slane %v1046, 2
    %v1664 = vsel %vm706, %v1663, %v1662
    %v1665 = vrot.slane %v1050, 1
    %v1666 = vsel %vm709, %v1665, %v1664
    %v1667 = vsel %vm712, %v1054, %v1666
    %v1668 = vrot.slane %v1058, 7
    %v1669 = vsel %vm715, %v1668, %v1667
    %v1670 = vrot.slane %v1062, 6
    %v1671 = vsel %vm718, %v1670, %v1669
    %v1672 = vrot.slane %v1066, 5
    %v1673 = vsel %vm1099, %v1672, %v1671
    %v1674 = vrot.slane %v1070, 4
    %v1675 = vsel %vm702, %v1674, %v1673
    %v1677 = vmul.f32 %v1660, %v1675
    %v1678 = vadd.f32 %v1657, %v1677
    %1679 = vset.pattern.permute.xlu0 12
    %1680 = vperm.xlu0 %1679, %v1410
    %v1681 = vpop.permute.xlu0 %1680
    %v1683 = vrot.slane %v1042, 4
    %v1684 = vrot.slane %v1046, 3
    %v1685 = vsel %vm706, %v1684, %v1683
    %v1686 = vrot.slane %v1050, 2
    %v1687 = vsel %vm709, %v1686, %v1685
    %v1688 = vrot.slane %v1054, 1
    %v1689 = vsel %vm712, %v1688, %v1687
    %v1690 = vsel %vm715, %v1058, %v1689
    %v1691 = vrot.slane %v1062, 7
    %v1692 = vsel %vm718, %v1691, %v1690
    %v1693 = vrot.slane %v1066, 6
    %v1694 = vsel %vm1099, %v1693, %v1692
    %v1695 = vrot.slane %v1070, 5
    %v1696 = vsel %vm702, %v1695, %v1694
    %v1698 = vmul.f32 %v1681, %v1696
    %v1699 = vadd.f32 %v1678, %v1698
    %1700 = vset.pattern.permute.xlu0 13
    %1701 = vperm.xlu0 %1700, %v1410
    %v1702 = vpop.permute.xlu0 %1701
    %v1704 = vrot.slane %v1042, 5
    %v1705 = vrot.slane %v1046, 4
    %v1706 = vsel %vm706, %v1705, %v1704
    %v1707 = vrot.slane %v1050, 3
    %v1708 = vsel %vm709, %v1707, %v1706
    %v1709 = vrot.slane %v1054, 2
    %v1710 = vsel %vm712, %v1709, %v1708
    %v1711 = vrot.slane %v1058, 1
    %v1712 = vsel %vm715, %v1711, %v1710
    %v1713 = vsel %vm718, %v1062, %v1712
    %v1714 = vrot.slane %v1066, 7
    %v1715 = vsel %vm1099, %v1714, %v1713
    %v1716 = vrot.slane %v1070, 6
    %v1717 = vsel %vm702, %v1716, %v1715
    %v1719 = vmul.f32 %v1702, %v1717
    %v1720 = vadd.f32 %v1699, %v1719
    %1721 = vset.pattern.permute.xlu0 14
    %1722 = vperm.xlu0 %1721, %v1410
    %v1723 = vpop.permute.xlu0 %1722
    %v1725 = vrot.slane %v1042, 6
    %v1726 = vrot.slane %v1046, 5
    %v1727 = vsel %vm706, %v1726, %v1725
    %v1728 = vrot.slane %v1050, 4
    %v1729 = vsel %vm709, %v1728, %v1727
    %v1730 = vrot.slane %v1054, 3
    %v1731 = vsel %vm712, %v1730, %v1729
    %v1732 = vrot.slane %v1058, 2
    %v1733 = vsel %vm715, %v1732, %v1731
    %v1734 = vrot.slane %v1062, 1
    %v1735 = vsel %vm718, %v1734, %v1733
    %v1736 = vsel %vm1099, %v1066, %v1735
    %v1737 = vrot.slane %v1070, 7
    %v1738 = vsel %vm702, %v1737, %v1736
    %v1740 = vmul.f32 %v1723, %v1738
    %v1741 = vadd.f32 %v1720, %v1740
    %1742 = vset.pattern.permute.xlu0 15
    %1743 = vperm.xlu0 %1742, %v1410
    %v1744 = vpop.permute.xlu0 %1743
    %v1746 = vrot.slane %v1042, 7
    %v1747 = vrot.slane %v1046, 6
    %v1748 = vsel %vm706, %v1747, %v1746
    %v1749 = vrot.slane %v1050, 5
    %v1750 = vsel %vm709, %v1749, %v1748
    %v1751 = vrot.slane %v1054, 4
    %v1752 = vsel %vm712, %v1751, %v1750
    %v1753 = vrot.slane %v1058, 3
    %v1754 = vsel %vm715, %v1753, %v1752
    %v1755 = vrot.slane %v1062, 2
    %v1756 = vsel %vm718, %v1755, %v1754
    %v1757 = vrot.slane %v1066, 1
    %v1758 = vsel %vm1099, %v1757, %v1756
    %v1759 = vsel %vm702, %v1070, %v1758
    %v1761 = vmul.f32 %v1744, %v1759
    %v1762 = vadd.f32 %v1741, %v1761
    %1763 = vset.pattern.permute.xlu0 16
    %1764 = vperm.xlu0 %1763, %v1410
    %v1765 = vpop.permute.xlu0 %1764
    %v1775 = vrot.slane %v1047, 7
    %v1776 = vsel %vm706, %v1775, %v1043
    %v1777 = vrot.slane %v1051, 6
    %v1778 = vsel %vm709, %v1777, %v1776
    %v1779 = vrot.slane %v1055, 5
    %v1780 = vsel %vm712, %v1779, %v1778
    %v1781 = vrot.slane %v1059, 4
    %v1782 = vsel %vm715, %v1781, %v1780
    %v1783 = vrot.slane %v1063, 3
    %v1784 = vsel %vm718, %v1783, %v1782
    %v1785 = vrot.slane %v1067, 2
    %v1786 = vsel %vm1099, %v1785, %v1784
    %v1787 = vrot.slane %v1071, 1
    %v1788 = vsel %vm702, %v1787, %v1786
    %v1790 = vmul.f32 %v1765, %v1788
    %v1791 = vadd.f32 %v1762, %v1790
    %1792 = vset.pattern.permute.xlu0 17
    %1793 = vperm.xlu0 %1792, %v1410
    %v1794 = vpop.permute.xlu0 %1793
    %v1796 = vrot.slane %v1043, 1
    %v1797 = vsel %vm706, %v1047, %v1796
    %v1798 = vrot.slane %v1051, 7
    %v1799 = vsel %vm709, %v1798, %v1797
    %v1800 = vrot.slane %v1055, 6
    %v1801 = vsel %vm712, %v1800, %v1799
    %v1802 = vrot.slane %v1059, 5
    %v1803 = vsel %vm715, %v1802, %v1801
    %v1804 = vrot.slane %v1063, 4
    %v1805 = vsel %vm718, %v1804, %v1803
    %v1806 = vrot.slane %v1067, 3
    %v1807 = vsel %vm1099, %v1806, %v1805
    %v1808 = vrot.slane %v1071, 2
    %v1809 = vsel %vm702, %v1808, %v1807
    %v1811 = vmul.f32 %v1794, %v1809
    %v1812 = vadd.f32 %v1791, %v1811
    %1813 = vset.pattern.permute.xlu0 18
    %1814 = vperm.xlu0 %1813, %v1410
    %v1815 = vpop.permute.xlu0 %1814
    %v1817 = vrot.slane %v1043, 2
    %v1818 = vrot.slane %v1047, 1
    %v1819 = vsel %vm706, %v1818, %v1817
    %v1820 = vsel %vm709, %v1051, %v1819
    %v1821 = vrot.slane %v1055, 7
    %v1822 = vsel %vm712, %v1821, %v1820
    %v1823 = vrot.slane %v1059, 6
    %v1824 = vsel %vm715, %v1823, %v1822
    %v1825 = vrot.slane %v1063, 5
    %v1826 = vsel %vm718, %v1825, %v1824
    %v1827 = vrot.slane %v1067, 4
    %v1828 = vsel %vm1099, %v1827, %v1826
    %v1829 = vrot.slane %v1071, 3
    %v1830 = vsel %vm702, %v1829, %v1828
    %v1832 = vmul.f32 %v1815, %v1830
    %v1833 = vadd.f32 %v1812, %v1832
    %1834 = vset.pattern.permute.xlu0 19
    %1835 = vperm.xlu0 %1834, %v1410
    %v1836 = vpop.permute.xlu0 %1835
    %v1838 = vrot.slane %v1043, 3
    %v1839 = vrot.slane %v1047, 2
    %v1840 = vsel %vm706, %v1839, %v1838
    %v1841 = vrot.slane %v1051, 1
    %v1842 = vsel %vm709, %v1841, %v1840
    %v1843 = vsel %vm712, %v1055, %v1842
    %v1844 = vrot.slane %v1059, 7
    %v1845 = vsel %vm715, %v1844, %v1843
    %v1846 = vrot.slane %v1063, 6
    %v1847 = vsel %vm718, %v1846, %v1845
    %v1848 = vrot.slane %v1067, 5
    %v1849 = vsel %vm1099, %v1848, %v1847
    %v1850 = vrot.slane %v1071, 4
    %v1851 = vsel %vm702, %v1850, %v1849
    %v1853 = vmul.f32 %v1836, %v1851
    %v1854 = vadd.f32 %v1833, %v1853
    %1855 = vset.pattern.permute.xlu0 20
    %1856 = vperm.xlu0 %1855, %v1410
    %v1857 = vpop.permute.xlu0 %1856
    %v1859 = vrot.slane %v1043, 4
    %v1860 = vrot.slane %v1047, 3
    %v1861 = vsel %vm706, %v1860, %v1859
    %v1862 = vrot.slane %v1051, 2
    %v1863 = vsel %vm709, %v1862, %v1861
    %v1864 = vrot.slane %v1055, 1
    %v1865 = vsel %vm712, %v1864, %v1863
    %v1866 = vsel %vm715, %v1059, %v1865
    %v1867 = vrot.slane %v1063, 7
    %v1868 = vsel %vm718, %v1867, %v1866
    %v1869 = vrot.slane %v1067, 6
    %v1870 = vsel %vm1099, %v1869, %v1868
    %v1871 = vrot.slane %v1071, 5
    %v1872 = vsel %vm702, %v1871, %v1870
    %v1874 = vmul.f32 %v1857, %v1872
    %v1875 = vadd.f32 %v1854, %v1874
    %1876 = vset.pattern.permute.xlu0 21
    %1877 = vperm.xlu0 %1876, %v1410
    %v1878 = vpop.permute.xlu0 %1877
    %v1880 = vrot.slane %v1043, 5
    %v1881 = vrot.slane %v1047, 4
    %v1882 = vsel %vm706, %v1881, %v1880
    %v1883 = vrot.slane %v1051, 3
    %v1884 = vsel %vm709, %v1883, %v1882
    %v1885 = vrot.slane %v1055, 2
    %v1886 = vsel %vm712, %v1885, %v1884
    %v1887 = vrot.slane %v1059, 1
    %v1888 = vsel %vm715, %v1887, %v1886
    %v1889 = vsel %vm718, %v1063, %v1888
    %v1890 = vrot.slane %v1067, 7
    %v1891 = vsel %vm1099, %v1890, %v1889
    %v1892 = vrot.slane %v1071, 6
    %v1893 = vsel %vm702, %v1892, %v1891
    %v1895 = vmul.f32 %v1878, %v1893
    %v1896 = vadd.f32 %v1875, %v1895
    %1897 = vset.pattern.permute.xlu0 22
    %1898 = vperm.xlu0 %1897, %v1410
    %v1899 = vpop.permute.xlu0 %1898
    %v1901 = vrot.slane %v1043, 6
    %v1902 = vrot.slane %v1047, 5
    %v1903 = vsel %vm706, %v1902, %v1901
    %v1904 = vrot.slane %v1051, 4
    %v1905 = vsel %vm709, %v1904, %v1903
    %v1906 = vrot.slane %v1055, 3
    %v1907 = vsel %vm712, %v1906, %v1905
    %v1908 = vrot.slane %v1059, 2
    %v1909 = vsel %vm715, %v1908, %v1907
    %v1910 = vrot.slane %v1063, 1
    %v1911 = vsel %vm718, %v1910, %v1909
    %v1912 = vsel %vm1099, %v1067, %v1911
    %v1913 = vrot.slane %v1071, 7
    %v1914 = vsel %vm702, %v1913, %v1912
    %v1916 = vmul.f32 %v1899, %v1914
    %v1917 = vadd.f32 %v1896, %v1916
    %1918 = vset.pattern.permute.xlu0 23
    %1919 = vperm.xlu0 %1918, %v1410
    %v1920 = vpop.permute.xlu0 %1919
    %v1922 = vrot.slane %v1043, 7
    %v1923 = vrot.slane %v1047, 6
    %v1924 = vsel %vm706, %v1923, %v1922
    %v1925 = vrot.slane %v1051, 5
    %v1926 = vsel %vm709, %v1925, %v1924
    %v1927 = vrot.slane %v1055, 4
    %v1928 = vsel %vm712, %v1927, %v1926
    %v1929 = vrot.slane %v1059, 3
    %v1930 = vsel %vm715, %v1929, %v1928
    %v1931 = vrot.slane %v1063, 2
    %v1932 = vsel %vm718, %v1931, %v1930
    %v1933 = vrot.slane %v1067, 1
    %v1934 = vsel %vm1099, %v1933, %v1932
    %v1935 = vsel %vm702, %v1071, %v1934
    %v1937 = vmul.f32 %v1920, %v1935
    %v1938 = vadd.f32 %v1917, %v1937
    %1939 = vset.pattern.permute.xlu0 24
    %1940 = vperm.xlu0 %1939, %v1410
    %v1941 = vpop.permute.xlu0 %1940
    %v1951 = vrot.slane %v1048, 7
    %v1952 = vsel %vm706, %v1951, %v1044
    %v1953 = vrot.slane %v1052, 6
    %v1954 = vsel %vm709, %v1953, %v1952
    %v1955 = vrot.slane %v1056, 5
    %v1956 = vsel %vm712, %v1955, %v1954
    %v1957 = vrot.slane %v1060, 4
    %v1958 = vsel %vm715, %v1957, %v1956
    %v1959 = vrot.slane %v1064, 3
    %v1960 = vsel %vm718, %v1959, %v1958
    %v1961 = vrot.slane %v1068, 2
    %v1962 = vsel %vm1099, %v1961, %v1960
    %v1963 = vrot.slane %v1072, 1
    %v1964 = vsel %vm702, %v1963, %v1962
    %v1966 = vmul.f32 %v1941, %v1964
    %v1967 = vadd.f32 %v1938, %v1966
    %v1969 = vsel %vm1297, %v1409, 0
    %1971 = vmatprep.subr.mxu0 0.0
    %1972 = vmatpush1.msra.mxu0 %v1967
    %1973 = vmatprep.subr.mxu0 0.0
    %1974 = vmatpush1.msra.mxu0 0.0
    %1975 = vmatprep.subr.mxu0 0.0
    %1976 = vmatpush1.msra.mxu0 0.0
    %1977 = vmatprep.subr.mxu0 0.0
    %1978 = vmatpush1.msra.mxu0 0.0
    %1979 = vmatprep.subr.mxu0 0.0
    %1980 = vmatpush1.msra.mxu0 0.0
    %1981 = vmatprep.subr.mxu0 0.0
    %1982 = vmatpush1.msra.mxu0 0.0
    %1983 = vmatprep.subr.mxu0 0.0
    %1984 = vmatpush1.msra.mxu0 0.0
    %1985 = vmatprep.subr.mxu0 0.0
    %1986 = vmatpush1.msra.mxu0 0.0
    %1987 = vmatprep.subr.mxu0 0.0
    %1988 = vmatpush1.msra.mxu0 0.0
    %1989 = vmatprep.subr.mxu0 0.0
    %1990 = vmatpush1.msra.mxu0 0.0
    %1991 = vmatprep.subr.mxu0 0.0
    %1992 = vmatpush1.msra.mxu0 0.0
    %1993 = vmatprep.subr.mxu0 0.0
    %1994 = vmatpush1.msra.mxu0 0.0
    %1995 = vmatprep.subr.mxu0 0.0
    %1996 = vmatpush1.msra.mxu0 0.0
    %1997 = vmatprep.subr.mxu0 0.0
    %1998 = vmatpush1.msra.mxu0 0.0
    %1999 = vmatprep.subr.mxu0 0.0
    %2000 = vmatpush1.msra.mxu0 0.0
    %2001 = vmatprep.subr.mxu0 0.0
    %2002 = vmatpush1.msra.mxu0 0.0
    %2003 = vmatprep.subr.mxu0 0.0
    %2004 = vmatpush1.msra.mxu0 0.0
    %2005 = vmatprep.subr.mxu0 0.0
    %2006 = vmatpush1.msra.mxu0 0.0
    %2007 = vmatprep.subr.mxu0 0.0
    %2008 = vmatpush1.msra.mxu0 0.0
    %2009 = vmatprep.subr.mxu0 0.0
    %2010 = vmatpush1.msra.mxu0 0.0
    %2011 = vmatprep.subr.mxu0 0.0
    %2012 = vmatpush1.msra.mxu0 0.0
    %2013 = vmatprep.subr.mxu0 0.0
    %2014 = vmatpush1.msra.mxu0 0.0
    %2015 = vmatprep.subr.mxu0 0.0
    %2016 = vmatpush1.msra.mxu0 0.0
    %2017 = vmatprep.subr.mxu0 0.0
    %2018 = vmatpush1.msra.mxu0 0.0
    %2019 = vmatprep.subr.mxu0 0.0
    %2020 = vmatpush1.msra.mxu0 0.0
    %2021 = vmatprep.subr.mxu0 0.0
    %2022 = vmatpush1.msra.mxu0 0.0
    %2023 = vmatprep.subr.mxu0 0.0
    %2024 = vmatpush1.msra.mxu0 0.0
    %2025 = vmatprep.subr.mxu0 0.0
    %2026 = vmatpush1.msra.mxu0 0.0
    %2027 = vmatprep.subr.mxu0 0.0
    %2028 = vmatpush1.msra.mxu0 0.0
    %2029 = vmatprep.subr.mxu0 0.0
    %2030 = vmatpush1.msra.mxu0 0.0
    %2031 = vmatprep.subr.mxu0 0.0
    %2032 = vmatpush1.msra.mxu0 0.0
    %2033 = vmatprep.subr.mxu0 0.0
    %2034 = vmatpush1.msra.mxu0 0.0
    %2035 = vmatprep.mubr.f32.mxu0 0.0
    %2036 = vmatmul.mubr.f32.gmra.mrb[0].mxu0 %v1969
    %v2037 = vpop.f32.mrb[0].mxu0
    %v2038 = vadd.f32 0.0, %v2037
    %v2039 = vpop.f32.mrb[0].mxu0
    %2040 = vdwg.mxu0
    %s2041 = sld [smem:[#allocation2 + $0x7]]
    %2042 = vadd.xlane.f32.xlu0 %v2038
    %v2043 = vpop.xlane.xlu0 %2042
    %v2044 = vmul.f32 %v2043, %v730
    %v2045 = vsub.f32 %v2038, %v2044
    %v2046 = vmul.f32 %v2045, %v2045
    %2047 = vadd.xlane.f32.xlu0 %v2046
    %v2048 = vpop.xlane.xlu0 %2047
    %v2049 = vmul.f32 %v2048, %v730
    %v2050 = vadd.f32 %v2049, 1e-05
    %v2051 = vrsqrt.pop %v2050
    %v2052 = vmul.f32 %v2045, %v2051
    %v2053 = vstv %s2041
    %v2054 = vmul.f32 %v2053, %v2052
    %v2056 = vrot.slane %v2054, 2
    %v2057 = vrot.slane %v2054, 3
    %v2058 = vrot.slane %v2054, 4
    %v2059 = vrot.slane %v2054, 5
    %v2060 = vrot.slane %v2054, 6
    %v2061 = vrot.slane %v2054, 7
    %v2062 = vrot.slane %v2054, 1
    %v2071 = vadd.f32 %v1401, %v2056
    %v2072 = vadd.f32 %v1402, %v2057
    %v2073 = vadd.f32 %v1403, %v2058
    %v2074 = vadd.f32 %v1404, %v2059
    %v2075 = vadd.f32 %v1405, %v2060
    %v2076 = vadd.f32 %v1406, %v2061
    %v2077 = vadd.f32 %v1407, %v2054
    %v2078 = vadd.f32 %v1408, %v2062
    %v2079 = vld [vmem:[%s11] sm:$0xff]
    %v2080 = vld [vmem:[%s10] sm:$0xff]
    %2082 = vset.pattern.permute.xlu0 0
    %2083 = vperm.xlu0 %2082, %v2080
    %v2084 = vpop.permute.xlu0 %2083
    %v2086 = vrot.slane %v977, 6
    %v2087 = vrot.slane %v981, 5
    %v2088 = vsel %vm706, %v2087, %v2086
    %v2089 = vrot.slane %v985, 4
    %v2090 = vsel %vm709, %v2089, %v2088
    %v2091 = vrot.slane %v989, 3
    %v2092 = vsel %vm712, %v2091, %v2090
    %v2093 = vrot.slane %v993, 2
    %v2094 = vsel %vm715, %v2093, %v2092
    %v2095 = vrot.slane %v997, 1
    %v2096 = vsel %vm718, %v2095, %v2094
    %v2097 = vsel %vm1099, %v1001, %v2096
    %v2098 = vrot.slane %v1005, 7
    %v2099 = vsel %vm702, %v2098, %v2097
    %v2101 = vmul.f32 %v2084, %v2099
    %2102 = vset.pattern.permute.xlu0 1
    %2103 = vperm.xlu0 %2102, %v2080
    %v2104 = vpop.permute.xlu0 %2103
    %v2106 = vrot.slane %v977, 7
    %v2107 = vrot.slane %v981, 6
    %v2108 = vsel %vm706, %v2107, %v2106
    %v2109 = vrot.slane %v985, 5
    %v2110 = vsel %vm709, %v2109, %v2108
    %v2111 = vrot.slane %v989, 4
    %v2112 = vsel %vm712, %v2111, %v2110
    %v2113 = vrot.slane %v993, 3
    %v2114 = vsel %vm715, %v2113, %v2112
    %v2115 = vrot.slane %v997, 2
    %v2116 = vsel %vm718, %v2115, %v2114
    %v2117 = vrot.slane %v1001, 1
    %v2118 = vsel %vm1099, %v2117, %v2116
    %v2119 = vsel %vm702, %v1005, %v2118
    %v2121 = vmul.f32 %v2104, %v2119
    %v2122 = vadd.f32 %v2101, %v2121
    %2123 = vset.pattern.permute.xlu0 2
    %2124 = vperm.xlu0 %2123, %v2080
    %v2125 = vpop.permute.xlu0 %2124
    %v2127 = vrot.slane %v982, 7
    %v2128 = vsel %vm706, %v2127, %v978
    %v2129 = vrot.slane %v986, 6
    %v2130 = vsel %vm709, %v2129, %v2128
    %v2131 = vrot.slane %v990, 5
    %v2132 = vsel %vm712, %v2131, %v2130
    %v2133 = vrot.slane %v994, 4
    %v2134 = vsel %vm715, %v2133, %v2132
    %v2135 = vrot.slane %v998, 3
    %v2136 = vsel %vm718, %v2135, %v2134
    %v2137 = vrot.slane %v1002, 2
    %v2138 = vsel %vm1099, %v2137, %v2136
    %v2139 = vrot.slane %v1006, 1
    %v2140 = vsel %vm702, %v2139, %v2138
    %v2142 = vmul.f32 %v2125, %v2140
    %v2143 = vadd.f32 %v2122, %v2142
    %2144 = vset.pattern.permute.xlu0 3
    %2145 = vperm.xlu0 %2144, %v2080
    %v2146 = vpop.permute.xlu0 %2145
    %v2148 = vrot.slane %v978, 3
    %v2149 = vrot.slane %v982, 2
    %v2150 = vsel %vm706, %v2149, %v2148
    %v2151 = vrot.slane %v986, 1
    %v2152 = vsel %vm709, %v2151, %v2150
    %v2153 = vsel %vm712, %v990, %v2152
    %v2154 = vrot.slane %v994, 7
    %v2155 = vsel %vm715, %v2154, %v2153
    %v2156 = vrot.slane %v998, 6
    %v2157 = vsel %vm718, %v2156, %v2155
    %v2158 = vrot.slane %v1002, 5
    %v2159 = vsel %vm1099, %v2158, %v2157
    %v2160 = vrot.slane %v1006, 4
    %v2161 = vsel %vm702, %v2160, %v2159
    %v2163 = vmul.f32 %v2146, %v2161
    %v2164 = vadd.f32 %v2143, %v2163
    %2165 = vset.pattern.permute.xlu0 4
    %2166 = vperm.xlu0 %2165, %v2080
    %v2167 = vpop.permute.xlu0 %2166
    %v2169 = vmul.f32 %v2167, %v1193
    %v2170 = vadd.f32 %v2164, %v2169
    %2171 = vset.pattern.permute.xlu0 5
    %2172 = vperm.xlu0 %2171, %v2080
    %v2173 = vpop.permute.xlu0 %2172
    %v2175 = vrot.slane %v978, 5
    %v2176 = vrot.slane %v982, 4
    %v2177 = vsel %vm706, %v2176, %v2175
    %v2178 = vrot.slane %v986, 3
    %v2179 = vsel %vm709, %v2178, %v2177
    %v2180 = vrot.slane %v990, 2
    %v2181 = vsel %vm712, %v2180, %v2179
    %v2182 = vrot.slane %v994, 1
    %v2183 = vsel %vm715, %v2182, %v2181
    %v2184 = vsel %vm718, %v998, %v2183
    %v2185 = vrot.slane %v1002, 7
    %v2186 = vsel %vm1099, %v2185, %v2184
    %v2187 = vrot.slane %v1006, 6
    %v2188 = vsel %vm702, %v2187, %v2186
    %v2190 = vmul.f32 %v2173, %v2188
    %v2191 = vadd.f32 %v2170, %v2190
    %2192 = vset.pattern.permute.xlu0 6
    %2193 = vperm.xlu0 %2192, %v2080
    %v2194 = vpop.permute.xlu0 %2193
    %v2196 = vrot.slane %v983, 7
    %v2197 = vsel %vm706, %v2196, %v979
    %v2198 = vrot.slane %v987, 6
    %v2199 = vsel %vm709, %v2198, %v2197
    %v2200 = vrot.slane %v991, 5
    %v2201 = vsel %vm712, %v2200, %v2199
    %v2202 = vrot.slane %v995, 4
    %v2203 = vsel %vm715, %v2202, %v2201
    %v2204 = vrot.slane %v999, 3
    %v2205 = vsel %vm718, %v2204, %v2203
    %v2206 = vrot.slane %v1003, 2
    %v2207 = vsel %vm1099, %v2206, %v2205
    %v2208 = vrot.slane %v1007, 1
    %v2209 = vsel %vm702, %v2208, %v2207
    %v2211 = vmul.f32 %v2194, %v2209
    %v2212 = vadd.f32 %v2191, %v2211
    %2213 = vset.pattern.permute.xlu0 7
    %2214 = vperm.xlu0 %2213, %v2080
    %v2215 = vpop.permute.xlu0 %2214
    %v2217 = vrot.slane %v979, 1
    %v2218 = vsel %vm706, %v983, %v2217
    %v2219 = vrot.slane %v987, 7
    %v2220 = vsel %vm709, %v2219, %v2218
    %v2221 = vrot.slane %v991, 6
    %v2222 = vsel %vm712, %v2221, %v2220
    %v2223 = vrot.slane %v995, 5
    %v2224 = vsel %vm715, %v2223, %v2222
    %v2225 = vrot.slane %v999, 4
    %v2226 = vsel %vm718, %v2225, %v2224
    %v2227 = vrot.slane %v1003, 3
    %v2228 = vsel %vm1099, %v2227, %v2226
    %v2229 = vrot.slane %v1007, 2
    %v2230 = vsel %vm702, %v2229, %v2228
    %v2232 = vmul.f32 %v2215, %v2230
    %v2233 = vadd.f32 %v2212, %v2232
    %2234 = vset.pattern.permute.xlu0 8
    %2235 = vperm.xlu0 %2234, %v2080
    %v2236 = vpop.permute.xlu0 %2235
    %v2238 = vrot.slane %v979, 2
    %v2239 = vrot.slane %v983, 1
    %v2240 = vsel %vm706, %v2239, %v2238
    %v2241 = vsel %vm709, %v987, %v2240
    %v2242 = vrot.slane %v991, 7
    %v2243 = vsel %vm712, %v2242, %v2241
    %v2244 = vrot.slane %v995, 6
    %v2245 = vsel %vm715, %v2244, %v2243
    %v2246 = vrot.slane %v999, 5
    %v2247 = vsel %vm718, %v2246, %v2245
    %v2248 = vrot.slane %v1003, 4
    %v2249 = vsel %vm1099, %v2248, %v2247
    %v2250 = vrot.slane %v1007, 3
    %v2251 = vsel %vm702, %v2250, %v2249
    %v2253 = vmul.f32 %v2236, %v2251
    %v2254 = vadd.f32 %v2233, %v2253
    %v2256 = vsel %vm1297, %v2079, 0
    %2258 = vmatprep.subr.mxu0 0.0
    %2259 = vmatpush1.msra.mxu0 %v2254
    %2260 = vmatprep.subr.mxu0 0.0
    %2261 = vmatpush1.msra.mxu0 0.0
    %2262 = vmatprep.subr.mxu0 0.0
    %2263 = vmatpush1.msra.mxu0 0.0
    %2264 = vmatprep.subr.mxu0 0.0
    %2265 = vmatpush1.msra.mxu0 0.0
    %2266 = vmatprep.subr.mxu0 0.0
    %2267 = vmatpush1.msra.mxu0 0.0
    %2268 = vmatprep.subr.mxu0 0.0
    %2269 = vmatpush1.msra.mxu0 0.0
    %2270 = vmatprep.subr.mxu0 0.0
    %2271 = vmatpush1.msra.mxu0 0.0
    %2272 = vmatprep.subr.mxu0 0.0
    %2273 = vmatpush1.msra.mxu0 0.0
    %2274 = vmatprep.subr.mxu0 0.0
    %2275 = vmatpush1.msra.mxu0 0.0
    %2276 = vmatprep.subr.mxu0 0.0
    %2277 = vmatpush1.msra.mxu0 0.0
    %2278 = vmatprep.subr.mxu0 0.0
    %2279 = vmatpush1.msra.mxu0 0.0
    %2280 = vmatprep.subr.mxu0 0.0
    %2281 = vmatpush1.msra.mxu0 0.0
    %2282 = vmatprep.subr.mxu0 0.0
    %2283 = vmatpush1.msra.mxu0 0.0
    %2284 = vmatprep.subr.mxu0 0.0
    %2285 = vmatpush1.msra.mxu0 0.0
    %2286 = vmatprep.subr.mxu0 0.0
    %2287 = vmatpush1.msra.mxu0 0.0
    %2288 = vmatprep.subr.mxu0 0.0
    %2289 = vmatpush1.msra.mxu0 0.0
    %2290 = vmatprep.subr.mxu0 0.0
    %2291 = vmatpush1.msra.mxu0 0.0
    %2292 = vmatprep.subr.mxu0 0.0
    %2293 = vmatpush1.msra.mxu0 0.0
    %2294 = vmatprep.subr.mxu0 0.0
    %2295 = vmatpush1.msra.mxu0 0.0
    %2296 = vmatprep.subr.mxu0 0.0
    %2297 = vmatpush1.msra.mxu0 0.0
    %2298 = vmatprep.subr.mxu0 0.0
    %2299 = vmatpush1.msra.mxu0 0.0
    %2300 = vmatprep.subr.mxu0 0.0
    %2301 = vmatpush1.msra.mxu0 0.0
    %2302 = vmatprep.subr.mxu0 0.0
    %2303 = vmatpush1.msra.mxu0 0.0
    %2304 = vmatprep.subr.mxu0 0.0
    %2305 = vmatpush1.msra.mxu0 0.0
    %2306 = vmatprep.subr.mxu0 0.0
    %2307 = vmatpush1.msra.mxu0 0.0
    %2308 = vmatprep.subr.mxu0 0.0
    %2309 = vmatpush1.msra.mxu0 0.0
    %2310 = vmatprep.subr.mxu0 0.0
    %2311 = vmatpush1.msra.mxu0 0.0
    %2312 = vmatprep.subr.mxu0 0.0
    %2313 = vmatpush1.msra.mxu0 0.0
    %2314 = vmatprep.subr.mxu0 0.0
    %2315 = vmatpush1.msra.mxu0 0.0
    %2316 = vmatprep.subr.mxu0 0.0
    %2317 = vmatpush1.msra.mxu0 0.0
    %2318 = vmatprep.subr.mxu0 0.0
    %2319 = vmatpush1.msra.mxu0 0.0
    %2320 = vmatprep.subr.mxu0 0.0
    %2321 = vmatpush1.msra.mxu0 0.0
    %2322 = vmatprep.mubr.f32.mxu0 0.0
    %2323 = vmatmul.mubr.f32.gmra.mrb[0].mxu0 %v2256
    %v2324 = vpop.f32.mrb[0].mxu0
    %v2325 = vadd.f32 0.0, %v2324
    %v2326 = vpop.f32.mrb[0].mxu0
    %2327 = vdwg.mxu0
    %2328 = vadd.xlane.f32.xlu0 %v2325
    %v2329 = vpop.xlane.xlu0 %2328
    %v2330 = vmul.f32 %v2329, %v730
    %v2331 = vsub.f32 %v2325, %v2330
    %v2332 = vmul.f32 %v2331, %v2331
    %2333 = vadd.xlane.f32.xlu0 %v2332
    %v2334 = vpop.xlane.xlu0 %2333
    %v2335 = vmul.f32 %v2334, %v730
    %v2336 = vadd.f32 %v2335, 1e-05
    %v2337 = vrsqrt.pop %v2336
    %v2338 = vmul.f32 %v2331, %v2337
    %2339 = vst [vmem:[%s15] sm:$0xff] %v2338
    %v2340 = vld [vmem:[%s13] sm:$0xff]
    %v2341 = vld [vmem:[%s12] sm:$0xff]
    %2343 = vset.pattern.permute.xlu0 0
    %2344 = vperm.xlu0 %2343, %v2341
    %v2345 = vpop.permute.xlu0 %2344
    %v2347 = vmul.f32 %v2345, %v1102
    %2348 = vset.pattern.permute.xlu0 1
    %2349 = vperm.xlu0 %2348, %v2341
    %v2350 = vpop.permute.xlu0 %2349
    %v2352 = vrot.slane %v977, 1
    %v2353 = vsel %vm706, %v981, %v2352
    %v2354 = vrot.slane %v985, 7
    %v2355 = vsel %vm709, %v2354, %v2353
    %v2356 = vrot.slane %v989, 6
    %v2357 = vsel %vm712, %v2356, %v2355
    %v2358 = vrot.slane %v993, 5
    %v2359 = vsel %vm715, %v2358, %v2357
    %v2360 = vrot.slane %v997, 4
    %v2361 = vsel %vm718, %v2360, %v2359
    %v2362 = vrot.slane %v1001, 3
    %v2363 = vsel %vm1099, %v2362, %v2361
    %v2364 = vrot.slane %v1005, 2
    %v2365 = vsel %vm702, %v2364, %v2363
    %v2367 = vmul.f32 %v2350, %v2365
    %v2368 = vadd.f32 %v2347, %v2367
    %2369 = vset.pattern.permute.xlu0 2
    %2370 = vperm.xlu0 %2369, %v2341
    %v2371 = vpop.permute.xlu0 %2370
    %v2373 = vmul.f32 %v2371, %v1122
    %v2374 = vadd.f32 %v2368, %v2373
    %2375 = vset.pattern.permute.xlu0 3
    %2376 = vperm.xlu0 %2375, %v2341
    %v2377 = vpop.permute.xlu0 %2376
    %v2379 = vrot.slane %v977, 3
    %v2380 = vrot.slane %v981, 2
    %v2381 = vsel %vm706, %v2380, %v2379
    %v2382 = vrot.slane %v985, 1
    %v2383 = vsel %vm709, %v2382, %v2381
    %v2384 = vsel %vm712, %v989, %v2383
    %v2385 = vrot.slane %v993, 7
    %v2386 = vsel %vm715, %v2385, %v2384
    %v2387 = vrot.slane %v997, 6
    %v2388 = vsel %vm718, %v2387, %v2386
    %v2389 = vrot.slane %v1001, 5
    %v2390 = vsel %vm1099, %v2389, %v2388
    %v2391 = vrot.slane %v1005, 4
    %v2392 = vsel %vm702, %v2391, %v2390
    %v2394 = vmul.f32 %v2377, %v2392
    %v2395 = vadd.f32 %v2374, %v2394
    %2396 = vset.pattern.permute.xlu0 4
    %2397 = vperm.xlu0 %2396, %v2341
    %v2398 = vpop.permute.xlu0 %2397
    %v2400 = vmul.f32 %v2398, %v1143
    %v2401 = vadd.f32 %v2395, %v2400
    %2402 = vset.pattern.permute.xlu0 5
    %2403 = vperm.xlu0 %2402, %v2341
    %v2404 = vpop.permute.xlu0 %2403
    %v2406 = vrot.slane %v977, 5
    %v2407 = vrot.slane %v981, 4
    %v2408 = vsel %vm706, %v2407, %v2406
    %v2409 = vrot.slane %v985, 3
    %v2410 = vsel %vm709, %v2409, %v2408
    %v2411 = vrot.slane %v989, 2
    %v2412 = vsel %vm712, %v2411, %v2410
    %v2413 = vrot.slane %v993, 1
    %v2414 = vsel %vm715, %v2413, %v2412
    %v2415 = vsel %vm718, %v997, %v2414
    %v2416 = vrot.slane %v1001, 7
    %v2417 = vsel %vm1099, %v2416, %v2415
    %v2418 = vrot.slane %v1005, 6
    %v2419 = vsel %vm702, %v2418, %v2417
    %v2421 = vmul.f32 %v2404, %v2419
    %v2422 = vadd.f32 %v2401, %v2421
    %2423 = vset.pattern.permute.xlu0 6
    %2424 = vperm.xlu0 %2423, %v2341
    %v2425 = vpop.permute.xlu0 %2424
    %v2427 = vmul.f32 %v2425, %v2099
    %v2428 = vadd.f32 %v2422, %v2427
    %2429 = vset.pattern.permute.xlu0 7
    %2430 = vperm.xlu0 %2429, %v2341
    %v2431 = vpop.permute.xlu0 %2430
    %v2433 = vmul.f32 %v2431, %v2119
    %v2434 = vadd.f32 %v2428, %v2433
    %2435 = vset.pattern.permute.xlu0 8
    %2436 = vperm.xlu0 %2435, %v2341
    %v2437 = vpop.permute.xlu0 %2436
    %v2439 = vmul.f32 %v2437, %v2140
    %v2440 = vadd.f32 %v2434, %v2439
    %2441 = vset.pattern.permute.xlu0 9
    %2442 = vperm.xlu0 %2441, %v2341
    %v2443 = vpop.permute.xlu0 %2442
    %v2445 = vrot.slane %v978, 1
    %v2446 = vsel %vm706, %v982, %v2445
    %v2447 = vrot.slane %v986, 7
    %v2448 = vsel %vm709, %v2447, %v2446
    %v2449 = vrot.slane %v990, 6
    %v2450 = vsel %vm712, %v2449, %v2448
    %v2451 = vrot.slane %v994, 5
    %v2452 = vsel %vm715, %v2451, %v2450
    %v2453 = vrot.slane %v998, 4
    %v2454 = vsel %vm718, %v2453, %v2452
    %v2455 = vrot.slane %v1002, 3
    %v2456 = vsel %vm1099, %v2455, %v2454
    %v2457 = vrot.slane %v1006, 2
    %v2458 = vsel %vm702, %v2457, %v2456
    %v2460 = vmul.f32 %v2443, %v2458
    %v2461 = vadd.f32 %v2440, %v2460
    %2462 = vset.pattern.permute.xlu0 10
    %2463 = vperm.xlu0 %2462, %v2341
    %v2464 = vpop.permute.xlu0 %2463
    %v2466 = vmul.f32 %v2464, %v1172
    %v2467 = vadd.f32 %v2461, %v2466
    %2468 = vset.pattern.permute.xlu0 11
    %2469 = vperm.xlu0 %2468, %v2341
    %v2470 = vpop.permute.xlu0 %2469
    %v2472 = vmul.f32 %v2470, %v2161
    %v2473 = vadd.f32 %v2467, %v2472
    %2474 = vset.pattern.permute.xlu0 12
    %2475 = vperm.xlu0 %2474, %v2341
    %v2476 = vpop.permute.xlu0 %2475
    %v2478 = vmul.f32 %v2476, %v1193
    %v2479 = vadd.f32 %v2473, %v2478
    %2480 = vset.pattern.permute.xlu0 13
    %2481 = vperm.xlu0 %2480, %v2341
    %v2482 = vpop.permute.xlu0 %2481
    %v2484 = vmul.f32 %v2482, %v2188
    %v2485 = vadd.f32 %v2479, %v2484
    %2486 = vset.pattern.permute.xlu0 14
    %2487 = vperm.xlu0 %2486, %v2341
    %v2488 = vpop.permute.xlu0 %2487
    %v2490 = vmul.f32 %v2488, %v1214
    %v2491 = vadd.f32 %v2485, %v2490
    %2492 = vset.pattern.permute.xlu0 15
    %2493 = vperm.xlu0 %2492, %v2341
    %v2494 = vpop.permute.xlu0 %2493
    %v2496 = vrot.slane %v978, 7
    %v2497 = vrot.slane %v982, 6
    %v2498 = vsel %vm706, %v2497, %v2496
    %v2499 = vrot.slane %v986, 5
    %v2500 = vsel %vm709, %v2499, %v2498
    %v2501 = vrot.slane %v990, 4
    %v2502 = vsel %vm712, %v2501, %v2500
    %v2503 = vrot.slane %v994, 3
    %v2504 = vsel %vm715, %v2503, %v2502
    %v2505 = vrot.slane %v998, 2
    %v2506 = vsel %vm718, %v2505, %v2504
    %v2507 = vrot.slane %v1002, 1
    %v2508 = vsel %vm1099, %v2507, %v2506
    %v2509 = vsel %vm702, %v1006, %v2508
    %v2511 = vmul.f32 %v2494, %v2509
    %v2512 = vadd.f32 %v2491, %v2511
    %2513 = vset.pattern.permute.xlu0 16
    %2514 = vperm.xlu0 %2513, %v2341
    %v2515 = vpop.permute.xlu0 %2514
    %v2517 = vmul.f32 %v2515, %v2209
    %v2518 = vadd.f32 %v2512, %v2517
    %2519 = vset.pattern.permute.xlu0 17
    %2520 = vperm.xlu0 %2519, %v2341
    %v2521 = vpop.permute.xlu0 %2520
    %v2523 = vmul.f32 %v2521, %v2230
    %v2524 = vadd.f32 %v2518, %v2523
    %2525 = vset.pattern.permute.xlu0 18
    %2526 = vperm.xlu0 %2525, %v2341
    %v2527 = vpop.permute.xlu0 %2526
    %v2529 = vmul.f32 %v2527, %v2251
    %v2530 = vadd.f32 %v2524, %v2529
    %2531 = vset.pattern.permute.xlu0 19
    %2532 = vperm.xlu0 %2531, %v2341
    %v2533 = vpop.permute.xlu0 %2532
    %v2535 = vrot.slane %v979, 3
    %v2536 = vrot.slane %v983, 2
    %v2537 = vsel %vm706, %v2536, %v2535
    %v2538 = vrot.slane %v987, 1
    %v2539 = vsel %vm709, %v2538, %v2537
    %v2540 = vsel %vm712, %v991, %v2539
    %v2541 = vrot.slane %v995, 7
    %v2542 = vsel %vm715, %v2541, %v2540
    %v2543 = vrot.slane %v999, 6
    %v2544 = vsel %vm718, %v2543, %v2542
    %v2545 = vrot.slane %v1003, 5
    %v2546 = vsel %vm1099, %v2545, %v2544
    %v2547 = vrot.slane %v1007, 4
    %v2548 = vsel %vm702, %v2547, %v2546
    %v2550 = vmul.f32 %v2533, %v2548
    %v2551 = vadd.f32 %v2530, %v2550
    %2552 = vset.pattern.permute.xlu0 20
    %2553 = vperm.xlu0 %2552, %v2341
    %v2554 = vpop.permute.xlu0 %2553
    %v2556 = vmul.f32 %v2554, %v1243
    %v2557 = vadd.f32 %v2551, %v2556
    %2558 = vset.pattern.permute.xlu0 21
    %2559 = vperm.xlu0 %2558, %v2341
    %v2560 = vpop.permute.xlu0 %2559
    %v2562 = vrot.slane %v979, 5
    %v2563 = vrot.slane %v983, 4
    %v2564 = vsel %vm706, %v2563, %v2562
    %v2565 = vrot.slane %v987, 3
    %v2566 = vsel %vm709, %v2565, %v2564
    %v2567 = vrot.slane %v991, 2
    %v2568 = vsel %vm712, %v2567, %v2566
    %v2569 = vrot.slane %v995, 1
    %v2570 = vsel %vm715, %v2569, %v2568
    %v2571 = vsel %vm718, %v999, %v2570
    %v2572 = vrot.slane %v1003, 7
    %v2573 = vsel %vm1099, %v2572, %v2571
    %v2574 = vrot.slane %v1007, 6
    %v2575 = vsel %vm702, %v2574, %v2573
    %v2577 = vmul.f32 %v2560, %v2575
    %v2578 = vadd.f32 %v2557, %v2577
    %2579 = vset.pattern.permute.xlu0 22
    %2580 = vperm.xlu0 %2579, %v2341
    %v2581 = vpop.permute.xlu0 %2580
    %v2583 = vmul.f32 %v2581, %v1264
    %v2584 = vadd.f32 %v2578, %v2583
    %2585 = vset.pattern.permute.xlu0 23
    %2586 = vperm.xlu0 %2585, %v2341
    %v2587 = vpop.permute.xlu0 %2586
    %v2589 = vrot.slane %v979, 7
    %v2590 = vrot.slane %v983, 6
    %v2591 = vsel %vm706, %v2590, %v2589
    %v2592 = vrot.slane %v987, 5
    %v2593 = vsel %vm709, %v2592, %v2591
    %v2594 = vrot.slane %v991, 4
    %v2595 = vsel %vm712, %v2594, %v2593
    %v2596 = vrot.slane %v995, 3
    %v2597 = vsel %vm715, %v2596, %v2595
    %v2598 = vrot.slane %v999, 2
    %v2599 = vsel %vm718, %v2598, %v2597
    %v2600 = vrot.slane %v1003, 1
    %v2601 = vsel %vm1099, %v2600, %v2599
    %v2602 = vsel %vm702, %v1007, %v2601
    %v2604 = vmul.f32 %v2587, %v2602
    %v2605 = vadd.f32 %v2584, %v2604
    %2606 = vset.pattern.permute.xlu0 24
    %2607 = vperm.xlu0 %2606, %v2341
    %v2608 = vpop.permute.xlu0 %2607
    %v2610 = vmul.f32 %v2608, %v1293
    %v2611 = vadd.f32 %v2605, %v2610
    %v2613 = vsel %vm1297, %v2340, 0
    %2615 = vmatprep.subr.mxu0 0.0
    %2616 = vmatpush1.msra.mxu0 %v2611
    %2617 = vmatprep.subr.mxu0 0.0
    %2618 = vmatpush1.msra.mxu0 0.0
    %2619 = vmatprep.subr.mxu0 0.0
    %2620 = vmatpush1.msra.mxu0 0.0
    %2621 = vmatprep.subr.mxu0 0.0
    %2622 = vmatpush1.msra.mxu0 0.0
    %2623 = vmatprep.subr.mxu0 0.0
    %2624 = vmatpush1.msra.mxu0 0.0
    %2625 = vmatprep.subr.mxu0 0.0
    %2626 = vmatpush1.msra.mxu0 0.0
    %2627 = vmatprep.subr.mxu0 0.0
    %2628 = vmatpush1.msra.mxu0 0.0
    %2629 = vmatprep.subr.mxu0 0.0
    %2630 = vmatpush1.msra.mxu0 0.0
    %2631 = vmatprep.subr.mxu0 0.0
    %2632 = vmatpush1.msra.mxu0 0.0
    %2633 = vmatprep.subr.mxu0 0.0
    %2634 = vmatpush1.msra.mxu0 0.0
    %2635 = vmatprep.subr.mxu0 0.0
    %2636 = vmatpush1.msra.mxu0 0.0
    %2637 = vmatprep.subr.mxu0 0.0
    %2638 = vmatpush1.msra.mxu0 0.0
    %2639 = vmatprep.subr.mxu0 0.0
    %2640 = vmatpush1.msra.mxu0 0.0
    %2641 = vmatprep.subr.mxu0 0.0
    %2642 = vmatpush1.msra.mxu0 0.0
    %2643 = vmatprep.subr.mxu0 0.0
    %2644 = vmatpush1.msra.mxu0 0.0
    %2645 = vmatprep.subr.mxu0 0.0
    %2646 = vmatpush1.msra.mxu0 0.0
    %2647 = vmatprep.subr.mxu0 0.0
    %2648 = vmatpush1.msra.mxu0 0.0
    %2649 = vmatprep.subr.mxu0 0.0
    %2650 = vmatpush1.msra.mxu0 0.0
    %2651 = vmatprep.subr.mxu0 0.0
    %2652 = vmatpush1.msra.mxu0 0.0
    %2653 = vmatprep.subr.mxu0 0.0
    %2654 = vmatpush1.msra.mxu0 0.0
    %2655 = vmatprep.subr.mxu0 0.0
    %2656 = vmatpush1.msra.mxu0 0.0
    %2657 = vmatprep.subr.mxu0 0.0
    %2658 = vmatpush1.msra.mxu0 0.0
    %2659 = vmatprep.subr.mxu0 0.0
    %2660 = vmatpush1.msra.mxu0 0.0
    %2661 = vmatprep.subr.mxu0 0.0
    %2662 = vmatpush1.msra.mxu0 0.0
    %2663 = vmatprep.subr.mxu0 0.0
    %2664 = vmatpush1.msra.mxu0 0.0
    %2665 = vmatprep.subr.mxu0 0.0
    %2666 = vmatpush1.msra.mxu0 0.0
    %2667 = vmatprep.subr.mxu0 0.0
    %2668 = vmatpush1.msra.mxu0 0.0
    %2669 = vmatprep.subr.mxu0 0.0
    %2670 = vmatpush1.msra.mxu0 0.0
    %2671 = vmatprep.subr.mxu0 0.0
    %2672 = vmatpush1.msra.mxu0 0.0
    %2673 = vmatprep.subr.mxu0 0.0
    %2674 = vmatpush1.msra.mxu0 0.0
    %2675 = vmatprep.subr.mxu0 0.0
    %2676 = vmatpush1.msra.mxu0 0.0
    %2677 = vmatprep.subr.mxu0 0.0
    %2678 = vmatpush1.msra.mxu0 0.0
    %2679 = vmatprep.mubr.f32.mxu0 0.0
    %2680 = vmatmul.mubr.f32.gmra.mrb[0].mxu0 %v2613
    %v2681 = vpop.f32.mrb[0].mxu0
    %v2682 = vadd.f32 0.0, %v2681
    %v2683 = vpop.f32.mrb[0].mxu0
    %2684 = vdwg.mxu0
    %2685 = vadd.xlane.f32.xlu0 %v2682
    %v2686 = vpop.xlane.xlu0 %2685
    %v2687 = vmul.f32 %v2686, %v730
    %v2688 = vsub.f32 %v2682, %v2687
    %v2689 = vmul.f32 %v2688, %v2688
    %2690 = vadd.xlane.f32.xlu0 %v2689
    %v2691 = vpop.xlane.xlu0 %2690
    %v2692 = vmul.f32 %v2691, %v730
    %v2693 = vadd.f32 %v2692, 1e-05
    %v2694 = vrsqrt.pop %v2693
    %v2695 = vmul.f32 %v2688, %v2694
    %2696 = vst [vmem:[%s16] sm:$0xff] %v2695
    %s2697 = sld [smem:[#allocation2 + $0x3]]
    %v2698 = vld [vmem:[%s5] sm:$0xff]
    %v2699 = vstv %s2697
    %v2700 = vmul.f32 %v2699, %v2698
    %v2702 = vrot.slane %v2700, 2
    %v2703 = vrot.slane %v2700, 3
    %v2704 = vrot.slane %v2700, 4
    %v2705 = vrot.slane %v2700, 5
    %v2706 = vrot.slane %v2700, 6
    %v2707 = vrot.slane %v2700, 7
    %v2708 = vrot.slane %v2700, 1
    %v2717 = vadd.f32 %v2071, %v2702
    %v2718 = vadd.f32 %v2072, %v2703
    %v2719 = vadd.f32 %v2073, %v2704
    %v2720 = vadd.f32 %v2074, %v2705
    %v2721 = vadd.f32 %v2075, %v2706
    %v2722 = vadd.f32 %v2076, %v2707
    %v2723 = vadd.f32 %v2077, %v2700
    %v2724 = vadd.f32 %v2078, %v2708
    %v2733 = vrot.slane %v2718, 7
    %v2734 = vsel %vm702, %v2733, %v2717
    %v2735 = vrot.slane %v2719, 6
    %v2736 = vrot.slane %v2720, 5
    %v2737 = vsel %vm706, %v2736, %v2735
    %v2738 = vrot.slane %v2721, 4
    %v2739 = vsel %vm709, %v2738, %v2737
    %v2740 = vrot.slane %v2722, 3
    %v2741 = vsel %vm712, %v2740, %v2739
    %v2742 = vrot.slane %v2723, 2
    %v2743 = vsel %vm715, %v2742, %v2741
    %v2744 = vrot.slane %v2724, 1
    %v2745 = vsel %vm718, %v2744, %v2743
    %2748 = vst [vmem:[%s14 - $0x6] sm:$0xc0] %v2734
    %2749 = vst [vmem:[%s14 + $0x2] sm:$0x3f] %v2745
    // Predicated region
    $region62: #{cell_forward.18} parent=1 // pred_check
      _
    $region63: #{cell_forward.18} parent=1 // pred_check_branch
      %2751 = sbr.rel (0) target = $region65
    $region64: #{cell_forward.18} parent=1 // pred_region
      _
    $region65: #{cell_forward.18} parent=1 // pred_fallthru
      _
    // Predicated region
    $region66: #{cell_forward.18} parent=1 // pred_check
      _
    $region67: #{cell_forward.18} parent=1 // pred_check_branch
      %2753 = sbr.rel (0) target = $region69
    $region68: #{cell_forward.18} parent=1 // pred_region
      _
    $region69: #{cell_forward.18} parent=1 // pred_fallthru
      _
    // Predicated region
    $region70: #{cell_forward.18} parent=1 // pred_check
      _
    $region71: #{cell_forward.18} parent=1 // pred_check_branch
      %2755 = sbr.rel (0) target = $region73
    $region72: #{cell_forward.18} parent=1 // pred_region
      _
    $region73: #{cell_forward.18} parent=1 // pred_fallthru
      _
    // Predicated region
    $region74: #{cell_forward.18} parent=1 // pred_check
      _
    $region75: #{cell_forward.18} parent=1 // pred_check_branch
      %2757 = sbr.rel (0) target = $region77
    $region76: #{cell_forward.18} parent=1 // pred_region
      _
    $region77: #{cell_forward.18} parent=1 // pred_fallthru
      _
    // Predicated region
    $region78: #{cell_forward.18} parent=1 // pred_check
      _
    $region79: #{cell_forward.18} parent=1 // pred_check_branch
      %2759 = sbr.rel (0) target = $region81
    $region80: #{cell_forward.18} parent=1 // pred_region
      _
    $region81: #{cell_forward.18} parent=1 // pred_fallthru
      _
    // Predicated region
    $region82: #{cell_forward.18} parent=1 // pred_check
      _
    $region83: #{cell_forward.18} parent=1 // pred_check_branch
      %2761 = sbr.rel (0) target = $region85
    $region84: #{cell_forward.18} parent=1 // pred_region
      _
    $region85: #{cell_forward.18} parent=1 // pred_fallthru
      _
    %2762 = vsyncpa [#allocation3], 1

// kernel: cell_forward.19
$region0: #{cell_forward.19}
  #allocation0 [shape = 'u32[]', space=smem, size = 0x4, offset = 0x4, fixed_abs, tag = 'smem constant byte address 0x4 - core index']
  #allocation1 [shape = 'u32[144,128]{1,0:T(1,128)}', space=vmem, size = 0x12000, scoped, tag = 'internal scratch']
  %s0 = inlined_call_operand.vmem [shape: f32[8], index: 0, kind: input, shape index: {}]
  %s1 = inlined_call_operand.vmem [shape: f32[8,128], index: 1, kind: input, shape index: {}]
  %s2 = inlined_call_operand.vmem [shape: f32[8,128], index: 2, kind: input, shape index: {}]
  %s3 = inlined_call_operand.vmem [shape: f32[8,9,128], index: 3, kind: input, shape index: {}]
  %s4 = inlined_call_operand.vmem [shape: f32[8,25,128], index: 4, kind: input, shape index: {}]
  %s5 = inlined_call_operand.vmem [shape: f32[8,9], index: 5, kind: input, shape index: {}]
  %s6 = inlined_call_operand.vmem [shape: f32[8,8], index: 6, kind: input, shape index: {}]
  %s7 = inlined_call_operand.vmem [shape: f32[8,25], index: 7, kind: input, shape index: {}]
  %s8 = inlined_call_operand.vmem [shape: f32[8,8], index: 8, kind: input, shape index: {}]
  %s9 = inlined_call_operand.vmem [shape: f32[8,128], index: 9, kind: output, shape index: {}]
  %s10 = sld [smem:[#allocation0]]
  $region50: #{cell_forward.19} parent=0
    _
  %s12 = ssub.s32 1, %s10
  %s13 = scalar_select 0, %s12, %s10
  $region1: #{cell_forward.19} parent=0
    #allocation2 [shape = 'u8[512]{0}', space=smem, size = 0x200, scoped, tag = 'input window, operand 0, single buffered']
    #allocation3 [shape = 's32[1]{0}', space=sflag, size = 0x4, scoped, tag = 'scoped memory for cell_forward.19']
    %14 = vsyncpa [#allocation3], 0
    // Predicated region
    $region2: #{cell_forward.19} parent=1 // pred_check
      _
    $region3: #{cell_forward.19} parent=1 // pred_check_branch
      %16 = sbr.rel (0) target = $region5
    $region4: #{cell_forward.19} parent=1 // pred_region
      %s18 = ssub.s32 16, 16
      %19 = vsyncadd [#allocation3], %s18
      %s21 = sshll.u32 %s0, 4
      %s22 = int_to_ptr.vmem [resolvable:$true] %s21
      %24 = dma.vmem_to_smem %s22, 16, [#allocation2], [#allocation3]
    $region5: #{cell_forward.19} parent=1 // pred_fallthru
      _
    // Predicated region
    $region6: #{cell_forward.19} parent=1 // pred_check
      _
    $region7: #{cell_forward.19} parent=1 // pred_check_branch
      %26 = sbr.rel (0) target = $region9
    $region8: #{cell_forward.19} parent=1 // pred_region
      _
    $region9: #{cell_forward.19} parent=1 // pred_fallthru
      _
    // Predicated region
    $region10: #{cell_forward.19} parent=1 // pred_check
      _
    $region11: #{cell_forward.19} parent=1 // pred_check_branch
      %28 = sbr.rel (0) target = $region13
    $region12: #{cell_forward.19} parent=1 // pred_region
      _
    $region13: #{cell_forward.19} parent=1 // pred_fallthru
      _
    // Predicated region
    $region14: #{cell_forward.19} parent=1 // pred_check
      _
    $region15: #{cell_forward.19} parent=1 // pred_check_branch
      %30 = sbr.rel (0) target = $region17
    $region16: #{cell_forward.19} parent=1 // pred_region
      _
    $region17: #{cell_forward.19} parent=1 // pred_fallthru
      _
    // Predicated region
    $region18: #{cell_forward.19} parent=1 // pred_check
      _
    $region19: #{cell_forward.19} parent=1 // pred_check_branch
      %32 = sbr.rel (0) target = $region21
    $region20: #{cell_forward.19} parent=1 // pred_region
      _
    $region21: #{cell_forward.19} parent=1 // pred_fallthru
      _
    // Predicated region
    $region22: #{cell_forward.19} parent=1 // pred_check
      _
    $region23: #{cell_forward.19} parent=1 // pred_check_branch
      %34 = sbr.rel (0) target = $region25
    $region24: #{cell_forward.19} parent=1 // pred_region
      _
    $region25: #{cell_forward.19} parent=1 // pred_fallthru
      _
    // Predicated region
    $region26: #{cell_forward.19} parent=1 // pred_check
      _
    $region27: #{cell_forward.19} parent=1 // pred_check_branch
      %36 = sbr.rel (0) target = $region29
    $region28: #{cell_forward.19} parent=1 // pred_region
      _
    $region29: #{cell_forward.19} parent=1 // pred_fallthru
      _
    // Predicated region
    $region30: #{cell_forward.19} parent=1 // pred_check
      _
    $region31: #{cell_forward.19} parent=1 // pred_check_branch
      %38 = sbr.rel (0) target = $region33
    $region32: #{cell_forward.19} parent=1 // pred_region
      _
    $region33: #{cell_forward.19} parent=1 // pred_fallthru
      _
    // Predicated region
    $region34: #{cell_forward.19} parent=1 // pred_check
      _
    $region35: #{cell_forward.19} parent=1 // pred_check_branch
      %40 = sbr.rel (0) target = $region37
    $region36: #{cell_forward.19} parent=1 // pred_region
      _
    $region37: #{cell_forward.19} parent=1 // pred_fallthru
      _
    // Predicated region
    $region38: #{cell_forward.19} parent=1 // pred_check
      _
    $region39: #{cell_forward.19} parent=1 // pred_check_branch
      %42 = sbr.rel (0) target = $region41
    $region40: #{cell_forward.19} parent=1 // pred_region
      %43 = dma.done [#allocation3], 16
    $region41: #{cell_forward.19} parent=1 // pred_fallthru
      _
    %44 = sfence
    %v45 = vld [vmem:[%s3] sm:$0xff]
    %v46 = vld [vmem:[%s3 + $0x8] sm:$0x1]
    %v47 = vld [vmem:[%s3 + $0x10] sm:$0xff]
    %v48 = vld [vmem:[%s3 + $0x18] sm:$0x1]
    %v49 = vld [vmem:[%s3 + $0x20] sm:$0xff]
    %v50 = vld [vmem:[%s3 + $0x28] sm:$0x1]
    %v51 = vld [vmem:[%s3 + $0x30] sm:$0xff]
    %v52 = vld [vmem:[%s3 + $0x38] sm:$0x1]
    %v53 = vld [vmem:[%s3 + $0x40] sm:$0xff]
    %v54 = vld [vmem:[%s3 + $0x48] sm:$0x1]
    %v55 = vld [vmem:[%s3 + $0x50] sm:$0xff]
    %v56 = vld [vmem:[%s3 + $0x58] sm:$0x1]
    %v57 = vld [vmem:[%s3 + $0x60] sm:$0xff]
    %v58 = vld [vmem:[%s3 + $0x68] sm:$0x1]
    %v59 = vld [vmem:[%s3 + $0x70] sm:$0xff]
    %v60 = vld [vmem:[%s3 + $0x78] sm:$0x1]
    %v61 = vmax.f32 %v45, 0.0
    %v62 = vmax.f32 %v46, 0.0
    %v63 = vmax.f32 %v47, 0.0
    %v64 = vmax.f32 %v48, 0.0
    %v65 = vmax.f32 %v49, 0.0
    %v66 = vmax.f32 %v50, 0.0
    %v67 = vmax.f32 %v51, 0.0
    %v68 = vmax.f32 %v52, 0.0
    %v69 = vmax.f32 %v53, 0.0
    %v70 = vmax.f32 %v54, 0.0
    %v71 = vmax.f32 %v55, 0.0
    %v72 = vmax.f32 %v56, 0.0
    %v73 = vmax.f32 %v57, 0.0
    %v74 = vmax.f32 %v58, 0.0
    %v75 = vmax.f32 %v59, 0.0
    %v76 = vmax.f32 %v60, 0.0
    %v77 = vld [vmem:[%s4] sm:$0xff]
    %v78 = vld [vmem:[%s4 + $0x8] sm:$0xff]
    %v79 = vld [vmem:[%s4 + $0x10] sm:$0xff]
    %v80 = vld [vmem:[%s4 + $0x18] sm:$0x1]
    %v81 = vld [vmem:[%s4 + $0x20] sm:$0xff]
    %v82 = vld [vmem:[%s4 + $0x28] sm:$0xff]
    %v83 = vld [vmem:[%s4 + $0x30] sm:$0xff]
    %v84 = vld [vmem:[%s4 + $0x38] sm:$0x1]
    %v85 = vld [vmem:[%s4 + $0x40] sm:$0xff]
    %v86 = vld [vmem:[%s4 + $0x48] sm:$0xff]
    %v87 = vld [vmem:[%s4 + $0x50] sm:$0xff]
    %v88 = vld [vmem:[%s4 + $0x58] sm:$0x1]
    %v89 = vld [vmem:[%s4 + $0x60] sm:$0xff]
    %v90 = vld [vmem:[%s4 + $0x68] sm:$0xff]
    %v91 = vld [vmem:[%s4 + $0x70] sm:$0xff]
    %v92 = vld [vmem:[%s4 + $0x78] sm:$0x1]
    %v93 = vld [vmem:[%s4 + $0x80] sm:$0xff]
    %v94 = vld [vmem:[%s4 + $0x88] sm:$0xff]
    %v95 = vld [vmem:[%s4 + $0x90] sm:$0xff]
    %v96 = vld [vmem:[%s4 + $0x98] sm:$0x1]
    %v97 = vld [vmem:[%s4 + $0xa0] sm:$0xff]
    %v98 = vld [vmem:[%s4 + $0xa8] sm:$0xff]
    %v99 = vld [vmem:[%s4 + $0xb0] sm:$0xff]
    %v100 = vld [vmem:[%s4 + $0xb8] sm:$0x1]
    %v101 = vld [vmem:[%s4 + $0xc0] sm:$0xff]
    %v102 = vld [vmem:[%s4 + $0xc8] sm:$0xff]
    %v103 = vld [vmem:[%s4 + $0xd0] sm:$0xff]
    %v104 = vld [vmem:[%s4 + $0xd8] sm:$0x1]
    %v105 = vld [vmem:[%s4 + $0xe0] sm:$0xff]
    %v106 = vld [vmem:[%s4 + $0xe8] sm:$0xff]
    %v107 = vld [vmem:[%s4 + $0xf0] sm:$0xff]
    %v108 = vld [vmem:[%s4 + $0xf8] sm:$0x1]
    %v109 = vmax.f32 %v77, 0.0
    %v110 = vmax.f32 %v78, 0.0
    %v111 = vmax.f32 %v79, 0.0
    %v112 = vmax.f32 %v80, 0.0
    %v113 = vmax.f32 %v81, 0.0
    %v114 = vmax.f32 %v82, 0.0
    %v115 = vmax.f32 %v83, 0.0
    %v116 = vmax.f32 %v84, 0.0
    %v117 = vmax.f32 %v85, 0.0
    %v118 = vmax.f32 %v86, 0.0
    %v119 = vmax.f32 %v87, 0.0
    %v120 = vmax.f32 %v88, 0.0
    %v121 = vmax.f32 %v89, 0.0
    %v122 = vmax.f32 %v90, 0.0
    %v123 = vmax.f32 %v91, 0.0
    %v124 = vmax.f32 %v92, 0.0
    %v125 = vmax.f32 %v93, 0.0
    %v126 = vmax.f32 %v94, 0.0
    %v127 = vmax.f32 %v95, 0.0
    %v128 = vmax.f32 %v96, 0.0
    %v129 = vmax.f32 %v97, 0.0
    %v130 = vmax.f32 %v98, 0.0
    %v131 = vmax.f32 %v99, 0.0
    %v132 = vmax.f32 %v100, 0.0
    %v133 = vmax.f32 %v101, 0.0
    %v134 = vmax.f32 %v102, 0.0
    %v135 = vmax.f32 %v103, 0.0
    %v136 = vmax.f32 %v104, 0.0
    %v137 = vmax.f32 %v105, 0.0
    %v138 = vmax.f32 %v106, 0.0
    %v139 = vmax.f32 %v107, 0.0
    %v140 = vmax.f32 %v108, 0.0
    %v141 = vld [vmem:[%s6] sm:$0xff]
    %v142 = vld [vmem:[%s5] sm:$0xff]
    %144 = vset.pattern.permute.xlu0 0
    %145 = vperm.xlu0 %144, %v142
    %v146 = vpop.permute.xlu0 %145
    %v156 = vrot.slane %v63, 7
    %vm157 = vcmask 1041409
    %v158 = vsel %vm157, %v156, %v61
    %v159 = vrot.slane %v65, 6
    %vm160 = vcmask 1042434
    %v161 = vsel %vm160, %v159, %v158
    %v162 = vrot.slane %v67, 5
    %vm163 = vcmask 1043459
    %v164 = vsel %vm163, %v162, %v161
    %v165 = vrot.slane %v69, 4
    %vm166 = vcmask 1044484
    %v167 = vsel %vm166, %v165, %v164
    %v168 = vrot.slane %v71, 3
    %vm169 = vcmask 1045509
    %v170 = vsel %vm169, %v168, %v167
    %v171 = vrot.slane %v73, 2
    %vm172 = vcmask 1046534
    %v173 = vsel %vm172, %v171, %v170
    %v174 = vrot.slane %v75, 1
    %vm175 = vcmask 1047559
    %v176 = vsel %vm175, %v174, %v173
    %v178 = vmul.f32 %v146, %v176
    %179 = vset.pattern.permute.xlu0 1
    %180 = vperm.xlu0 %179, %v142
    %v181 = vpop.permute.xlu0 %180
    %v183 = vrot.slane %v61, 1
    %v184 = vsel %vm157, %v63, %v183
    %v185 = vrot.slane %v65, 7
    %v186 = vsel %vm160, %v185, %v184
    %v187 = vrot.slane %v67, 6
    %v188 = vsel %vm163, %v187, %v186
    %v189 = vrot.slane %v69, 5
    %v190 = vsel %vm166, %v189, %v188
    %v191 = vrot.slane %v71, 4
    %v192 = vsel %vm169, %v191, %v190
    %v193 = vrot.slane %v73, 3
    %v194 = vsel %vm172, %v193, %v192
    %v195 = vrot.slane %v75, 2
    %v196 = vsel %vm175, %v195, %v194
    %v198 = vmul.f32 %v181, %v196
    %v199 = vadd.f32 %v178, %v198
    %200 = vset.pattern.permute.xlu0 2
    %201 = vperm.xlu0 %200, %v142
    %v202 = vpop.permute.xlu0 %201
    %v204 = vrot.slane %v61, 2
    %v205 = vrot.slane %v63, 1
    %v206 = vsel %vm157, %v205, %v204
    %v207 = vsel %vm160, %v65, %v206
    %v208 = vrot.slane %v67, 7
    %v209 = vsel %vm163, %v208, %v207
    %v210 = vrot.slane %v69, 6
    %v211 = vsel %vm166, %v210, %v209
    %v212 = vrot.slane %v71, 5
    %v213 = vsel %vm169, %v212, %v211
    %v214 = vrot.slane %v73, 4
    %v215 = vsel %vm172, %v214, %v213
    %v216 = vrot.slane %v75, 3
    %v217 = vsel %vm175, %v216, %v215
    %v219 = vmul.f32 %v202, %v217
    %v220 = vadd.f32 %v199, %v219
    %221 = vset.pattern.permute.xlu0 3
    %222 = vperm.xlu0 %221, %v142
    %v223 = vpop.permute.xlu0 %222
    %v225 = vrot.slane %v61, 3
    %v226 = vrot.slane %v63, 2
    %v227 = vsel %vm157, %v226, %v225
    %v228 = vrot.slane %v65, 1
    %v229 = vsel %vm160, %v228, %v227
    %v230 = vsel %vm163, %v67, %v229
    %v231 = vrot.slane %v69, 7
    %v232 = vsel %vm166, %v231, %v230
    %v233 = vrot.slane %v71, 6
    %v234 = vsel %vm169, %v233, %v232
    %v235 = vrot.slane %v73, 5
    %v236 = vsel %vm172, %v235, %v234
    %v237 = vrot.slane %v75, 4
    %v238 = vsel %vm175, %v237, %v236
    %v240 = vmul.f32 %v223, %v238
    %v241 = vadd.f32 %v220, %v240
    %242 = vset.pattern.permute.xlu0 4
    %243 = vperm.xlu0 %242, %v142
    %v244 = vpop.permute.xlu0 %243
    %v246 = vrot.slane %v61, 4
    %v247 = vrot.slane %v63, 3
    %v248 = vsel %vm157, %v247, %v246
    %v249 = vrot.slane %v65, 2
    %v250 = vsel %vm160, %v249, %v248
    %v251 = vrot.slane %v67, 1
    %v252 = vsel %vm163, %v251, %v250
    %v253 = vsel %vm166, %v69, %v252
    %v254 = vrot.slane %v71, 7
    %v255 = vsel %vm169, %v254, %v253
    %v256 = vrot.slane %v73, 6
    %v257 = vsel %vm172, %v256, %v255
    %v258 = vrot.slane %v75, 5
    %v259 = vsel %vm175, %v258, %v257
    %v261 = vmul.f32 %v244, %v259
    %v262 = vadd.f32 %v241, %v261
    %263 = vset.pattern.permute.xlu0 5
    %264 = vperm.xlu0 %263, %v142
    %v265 = vpop.permute.xlu0 %264
    %v267 = vrot.slane %v61, 5
    %v268 = vrot.slane %v63, 4
    %v269 = vsel %vm157, %v268, %v267
    %v270 = vrot.slane %v65, 3
    %v271 = vsel %vm160, %v270, %v269
    %v272 = vrot.slane %v67, 2
    %v273 = vsel %vm163, %v272, %v271
    %v274 = vrot.slane %v69, 1
    %v275 = vsel %vm166, %v274, %v273
    %v276 = vsel %vm169, %v71, %v275
    %v277 = vrot.slane %v73, 7
    %v278 = vsel %vm172, %v277, %v276
    %v279 = vrot.slane %v75, 6
    %v280 = vsel %vm175, %v279, %v278
    %v282 = vmul.f32 %v265, %v280
    %v283 = vadd.f32 %v262, %v282
    %284 = vset.pattern.permute.xlu0 6
    %285 = vperm.xlu0 %284, %v142
    %v286 = vpop.permute.xlu0 %285
    %v288 = vrot.slane %v61, 6
    %v289 = vrot.slane %v63, 5
    %v290 = vsel %vm157, %v289, %v288
    %v291 = vrot.slane %v65, 4
    %v292 = vsel %vm160, %v291, %v290
    %v293 = vrot.slane %v67, 3
    %v294 = vsel %vm163, %v293, %v292
    %v295 = vrot.slane %v69, 2
    %v296 = vsel %vm166, %v295, %v294
    %v297 = vrot.slane %v71, 1
    %v298 = vsel %vm169, %v297, %v296
    %v299 = vsel %vm172, %v73, %v298
    %v300 = vrot.slane %v75, 7
    %v301 = vsel %vm175, %v300, %v299
    %v303 = vmul.f32 %v286, %v301
    %v304 = vadd.f32 %v283, %v303
    %305 = vset.pattern.permute.xlu0 7
    %306 = vperm.xlu0 %305, %v142
    %v307 = vpop.permute.xlu0 %306
    %v309 = vrot.slane %v61, 7
    %v310 = vrot.slane %v63, 6
    %v311 = vsel %vm157, %v310, %v309
    %v312 = vrot.slane %v65, 5
    %v313 = vsel %vm160, %v312, %v311
    %v314 = vrot.slane %v67, 4
    %v315 = vsel %vm163, %v314, %v313
    %v316 = vrot.slane %v69, 3
    %v317 = vsel %vm166, %v316, %v315
    %v318 = vrot.slane %v71, 2
    %v319 = vsel %vm169, %v318, %v317
    %v320 = vrot.slane %v73, 1
    %v321 = vsel %vm172, %v320, %v319
    %v322 = vsel %vm175, %v75, %v321
    %v324 = vmul.f32 %v307, %v322
    %v325 = vadd.f32 %v304, %v324
    %326 = vset.pattern.permute.xlu0 8
    %327 = vperm.xlu0 %326, %v142
    %v328 = vpop.permute.xlu0 %327
    %v338 = vrot.slane %v64, 7
    %v339 = vsel %vm157, %v338, %v62
    %v340 = vrot.slane %v66, 6
    %v341 = vsel %vm160, %v340, %v339
    %v342 = vrot.slane %v68, 5
    %v343 = vsel %vm163, %v342, %v341
    %v344 = vrot.slane %v70, 4
    %v345 = vsel %vm166, %v344, %v343
    %v346 = vrot.slane %v72, 3
    %v347 = vsel %vm169, %v346, %v345
    %v348 = vrot.slane %v74, 2
    %v349 = vsel %vm172, %v348, %v347
    %v350 = vrot.slane %v76, 1
    %v351 = vsel %vm175, %v350, %v349
    %v353 = vmul.f32 %v328, %v351
    %v354 = vadd.f32 %v325, %v353
    %vm355 = vcmask 64512
    %v357 = vsel %vm355, %v141, 0
    %359 = vmatprep.subr.mxu0 0.0
    %360 = vmatpush1.msra.mxu0 %v354
    %361 = vmatprep.subr.mxu0 0.0
    %362 = vmatpush1.msra.mxu0 0.0
    %363 = vmatprep.subr.mxu0 0.0
    %364 = vmatpush1.msra.mxu0 0.0
    %365 = vmatprep.subr.mxu0 0.0
    %366 = vmatpush1.msra.mxu0 0.0
    %367 = vmatprep.subr.mxu0 0.0
    %368 = vmatpush1.msra.mxu0 0.0
    %369 = vmatprep.subr.mxu0 0.0
    %370 = vmatpush1.msra.mxu0 0.0
    %371 = vmatprep.subr.mxu0 0.0
    %372 = vmatpush1.msra.mxu0 0.0
    %373 = vmatprep.subr.mxu0 0.0
    %374 = vmatpush1.msra.mxu0 0.0
    %375 = vmatprep.subr.mxu0 0.0
    %376 = vmatpush1.msra.mxu0 0.0
    %377 = vmatprep.subr.mxu0 0.0
    %378 = vmatpush1.msra.mxu0 0.0
    %379 = vmatprep.subr.mxu0 0.0
    %380 = vmatpush1.msra.mxu0 0.0
    %381 = vmatprep.subr.mxu0 0.0
    %382 = vmatpush1.msra.mxu0 0.0
    %383 = vmatprep.subr.mxu0 0.0
    %384 = vmatpush1.msra.mxu0 0.0
    %385 = vmatprep.subr.mxu0 0.0
    %386 = vmatpush1.msra.mxu0 0.0
    %387 = vmatprep.subr.mxu0 0.0
    %388 = vmatpush1.msra.mxu0 0.0
    %389 = vmatprep.subr.mxu0 0.0
    %390 = vmatpush1.msra.mxu0 0.0
    %391 = vmatprep.subr.mxu0 0.0
    %392 = vmatpush1.msra.mxu0 0.0
    %393 = vmatprep.subr.mxu0 0.0
    %394 = vmatpush1.msra.mxu0 0.0
    %395 = vmatprep.subr.mxu0 0.0
    %396 = vmatpush1.msra.mxu0 0.0
    %397 = vmatprep.subr.mxu0 0.0
    %398 = vmatpush1.msra.mxu0 0.0
    %399 = vmatprep.subr.mxu0 0.0
    %400 = vmatpush1.msra.mxu0 0.0
    %401 = vmatprep.subr.mxu0 0.0
    %402 = vmatpush1.msra.mxu0 0.0
    %403 = vmatprep.subr.mxu0 0.0
    %404 = vmatpush1.msra.mxu0 0.0
    %405 = vmatprep.subr.mxu0 0.0
    %406 = vmatpush1.msra.mxu0 0.0
    %407 = vmatprep.subr.mxu0 0.0
    %408 = vmatpush1.msra.mxu0 0.0
    %409 = vmatprep.subr.mxu0 0.0
    %410 = vmatpush1.msra.mxu0 0.0
    %411 = vmatprep.subr.mxu0 0.0
    %412 = vmatpush1.msra.mxu0 0.0
    %413 = vmatprep.subr.mxu0 0.0
    %414 = vmatpush1.msra.mxu0 0.0
    %415 = vmatprep.subr.mxu0 0.0
    %416 = vmatpush1.msra.mxu0 0.0
    %417 = vmatprep.subr.mxu0 0.0
    %418 = vmatpush1.msra.mxu0 0.0
    %419 = vmatprep.subr.mxu0 0.0
    %420 = vmatpush1.msra.mxu0 0.0
    %421 = vmatprep.subr.mxu0 0.0
    %422 = vmatpush1.msra.mxu0 0.0
    %423 = vmatprep.mubr.f32.mxu0 0.0
    %424 = vmatmul.mubr.f32.gmra.mrb[0].mxu0 %v357
    %v425 = vpop.f32.mrb[0].mxu0
    %v426 = vadd.f32 0.0, %v425
    %v427 = vpop.f32.mrb[0].mxu0
    %428 = vdwg.mxu0
    %429 = vadd.xlane.f32.xlu0 %v426
    %v430 = vpop.xlane.xlu0 %429
    %v431 = vrcp.pop 128.0
    %v432 = vmul.f32 %v430, %v431
    %v433 = vsub.f32 %v426, %v432
    %v434 = vmul.f32 %v433, %v433
    %435 = vadd.xlane.f32.xlu0 %v434
    %v436 = vpop.xlane.xlu0 %435
    %v437 = vmul.f32 %v436, %v431
    %v438 = vadd.f32 %v437, 1e-05
    %v439 = vrsqrt.pop %v438
    %v440 = vmul.f32 %v433, %v439
    %v441 = vld [vmem:[%s8] sm:$0xff]
    %v442 = vld [vmem:[%s7] sm:$0xff]
    %444 = vset.pattern.permute.xlu0 0
    %445 = vperm.xlu0 %444, %v442
    %v446 = vpop.permute.xlu0 %445
    %v456 = vrot.slane %v113, 7
    %v457 = vsel %vm157, %v456, %v109
    %v458 = vrot.slane %v117, 6
    %v459 = vsel %vm160, %v458, %v457
    %v460 = vrot.slane %v121, 5
    %v461 = vsel %vm163, %v460, %v459
    %v462 = vrot.slane %v125, 4
    %v463 = vsel %vm166, %v462, %v461
    %v464 = vrot.slane %v129, 3
    %v465 = vsel %vm169, %v464, %v463
    %v466 = vrot.slane %v133, 2
    %v467 = vsel %vm172, %v466, %v465
    %v468 = vrot.slane %v137, 1
    %v469 = vsel %vm175, %v468, %v467
    %v471 = vmul.f32 %v446, %v469
    %472 = vset.pattern.permute.xlu0 1
    %473 = vperm.xlu0 %472, %v442
    %v474 = vpop.permute.xlu0 %473
    %v476 = vrot.slane %v109, 1
    %v477 = vsel %vm157, %v113, %v476
    %v478 = vrot.slane %v117, 7
    %v479 = vsel %vm160, %v478, %v477
    %v480 = vrot.slane %v121, 6
    %v481 = vsel %vm163, %v480, %v479
    %v482 = vrot.slane %v125, 5
    %v483 = vsel %vm166, %v482, %v481
    %v484 = vrot.slane %v129, 4
    %v485 = vsel %vm169, %v484, %v483
    %v486 = vrot.slane %v133, 3
    %v487 = vsel %vm172, %v486, %v485
    %v488 = vrot.slane %v137, 2
    %v489 = vsel %vm175, %v488, %v487
    %v491 = vmul.f32 %v474, %v489
    %v492 = vadd.f32 %v471, %v491
    %493 = vset.pattern.permute.xlu0 2
    %494 = vperm.xlu0 %493, %v442
    %v495 = vpop.permute.xlu0 %494
    %v497 = vrot.slane %v109, 2
    %v498 = vrot.slane %v113, 1
    %v499 = vsel %vm157, %v498, %v497
    %v500 = vsel %vm160, %v117, %v499
    %v501 = vrot.slane %v121, 7
    %v502 = vsel %vm163, %v501, %v500
    %v503 = vrot.slane %v125, 6
    %v504 = vsel %vm166, %v503, %v502
    %v505 = vrot.slane %v129, 5
    %v506 = vsel %vm169, %v505, %v504
    %v507 = vrot.slane %v133, 4
    %v508 = vsel %vm172, %v507, %v506
    %v509 = vrot.slane %v137, 3
    %v510 = vsel %vm175, %v509, %v508
    %v512 = vmul.f32 %v495, %v510
    %v513 = vadd.f32 %v492, %v512
    %514 = vset.pattern.permute.xlu0 3
    %515 = vperm.xlu0 %514, %v442
    %v516 = vpop.permute.xlu0 %515
    %v518 = vrot.slane %v109, 3
    %v519 = vrot.slane %v113, 2
    %v520 = vsel %vm157, %v519, %v518
    %v521 = vrot.slane %v117, 1
    %v522 = vsel %vm160, %v521, %v520
    %v523 = vsel %vm163, %v121, %v522
    %v524 = vrot.slane %v125, 7
    %v525 = vsel %vm166, %v524, %v523
    %v526 = vrot.slane %v129, 6
    %v527 = vsel %vm169, %v526, %v525
    %v528 = vrot.slane %v133, 5
    %v529 = vsel %vm172, %v528, %v527
    %v530 = vrot.slane %v137, 4
    %v531 = vsel %vm175, %v530, %v529
    %v533 = vmul.f32 %v516, %v531
    %v534 = vadd.f32 %v513, %v533
    %535 = vset.pattern.permute.xlu0 4
    %536 = vperm.xlu0 %535, %v442
    %v537 = vpop.permute.xlu0 %536
    %v539 = vrot.slane %v109, 4
    %v540 = vrot.slane %v113, 3
    %v541 = vsel %vm157, %v540, %v539
    %v542 = vrot.slane %v117, 2
    %v543 = vsel %vm160, %v542, %v541
    %v544 = vrot.slane %v121, 1
    %v545 = vsel %vm163, %v544, %v543
    %v546 = vsel %vm166, %v125, %v545
    %v547 = vrot.slane %v129, 7
    %v548 = vsel %vm169, %v547, %v546
    %v549 = vrot.slane %v133, 6
    %v550 = vsel %vm172, %v549, %v548
    %v551 = vrot.slane %v137, 5
    %v552 = vsel %vm175, %v551, %v550
    %v554 = vmul.f32 %v537, %v552
    %v555 = vadd.f32 %v534, %v554
    %556 = vset.pattern.permute.xlu0 5
    %557 = vperm.xlu0 %556, %v442
    %v558 = vpop.permute.xlu0 %557
    %v560 = vrot.slane %v109, 5
    %v561 = vrot.slane %v113, 4
    %v562 = vsel %vm157, %v561, %v560
    %v563 = vrot.slane %v117, 3
    %v564 = vsel %vm160, %v563, %v562
    %v565 = vrot.slane %v121, 2
    %v566 = vsel %vm163, %v565, %v564
    %v567 = vrot.slane %v125, 1
    %v568 = vsel %vm166, %v567, %v566
    %v569 = vsel %vm169, %v129, %v568
    %v570 = vrot.slane %v133, 7
    %v571 = vsel %vm172, %v570, %v569
    %v572 = vrot.slane %v137, 6
    %v573 = vsel %vm175, %v572, %v571
    %v575 = vmul.f32 %v558, %v573
    %v576 = vadd.f32 %v555, %v575
    %577 = vset.pattern.permute.xlu0 6
    %578 = vperm.xlu0 %577, %v442
    %v579 = vpop.permute.xlu0 %578
    %v581 = vrot.slane %v109, 6
    %v582 = vrot.slane %v113, 5
    %v583 = vsel %vm157, %v582, %v581
    %v584 = vrot.slane %v117, 4
    %v585 = vsel %vm160, %v584, %v583
    %v586 = vrot.slane %v121, 3
    %v587 = vsel %vm163, %v586, %v585
    %v588 = vrot.slane %v125, 2
    %v589 = vsel %vm166, %v588, %v587
    %v590 = vrot.slane %v129, 1
    %v591 = vsel %vm169, %v590, %v589
    %v592 = vsel %vm172, %v133, %v591
    %v593 = vrot.slane %v137, 7
    %v594 = vsel %vm175, %v593, %v592
    %v596 = vmul.f32 %v579, %v594
    %v597 = vadd.f32 %v576, %v596
    %598 = vset.pattern.permute.xlu0 7
    %599 = vperm.xlu0 %598, %v442
    %v600 = vpop.permute.xlu0 %599
    %v602 = vrot.slane %v109, 7
    %v603 = vrot.slane %v113, 6
    %v604 = vsel %vm157, %v603, %v602
    %v605 = vrot.slane %v117, 5
    %v606 = vsel %vm160, %v605, %v604
    %v607 = vrot.slane %v121, 4
    %v608 = vsel %vm163, %v607, %v606
    %v609 = vrot.slane %v125, 3
    %v610 = vsel %vm166, %v609, %v608
    %v611 = vrot.slane %v129, 2
    %v612 = vsel %vm169, %v611, %v610
    %v613 = vrot.slane %v133, 1
    %v614 = vsel %vm172, %v613, %v612
    %v615 = vsel %vm175, %v137, %v614
    %v617 = vmul.f32 %v600, %v615
    %v618 = vadd.f32 %v597, %v617
    %619 = vset.pattern.permute.xlu0 8
    %620 = vperm.xlu0 %619, %v442
    %v621 = vpop.permute.xlu0 %620
    %v631 = vrot.slane %v114, 7
    %v632 = vsel %vm157, %v631, %v110
    %v633 = vrot.slane %v118, 6
    %v634 = vsel %vm160, %v633, %v632
    %v635 = vrot.slane %v122, 5
    %v636 = vsel %vm163, %v635, %v634
    %v637 = vrot.slane %v126, 4
    %v638 = vsel %vm166, %v637, %v636
    %v639 = vrot.slane %v130, 3
    %v640 = vsel %vm169, %v639, %v638
    %v641 = vrot.slane %v134, 2
    %v642 = vsel %vm172, %v641, %v640
    %v643 = vrot.slane %v138, 1
    %v644 = vsel %vm175, %v643, %v642
    %v646 = vmul.f32 %v621, %v644
    %v647 = vadd.f32 %v618, %v646
    %648 = vset.pattern.permute.xlu0 9
    %649 = vperm.xlu0 %648, %v442
    %v650 = vpop.permute.xlu0 %649
    %v652 = vrot.slane %v110, 1
    %v653 = vsel %vm157, %v114, %v652
    %v654 = vrot.slane %v118, 7
    %v655 = vsel %vm160, %v654, %v653
    %v656 = vrot.slane %v122, 6
    %v657 = vsel %vm163, %v656, %v655
    %v658 = vrot.slane %v126, 5
    %v659 = vsel %vm166, %v658, %v657
    %v660 = vrot.slane %v130, 4
    %v661 = vsel %vm169, %v660, %v659
    %v662 = vrot.slane %v134, 3
    %v663 = vsel %vm172, %v662, %v661
    %v664 = vrot.slane %v138, 2
    %v665 = vsel %vm175, %v664, %v663
    %v667 = vmul.f32 %v650, %v665
    %v668 = vadd.f32 %v647, %v667
    %669 = vset.pattern.permute.xlu0 10
    %670 = vperm.xlu0 %669, %v442
    %v671 = vpop.permute.xlu0 %670
    %v673 = vrot.slane %v110, 2
    %v674 = vrot.slane %v114, 1
    %v675 = vsel %vm157, %v674, %v673
    %v676 = vsel %vm160, %v118, %v675
    %v677 = vrot.slane %v122, 7
    %v678 = vsel %vm163, %v677, %v676
    %v679 = vrot.slane %v126, 6
    %v680 = vsel %vm166, %v679, %v678
    %v681 = vrot.slane %v130, 5
    %v682 = vsel %vm169, %v681, %v680
    %v683 = vrot.slane %v134, 4
    %v684 = vsel %vm172, %v683, %v682
    %v685 = vrot.slane %v138, 3
    %v686 = vsel %vm175, %v685, %v684
    %v688 = vmul.f32 %v671, %v686
    %v689 = vadd.f32 %v668, %v688
    %690 = vset.pattern.permute.xlu0 11
    %691 = vperm.xlu0 %690, %v442
    %v692 = vpop.permute.xlu0 %691
    %v694 = vrot.slane %v110, 3
    %v695 = vrot.slane %v114, 2
    %v696 = vsel %vm157, %v695, %v694
    %v697 = vrot.slane %v118, 1
    %v698 = vsel %vm160, %v697, %v696
    %v699 = vsel %vm163, %v122, %v698
    %v700 = vrot.slane %v126, 7
    %v701 = vsel %vm166, %v700, %v699
    %v702 = vrot.slane %v130, 6
    %v703 = vsel %vm169, %v702, %v701
    %v704 = vrot.slane %v134, 5
    %v705 = vsel %vm172, %v704, %v703
    %v706 = vrot.slane %v138, 4
    %v707 = vsel %vm175, %v706, %v705
    %v709 = vmul.f32 %v692, %v707
    %v710 = vadd.f32 %v689, %v709
    %711 = vset.pattern.permute.xlu0 12
    %712 = vperm.xlu0 %711, %v442
    %v713 = vpop.permute.xlu0 %712
    %v715 = vrot.slane %v110, 4
    %v716 = vrot.slane %v114, 3
    %v717 = vsel %vm157, %v716, %v715
    %v718 = vrot.slane %v118, 2
    %v719 = vsel %vm160, %v718, %v717
    %v720 = vrot.slane %v122, 1
    %v721 = vsel %vm163, %v720, %v719
    %v722 = vsel %vm166, %v126, %v721
    %v723 = vrot.slane %v130, 7
    %v724 = vsel %vm169, %v723, %v722
    %v725 = vrot.slane %v134, 6
    %v726 = vsel %vm172, %v725, %v724
    %v727 = vrot.slane %v138, 5
    %v728 = vsel %vm175, %v727, %v726
    %v730 = vmul.f32 %v713, %v728
    %v731 = vadd.f32 %v710, %v730
    %732 = vset.pattern.permute.xlu0 13
    %733 = vperm.xlu0 %732, %v442
    %v734 = vpop.permute.xlu0 %733
    %v736 = vrot.slane %v110, 5
    %v737 = vrot.slane %v114, 4
    %v738 = vsel %vm157, %v737, %v736
    %v739 = vrot.slane %v118, 3
    %v740 = vsel %vm160, %v739, %v738
    %v741 = vrot.slane %v122, 2
    %v742 = vsel %vm163, %v741, %v740
    %v743 = vrot.slane %v126, 1
    %v744 = vsel %vm166, %v743, %v742
    %v745 = vsel %vm169, %v130, %v744
    %v746 = vrot.slane %v134, 7
    %v747 = vsel %vm172, %v746, %v745
    %v748 = vrot.slane %v138, 6
    %v749 = vsel %vm175, %v748, %v747
    %v751 = vmul.f32 %v734, %v749
    %v752 = vadd.f32 %v731, %v751
    %753 = vset.pattern.permute.xlu0 14
    %754 = vperm.xlu0 %753, %v442
    %v755 = vpop.permute.xlu0 %754
    %v757 = vrot.slane %v110, 6
    %v758 = vrot.slane %v114, 5
    %v759 = vsel %vm157, %v758, %v757
    %v760 = vrot.slane %v118, 4
    %v761 = vsel %vm160, %v760, %v759
    %v762 = vrot.slane %v122, 3
    %v763 = vsel %vm163, %v762, %v761
    %v764 = vrot.slane %v126, 2
    %v765 = vsel %vm166, %v764, %v763
    %v766 = vrot.slane %v130, 1
    %v767 = vsel %vm169, %v766, %v765
    %v768 = vsel %vm172, %v134, %v767
    %v769 = vrot.slane %v138, 7
    %v770 = vsel %vm175, %v769, %v768
    %v772 = vmul.f32 %v755, %v770
    %v773 = vadd.f32 %v752, %v772
    %774 = vset.pattern.permute.xlu0 15
    %775 = vperm.xlu0 %774, %v442
    %v776 = vpop.permute.xlu0 %775
    %v778 = vrot.slane %v110, 7
    %v779 = vrot.slane %v114, 6
    %v780 = vsel %vm157, %v779, %v778
    %v781 = vrot.slane %v118, 5
    %v782 = vsel %vm160, %v781, %v780
    %v783 = vrot.slane %v122, 4
    %v784 = vsel %vm163, %v783, %v782
    %v785 = vrot.slane %v126, 3
    %v786 = vsel %vm166, %v785, %v784
    %v787 = vrot.slane %v130, 2
    %v788 = vsel %vm169, %v787, %v786
    %v789 = vrot.slane %v134, 1
    %v790 = vsel %vm172, %v789, %v788
    %v791 = vsel %vm175, %v138, %v790
    %v793 = vmul.f32 %v776, %v791
    %v794 = vadd.f32 %v773, %v793
    %795 = vset.pattern.permute.xlu0 16
    %796 = vperm.xlu0 %795, %v442
    %v797 = vpop.permute.xlu0 %796
    %v807 = vrot.slane %v115, 7
    %v808 = vsel %vm157, %v807, %v111
    %v809 = vrot.slane %v119, 6
    %v810 = vsel %vm160, %v809, %v808
    %v811 = vrot.slane %v123, 5
    %v812 = vsel %vm163, %v811, %v810
    %v813 = vrot.slane %v127, 4
    %v814 = vsel %vm166, %v813, %v812
    %v815 = vrot.slane %v131, 3
    %v816 = vsel %vm169, %v815, %v814
    %v817 = vrot.slane %v135, 2
    %v818 = vsel %vm172, %v817, %v816
    %v819 = vrot.slane %v139, 1
    %v820 = vsel %vm175, %v819, %v818
    %v822 = vmul.f32 %v797, %v820
    %v823 = vadd.f32 %v794, %v822
    %824 = vset.pattern.permute.xlu0 17
    %825 = vperm.xlu0 %824, %v442
    %v826 = vpop.permute.xlu0 %825
    %v828 = vrot.slane %v111, 1
    %v829 = vsel %vm157, %v115, %v828
    %v830 = vrot.slane %v119, 7
    %v831 = vsel %vm160, %v830, %v829
    %v832 = vrot.slane %v123, 6
    %v833 = vsel %vm163, %v832, %v831
    %v834 = vrot.slane %v127, 5
    %v835 = vsel %vm166, %v834, %v833
    %v836 = vrot.slane %v131, 4
    %v837 = vsel %vm169, %v836, %v835
    %v838 = vrot.slane %v135, 3
    %v839 = vsel %vm172, %v838, %v837
    %v840 = vrot.slane %v139, 2
    %v841 = vsel %vm175, %v840, %v839
    %v843 = vmul.f32 %v826, %v841
    %v844 = vadd.f32 %v823, %v843
    %845 = vset.pattern.permute.xlu0 18
    %846 = vperm.xlu0 %845, %v442
    %v847 = vpop.permute.xlu0 %846
    %v849 = vrot.slane %v111, 2
    %v850 = vrot.slane %v115, 1
    %v851 = vsel %vm157, %v850, %v849
    %v852 = vsel %vm160, %v119, %v851
    %v853 = vrot.slane %v123, 7
    %v854 = vsel %vm163, %v853, %v852
    %v855 = vrot.slane %v127, 6
    %v856 = vsel %vm166, %v855, %v854
    %v857 = vrot.slane %v131, 5
    %v858 = vsel %vm169, %v857, %v856
    %v859 = vrot.slane %v135, 4
    %v860 = vsel %vm172, %v859, %v858
    %v861 = vrot.slane %v139, 3
    %v862 = vsel %vm175, %v861, %v860
    %v864 = vmul.f32 %v847, %v862
    %v865 = vadd.f32 %v844, %v864
    %866 = vset.pattern.permute.xlu0 19
    %867 = vperm.xlu0 %866, %v442
    %v868 = vpop.permute.xlu0 %867
    %v870 = vrot.slane %v111, 3
    %v871 = vrot.slane %v115, 2
    %v872 = vsel %vm157, %v871, %v870
    %v873 = vrot.slane %v119, 1
    %v874 = vsel %vm160, %v873, %v872
    %v875 = vsel %vm163, %v123, %v874
    %v876 = vrot.slane %v127, 7
    %v877 = vsel %vm166, %v876, %v875
    %v878 = vrot.slane %v131, 6
    %v879 = vsel %vm169, %v878, %v877
    %v880 = vrot.slane %v135, 5
    %v881 = vsel %vm172, %v880, %v879
    %v882 = vrot.slane %v139, 4
    %v883 = vsel %vm175, %v882, %v881
    %v885 = vmul.f32 %v868, %v883
    %v886 = vadd.f32 %v865, %v885
    %887 = vset.pattern.permute.xlu0 20
    %888 = vperm.xlu0 %887, %v442
    %v889 = vpop.permute.xlu0 %888
    %v891 = vrot.slane %v111, 4
    %v892 = vrot.slane %v115, 3
    %v893 = vsel %vm157, %v892, %v891
    %v894 = vrot.slane %v119, 2
    %v895 = vsel %vm160, %v894, %v893
    %v896 = vrot.slane %v123, 1
    %v897 = vsel %vm163, %v896, %v895
    %v898 = vsel %vm166, %v127, %v897
    %v899 = vrot.slane %v131, 7
    %v900 = vsel %vm169, %v899, %v898
    %v901 = vrot.slane %v135, 6
    %v902 = vsel %vm172, %v901, %v900
    %v903 = vrot.slane %v139, 5
    %v904 = vsel %vm175, %v903, %v902
    %v906 = vmul.f32 %v889, %v904
    %v907 = vadd.f32 %v886, %v906
    %908 = vset.pattern.permute.xlu0 21
    %909 = vperm.xlu0 %908, %v442
    %v910 = vpop.permute.xlu0 %909
    %v912 = vrot.slane %v111, 5
    %v913 = vrot.slane %v115, 4
    %v914 = vsel %vm157, %v913, %v912
    %v915 = vrot.slane %v119, 3
    %v916 = vsel %vm160, %v915, %v914
    %v917 = vrot.slane %v123, 2
    %v918 = vsel %vm163, %v917, %v916
    %v919 = vrot.slane %v127, 1
    %v920 = vsel %vm166, %v919, %v918
    %v921 = vsel %vm169, %v131, %v920
    %v922 = vrot.slane %v135, 7
    %v923 = vsel %vm172, %v922, %v921
    %v924 = vrot.slane %v139, 6
    %v925 = vsel %vm175, %v924, %v923
    %v927 = vmul.f32 %v910, %v925
    %v928 = vadd.f32 %v907, %v927
    %929 = vset.pattern.permute.xlu0 22
    %930 = vperm.xlu0 %929, %v442
    %v931 = vpop.permute.xlu0 %930
    %v933 = vrot.slane %v111, 6
    %v934 = vrot.slane %v115, 5
    %v935 = vsel %vm157, %v934, %v933
    %v936 = vrot.slane %v119, 4
    %v937 = vsel %vm160, %v936, %v935
    %v938 = vrot.slane %v123, 3
    %v939 = vsel %vm163, %v938, %v937
    %v940 = vrot.slane %v127, 2
    %v941 = vsel %vm166, %v940, %v939
    %v942 = vrot.slane %v131, 1
    %v943 = vsel %vm169, %v942, %v941
    %v944 = vsel %vm172, %v135, %v943
    %v945 = vrot.slane %v139, 7
    %v946 = vsel %vm175, %v945, %v944
    %v948 = vmul.f32 %v931, %v946
    %v949 = vadd.f32 %v928, %v948
    %950 = vset.pattern.permute.xlu0 23
    %951 = vperm.xlu0 %950, %v442
    %v952 = vpop.permute.xlu0 %951
    %v954 = vrot.slane %v111, 7
    %v955 = vrot.slane %v115, 6
    %v956 = vsel %vm157, %v955, %v954
    %v957 = vrot.slane %v119, 5
    %v958 = vsel %vm160, %v957, %v956
    %v959 = vrot.slane %v123, 4
    %v960 = vsel %vm163, %v959, %v958
    %v961 = vrot.slane %v127, 3
    %v962 = vsel %vm166, %v961, %v960
    %v963 = vrot.slane %v131, 2
    %v964 = vsel %vm169, %v963, %v962
    %v965 = vrot.slane %v135, 1
    %v966 = vsel %vm172, %v965, %v964
    %v967 = vsel %vm175, %v139, %v966
    %v969 = vmul.f32 %v952, %v967
    %v970 = vadd.f32 %v949, %v969
    %971 = vset.pattern.permute.xlu0 24
    %972 = vperm.xlu0 %971, %v442
    %v973 = vpop.permute.xlu0 %972
    %v983 = vrot.slane %v116, 7
    %v984 = vsel %vm157, %v983, %v112
    %v985 = vrot.slane %v120, 6
    %v986 = vsel %vm160, %v985, %v984
    %v987 = vrot.slane %v124, 5
    %v988 = vsel %vm163, %v987, %v986
    %v989 = vrot.slane %v128, 4
    %v990 = vsel %vm166, %v989, %v988
    %v991 = vrot.slane %v132, 3
    %v992 = vsel %vm169, %v991, %v990
    %v993 = vrot.slane %v136, 2
    %v994 = vsel %vm172, %v993, %v992
    %v995 = vrot.slane %v140, 1
    %v996 = vsel %vm175, %v995, %v994
    %v998 = vmul.f32 %v973, %v996
    %v999 = vadd.f32 %v970, %v998
    %v1001 = vsel %vm355, %v441, 0
    %1003 = vmatprep.subr.mxu0 0.0
    %1004 = vmatpush1.msra.mxu0 %v999
    %1005 = vmatprep.subr.mxu0 0.0
    %1006 = vmatpush1.msra.mxu0 0.0
    %1007 = vmatprep.subr.mxu0 0.0
    %1008 = vmatpush1.msra.mxu0 0.0
    %1009 = vmatprep.subr.mxu0 0.0
    %1010 = vmatpush1.msra.mxu0 0.0
    %1011 = vmatprep.subr.mxu0 0.0
    %1012 = vmatpush1.msra.mxu0 0.0
    %1013 = vmatprep.subr.mxu0 0.0
    %1014 = vmatpush1.msra.mxu0 0.0
    %1015 = vmatprep.subr.mxu0 0.0
    %1016 = vmatpush1.msra.mxu0 0.0
    %1017 = vmatprep.subr.mxu0 0.0
    %1018 = vmatpush1.msra.mxu0 0.0
    %1019 = vmatprep.subr.mxu0 0.0
    %1020 = vmatpush1.msra.mxu0 0.0
    %1021 = vmatprep.subr.mxu0 0.0
    %1022 = vmatpush1.msra.mxu0 0.0
    %1023 = vmatprep.subr.mxu0 0.0
    %1024 = vmatpush1.msra.mxu0 0.0
    %1025 = vmatprep.subr.mxu0 0.0
    %1026 = vmatpush1.msra.mxu0 0.0
    %1027 = vmatprep.subr.mxu0 0.0
    %1028 = vmatpush1.msra.mxu0 0.0
    %1029 = vmatprep.subr.mxu0 0.0
    %1030 = vmatpush1.msra.mxu0 0.0
    %1031 = vmatprep.subr.mxu0 0.0
    %1032 = vmatpush1.msra.mxu0 0.0
    %1033 = vmatprep.subr.mxu0 0.0
    %1034 = vmatpush1.msra.mxu0 0.0
    %1035 = vmatprep.subr.mxu0 0.0
    %1036 = vmatpush1.msra.mxu0 0.0
    %1037 = vmatprep.subr.mxu0 0.0
    %1038 = vmatpush1.msra.mxu0 0.0
    %1039 = vmatprep.subr.mxu0 0.0
    %1040 = vmatpush1.msra.mxu0 0.0
    %1041 = vmatprep.subr.mxu0 0.0
    %1042 = vmatpush1.msra.mxu0 0.0
    %1043 = vmatprep.subr.mxu0 0.0
    %1044 = vmatpush1.msra.mxu0 0.0
    %1045 = vmatprep.subr.mxu0 0.0
    %1046 = vmatpush1.msra.mxu0 0.0
    %1047 = vmatprep.subr.mxu0 0.0
    %1048 = vmatpush1.msra.mxu0 0.0
    %1049 = vmatprep.subr.mxu0 0.0
    %1050 = vmatpush1.msra.mxu0 0.0
    %1051 = vmatprep.subr.mxu0 0.0
    %1052 = vmatpush1.msra.mxu0 0.0
    %1053 = vmatprep.subr.mxu0 0.0
    %1054 = vmatpush1.msra.mxu0 0.0
    %1055 = vmatprep.subr.mxu0 0.0
    %1056 = vmatpush1.msra.mxu0 0.0
    %1057 = vmatprep.subr.mxu0 0.0
    %1058 = vmatpush1.msra.mxu0 0.0
    %1059 = vmatprep.subr.mxu0 0.0
    %1060 = vmatpush1.msra.mxu0 0.0
    %1061 = vmatprep.subr.mxu0 0.0
    %1062 = vmatpush1.msra.mxu0 0.0
    %1063 = vmatprep.subr.mxu0 0.0
    %1064 = vmatpush1.msra.mxu0 0.0
    %1065 = vmatprep.subr.mxu0 0.0
    %1066 = vmatpush1.msra.mxu0 0.0
    %1067 = vmatprep.mubr.f32.mxu0 0.0
    %1068 = vmatmul.mubr.f32.gmra.mrb[0].mxu0 %v1001
    %v1069 = vpop.f32.mrb[0].mxu0
    %v1070 = vadd.f32 0.0, %v1069
    %v1071 = vpop.f32.mrb[0].mxu0
    %1072 = vdwg.mxu0
    %1073 = vadd.xlane.f32.xlu0 %v1070
    %v1074 = vpop.xlane.xlu0 %1073
    %v1075 = vmul.f32 %v1074, %v431
    %v1076 = vsub.f32 %v1070, %v1075
    %v1077 = vmul.f32 %v1076, %v1076
    %1078 = vadd.xlane.f32.xlu0 %v1077
    %v1079 = vpop.xlane.xlu0 %1078
    %v1080 = vmul.f32 %v1079, %v431
    %v1081 = vadd.f32 %v1080, 1e-05
    %v1082 = vrsqrt.pop %v1081
    %v1083 = vmul.f32 %v1076, %v1082
    %v1084 = vld [vmem:[%s1] sm:$0xff]
    %v1085 = vld [vmem:[%s2] sm:$0xff]
    %v1086 = vadd.f32 %v1084, %v1085
    %s1087 = sld [smem:[#allocation2 + $0x4]]
    %v1088 = vstv %s1087
    %v1089 = vmul.f32 %v1088, %v440
    %v1090 = vadd.f32 %v1086, %v1089
    %s1091 = sld [smem:[#allocation2 + $0x5]]
    %v1092 = vstv %s1091
    %v1093 = vmul.f32 %v1092, %v1083
    %v1094 = vadd.f32 %v1090, %v1093
    %1095 = vst [vmem:[%s9] sm:$0xff] %v1094
    // Predicated region
    $region42: #{cell_forward.19} parent=1 // pred_check
      _
    $region43: #{cell_forward.19} parent=1 // pred_check_branch
      %1097 = sbr.rel (0) target = $region45
    $region44: #{cell_forward.19} parent=1 // pred_region
      _
    $region45: #{cell_forward.19} parent=1 // pred_fallthru
      _
    // Predicated region
    $region46: #{cell_forward.19} parent=1 // pred_check
      _
    $region47: #{cell_forward.19} parent=1 // pred_check_branch
      %1099 = sbr.rel (0) target = $region49
    $region48: #{cell_forward.19} parent=1 // pred_region
      _
    $region49: #{cell_forward.19} parent=1 // pred_fallthru
      _
    %1100 = vsyncpa [#allocation3], 1

</llo_original>
